<compile_context>
chip_gen: v7x
topology: tpu7x:2x2x1
jax: 0.10.0
libtpu: 0.0.40
codegen_flags: <defaults>
</compile_context>

<pallas_src>
import functools

import numpy as np
import jax
import jax.numpy as jnp
from jax.experimental import pallas as pl
from jax.experimental.pallas import tpu as pltpu

H = 16                                   # spatial height
W = 16                                   # spatial width
K = 5                                    # conv kernel size
PAD = 2                                  # padding (kernel_size=5 -> padding=2)
HPR = ((H + 2 * PAD + 7) // 8) * 8       # padded rows rounded to a sublane multiple (24)
_BB_CAP = 8                              # samples per grid step cap (VMEM-safe on v5e)


def _banded_weight(w_oihw, dtype):
    """OIHW conv weight -> stacked banded matrix (K*W*Cin, W*Cout).

    Row block kh holds band_kh with
      band_kh[wi*Cin + ci, wo*Cout + co] = w[co, ci, kh, wi - wo + PAD]
    (zero where wi-wo+PAD falls outside [0, K)), which also folds the conv's
    zero padding along the width axis.  Built once on the host with numpy.
    """
    w = np.asarray(w_oihw, np.float32)                      # (Cout, Cin, K, K)
    cout, cin = w.shape[0], w.shape[1]
    band = np.zeros((K, W * cin, W * cout), np.float32)
    for kh in range(K):
        for wo in range(W):
            for kw in range(K):
                wi = wo + kw - PAD
                if 0 <= wi < W:
                    band[kh, wi * cin:(wi + 1) * cin,
                         wo * cout:(wo + 1) * cout] = w[:, :, kh, kw].T
    return jnp.asarray(band.reshape(K * W * cin, W * cout), dtype=dtype)


def _pick_block_batch(n):
    """Largest divisor of n up to _BB_CAP; force >=2 grid steps when n>=2 so
    both v7x TensorCores get a block (neutral on single-core v5e/v6e)."""
    divs = [d for d in range(1, n + 1) if n % d == 0 and d <= _BB_CAP]
    bb = max(divs)
    if n >= 2 and n // bb < 2:
        smaller = [d for d in divs if n // d >= 2]
        if smaller:
            bb = max(smaller)
    return bb


def _geom_conv_kernel(x_ref, w1_ref, w2_ref, w3_ref, o_ref, *,
                      use_relu, bb, lanes_h, lanes_o, cdtype):
    m = bb * HPR                                   # batch folded into matmul M dim

    def act(v):
        return jnp.where(v > 0, v, 0.2 * v) if use_relu else v

    # Rows [PAD, PAD+H) of every HPR-row sample block are data; the rest are halo.
    row = jax.lax.broadcasted_iota(jnp.int32, (m, lanes_h), 0) % HPR
    valid = (row >= PAD) & (row < PAD + H)

    def band_conv(v, w_ref, dst_off):
        # out[p] = sum_kh band_kh(v[p - dst_off + kh]).
        # Each row shift is a cheap XLU sublane rotate (pltpu.roll, np.roll
        # semantics); for the rows we keep the rotation never wraps across a
        # sample block.  The 5 shifted copies are concatenated lane-wise into
        # an im2row slab so the conv is a single K = 5*W*Cin MXU contraction.
        pieces = []
        for kh in range(K):
            s = (dst_off - kh) % m
            piece = v if s == 0 else pltpu.roll(v, s, 0)
            pieces.append(piece.astype(cdtype))    # cast after the (f32) roll
        im2row = jnp.concatenate(pieces, axis=1)   # (m, K*lanes_in), lane-aligned
        return jnp.dot(im2row, w_ref[...], preferred_element_type=jnp.float32)

    x = x_ref[...].reshape(m, x_ref.shape[-1]).astype(jnp.float32)

    # conv1/conv2: results land at padded rows [PAD, PAD+H) (dst_off=PAD), so the
    # intermediate is already in the next layer's padded layout; halo rows are
    # re-zeroed with one select (no partial stores, no scratch).
    h = band_conv(x, w1_ref, PAD)
    h = jnp.where(valid, act(h), 0.0)
    h = band_conv(h, w2_ref, PAD)
    h = jnp.where(valid, act(h), 0.0)

    # conv3 (no activation): results at rows [0, H) -> aligned slice, full store.
    y = band_conv(h, w3_ref, 0)
    y = y.reshape(bb, HPR, lanes_o)[:, :H, :]
    o_ref[...] = y.astype(o_ref.dtype)


def make_geom_conv_layers_new(w1_oihw, w2_oihw, w3_oihw, *, use_relu=False,
                              compute_dtype=jnp.bfloat16, block_batch=None):
    """Build a jitted forward(x_nchw) -> y_nchw for GeomConvLayersNeW.

    Banded weights are precomputed once here, so repeated calls pay only for
    the Pallas kernel.  compute_dtype=jnp.bfloat16 (default) keeps the MXU on
    its native bf16 path with f32 accumulation; expect ~1e-2 absolute error vs
    an f32 reference.  compute_dtype=jnp.float32 matches f32 torch to ~1e-4.
    """
    hidden, cin = int(w1_oihw.shape[0]), int(w1_oihw.shape[1])
    cout = int(w3_oihw.shape[0])
    assert tuple(w1_oihw.shape[2:]) == (K, K), "only kernel_size=5 is implemented"

    wb1 = _banded_weight(w1_oihw, compute_dtype)   # (K*W*cin,    W*hidden)
    wb2 = _banded_weight(w2_oihw, compute_dtype)   # (K*W*hidden, W*hidden)
    wb3 = _banded_weight(w3_oihw, compute_dtype)   # (K*W*hidden, W*cout)

    @jax.jit
    def forward(x_nchw):
        n = x_nchw.shape[0]
        assert x_nchw.shape[1:] == (cin, H, W)
        bb = block_batch if block_batch is not None else _pick_block_batch(n)
        assert n % bb == 0
        grid = (n // bb,)

        # Lane-dense (N, rows, W*C) layout.  Width zero-padding is folded into
        # the banded weights; row padding is explicit and rounded up to HPR=24
        # rows so every in-kernel row op stays sublane-tile aligned.
        x = jnp.transpose(x_nchw, (0, 2, 3, 1)).reshape(n, H, W * cin)
        xp = jnp.pad(x.astype(jnp.float32),
                     ((0, 0), (PAD, HPR - H - PAD), (0, 0)))

        kernel = functools.partial(
            _geom_conv_kernel, use_relu=use_relu, bb=bb,
            lanes_h=W * hidden, lanes_o=W * cout, cdtype=compute_dtype)

        out = pl.pallas_call(
            kernel,
            out_shape=jax.ShapeDtypeStruct((n, H, W * cout), jnp.float32),
            grid_spec=pltpu.PrefetchScalarGridSpec(
                num_scalar_prefetch=0,
                grid=grid,
                in_specs=[
                    pl.BlockSpec((bb, HPR, W * cin), lambda i: (i, 0, 0)),
                    # Grid-invariant weight blocks (constant index map -> the
                    # pipeline does not re-fetch them across grid steps).
                    pl.BlockSpec(wb1.shape, lambda i: (0, 0)),
                    pl.BlockSpec(wb2.shape, lambda i: (0, 0)),
                    pl.BlockSpec(wb3.shape, lambda i: (0, 0)),
                ],
                out_specs=pl.BlockSpec((bb, H, W * cout), lambda i: (i, 0, 0)),
            ),
            compiler_params=pltpu.CompilerParams(
                dimension_semantics=("parallel",)),   # batch blocks -> both v7x TCs
        )(xp, wb1, wb2, wb3)

        out = out.reshape(n, H, W, cout)
        return jnp.transpose(out, (0, 3, 1, 2))       # back to NCHW

    return forward


def geom_conv_layers_new(x_nchw, w1, w2, w3, *, use_relu=False,
                         compute_dtype=jnp.bfloat16, block_batch=None):
    """One-shot convenience wrapper.  For repeated calls, build the forward fn
    once with make_geom_conv_layers_new (it caches the banded weights)."""
    fwd = make_geom_conv_layers_new(w1, w2, w3, use_relu=use_relu,
                                    compute_dtype=compute_dtype,
                                    block_batch=block_batch)
    return fwd(x_nchw)


def _reference(x_nchw, w1, w2, w3, *, use_relu=False):
    """Pure-JAX reference matching torch.nn.Conv2d semantics (NCHW / OIHW)."""
    dn = ('NCHW', 'OIHW', 'NCHW')

    def conv(x, w):
        return jax.lax.conv_general_dilated(
            x, w, window_strides=(1, 1),
            padding=((PAD, PAD), (PAD, PAD)),
            dimension_numbers=dn)

    def act(x):
        return jnp.where(x > 0, x, 0.2 * x) if use_relu else x

    y = act(conv(x_nchw, w1))
    y = act(conv(y, w2))
    return conv(y, w3)


if __name__ == "__main__":
    input_nc = hidden_nc = output_nc = 16   # module defaults
    N = 2

    key = jax.random.PRNGKey(0)
    kx, k1, k2, k3 = jax.random.split(key, 4)

    x = jax.random.normal(kx, (N, input_nc, H, W), dtype=jnp.float32)
    std = 1.0 / np.sqrt(input_nc * K * K)
    w1 = std * jax.random.normal(k1, (hidden_nc, input_nc, K, K), dtype=jnp.float32)
    w2 = std * jax.random.normal(k2, (hidden_nc, hidden_nc, K, K), dtype=jnp.float32)
    w3 = std * jax.random.normal(k3, (output_nc, hidden_nc, K, K), dtype=jnp.float32)

    ref = _reference(x, w1, w2, w3, use_relu=False)
    ref_r = _reference(x, w1, w2, w3, use_relu=True)

    # default config: bf16 weights/activations, f32 accumulation (use_relu=False)
    fwd = make_geom_conv_layers_new(w1, w2, w3, use_relu=False)
    out = jax.block_until_ready(fwd(x))
    np.testing.assert_allclose(np.asarray(out), np.asarray(ref), rtol=5e-2, atol=5e-2)

    # LeakyReLU(0.2) path
    fwd_r = make_geom_conv_layers_new(w1, w2, w3, use_relu=True)
    out_r = jax.block_until_ready(fwd_r(x))
    np.testing.assert_allclose(np.asarray(out_r), np.asarray(ref_r), rtol=5e-2, atol=5e-2)

    # exact f32 compute path retained as an option
    fwd32 = make_geom_conv_layers_new(w1, w2, w3, use_relu=False,
                                      compute_dtype=jnp.float32)
    out32 = jax.block_until_ready(fwd32(x))
    np.testing.assert_allclose(np.asarray(out32), np.asarray(ref), rtol=1e-4, atol=1e-4)

    print("KERNEL_OK")
</pallas_src>

<mosaic_0001>
module attributes {stable_mosaic.version = 11 : i64} {
  func.func @_geom_conv_kernel(%arg0: i32, %arg1: memref<1x24x256xf32, #tpu.memory_space<vmem>>, %arg2: memref<1280x256xbf16, #tpu.memory_space<vmem>>, %arg3: memref<1280x256xbf16, #tpu.memory_space<vmem>>, %arg4: memref<1280x256xbf16, #tpu.memory_space<vmem>>, %arg5: memref<1x16x256xf32, #tpu.memory_space<vmem>>) attributes {dimension_semantics = [#tpu.dimension_semantics<parallel>], iteration_bounds = array<i64: 2>, scalar_prefetch = 0 : i64, scratch_operands = 0 : i64, tpu.core_type = #tpu.core_type<tc>, window_params = [{transform_indices = @transform_0, window_bounds = array<i64: 1, 24, 256>}, {pipeline_mode = #tpu.pipeline_mode<synchronous>, transform_indices = @transform_1, window_bounds = array<i64: 1280, 256>}, {pipeline_mode = #tpu.pipeline_mode<synchronous>, transform_indices = @transform_2, window_bounds = array<i64: 1280, 256>}, {pipeline_mode = #tpu.pipeline_mode<synchronous>, transform_indices = @transform_3, window_bounds = array<i64: 1280, 256>}, {transform_indices = @transform_4, window_bounds = array<i64: 1, 16, 256>}]} {
    %0 = tpu.iota {dimensions = array<i32: 0>} : vector<24x256xi32>
    %c24_i32 = arith.constant 24 : i32
    %c0_i32 = arith.constant 0 : i32
    %1 = arith.cmpi eq, %c24_i32, %c0_i32 : i32
    %c1_i32 = arith.constant 1 : i32
    %2 = arith.select %1, %c1_i32, %c24_i32 : i32
    %3 = vector.broadcast %2 : i32 to vector<24x256xi32>
    %4 = arith.remsi %0, %3 : vector<24x256xi32>
    %c0_i32_0 = arith.constant 0 : i32
    %5 = vector.broadcast %c0_i32_0 : i32 to vector<24x256xi32>
    %6 = arith.cmpi ne, %4, %5 : vector<24x256xi32>
    %c0_i32_1 = arith.constant 0 : i32
    %7 = vector.broadcast %c0_i32_1 : i32 to vector<24x256xi32>
    %8 = arith.cmpi slt, %4, %7 : vector<24x256xi32>
    %c0_i32_2 = arith.constant 0 : i32
    %9 = arith.cmpi slt, %2, %c0_i32_2 : i32
    %10 = vector.broadcast %9 : i1 to vector<24x256xi1>
    %11 = vector.broadcast %10 : vector<24x256xi1> to vector<24x256xi1>
    %12 = arith.xori %8, %11 : vector<24x256xi1>
    %13 = arith.andi %12, %6 : vector<24x256xi1>
    %14 = vector.broadcast %2 : i32 to vector<24x256xi32>
    %15 = arith.addi %4, %14 : vector<24x256xi32>
    %16 = arith.select %13, %15, %4 : vector<24x256xi1>, vector<24x256xi32>
    %c2_i32 = arith.constant 2 : i32
    %17 = vector.broadcast %c2_i32 : i32 to vector<24x256xi32>
    %18 = arith.cmpi sge, %16, %17 : vector<24x256xi32>
    %c18_i32 = arith.constant 18 : i32
    %19 = vector.broadcast %c18_i32 : i32 to vector<24x256xi32>
    %20 = arith.cmpi slt, %16, %19 : vector<24x256xi32>
    %21 = arith.andi %18, %20 : vector<24x256xi1>
    %c0 = arith.constant 0 : index
    %c0_3 = arith.constant 0 : index
    %c0_4 = arith.constant 0 : index
    %22 = vector.load %arg1[%c0, %c0_3, %c0_4] : memref<1x24x256xf32, #tpu.memory_space<vmem>>, vector<1x24x256xf32>
    %23 = vector.shape_cast %22 : vector<1x24x256xf32> to vector<24x256xf32>
    %c2_i32_5 = arith.constant 2 : i32
    %24 = tpu.dynamic_rotate %23 by %c2_i32_5 dim 0 : vector<24x256xf32>, i32 -> vector<24x256xf32>
    %25 = arith.truncf %24 : vector<24x256xf32> to vector<24x256xbf16>
    %c1_i32_6 = arith.constant 1 : i32
    %26 = tpu.dynamic_rotate %23 by %c1_i32_6 dim 0 : vector<24x256xf32>, i32 -> vector<24x256xf32>
    %27 = arith.truncf %26 : vector<24x256xf32> to vector<24x256xbf16>
    %28 = arith.truncf %23 : vector<24x256xf32> to vector<24x256xbf16>
    %c23_i32 = arith.constant 23 : i32
    %29 = tpu.dynamic_rotate %23 by %c23_i32 dim 0 : vector<24x256xf32>, i32 -> vector<24x256xf32>
    %30 = arith.truncf %29 : vector<24x256xf32> to vector<24x256xbf16>
    %c22_i32 = arith.constant 22 : i32
    %31 = tpu.dynamic_rotate %23 by %c22_i32 dim 0 : vector<24x256xf32>, i32 -> vector<24x256xf32>
    %32 = arith.truncf %31 : vector<24x256xf32> to vector<24x256xbf16>
    %33 = tpu.concatenate %25, %27, %28, %30, %32 in 1 : vector<24x256xbf16>, vector<24x256xbf16>, vector<24x256xbf16>, vector<24x256xbf16>, vector<24x256xbf16> -> vector<24x1280xbf16>
    %c0_7 = arith.constant 0 : index
    %c0_8 = arith.constant 0 : index
    %34 = vector.load %arg2[%c0_7, %c0_8] : memref<1280x256xbf16, #tpu.memory_space<vmem>>, vector<1280x256xbf16>
    %cst = arith.constant dense<0.000000e+00> : vector<24x256xf32>
    %35 = tpu.matmul %33, %34, %cst {dimension_numbers = #tpu.dot_dimension_numbers<[1], [0], [0], [1], [0, 0, 1, 1], [], []>} : vector<24x1280xbf16>, vector<1280x256xbf16>, vector<24x256xf32> -> vector<24x256xf32>
    %cst_9 = arith.constant 0.000000e+00 : f32
    %36 = vector.broadcast %cst_9 : f32 to vector<24x256xf32>
    %37 = arith.select %21, %35, %36 : vector<24x256xi1>, vector<24x256xf32>
    %c2_i32_10 = arith.constant 2 : i32
    %38 = tpu.dynamic_rotate %37 by %c2_i32_10 dim 0 : vector<24x256xf32>, i32 -> vector<24x256xf32>
    %39 = arith.truncf %38 : vector<24x256xf32> to vector<24x256xbf16>
    %c1_i32_11 = arith.constant 1 : i32
    %40 = tpu.dynamic_rotate %37 by %c1_i32_11 dim 0 : vector<24x256xf32>, i32 -> vector<24x256xf32>
    %41 = arith.truncf %40 : vector<24x256xf32> to vector<24x256xbf16>
    %42 = arith.truncf %37 : vector<24x256xf32> to vector<24x256xbf16>
    %c23_i32_12 = arith.constant 23 : i32
    %43 = tpu.dynamic_rotate %37 by %c23_i32_12 dim 0 : vector<24x256xf32>, i32 -> vector<24x256xf32>
    %44 = arith.truncf %43 : vector<24x256xf32> to vector<24x256xbf16>
    %c22_i32_13 = arith.constant 22 : i32
    %45 = tpu.dynamic_rotate %37 by %c22_i32_13 dim 0 : vector<24x256xf32>, i32 -> vector<24x256xf32>
    %46 = arith.truncf %45 : vector<24x256xf32> to vector<24x256xbf16>
    %47 = tpu.concatenate %39, %41, %42, %44, %46 in 1 : vector<24x256xbf16>, vector<24x256xbf16>, vector<24x256xbf16>, vector<24x256xbf16>, vector<24x256xbf16> -> vector<24x1280xbf16>
    %c0_14 = arith.constant 0 : index
    %c0_15 = arith.constant 0 : index
    %48 = vector.load %arg3[%c0_14, %c0_15] : memref<1280x256xbf16, #tpu.memory_space<vmem>>, vector<1280x256xbf16>
    %cst_16 = arith.constant dense<0.000000e+00> : vector<24x256xf32>
    %49 = tpu.matmul %47, %48, %cst_16 {dimension_numbers = #tpu.dot_dimension_numbers<[1], [0], [0], [1], [0, 0, 1, 1], [], []>} : vector<24x1280xbf16>, vector<1280x256xbf16>, vector<24x256xf32> -> vector<24x256xf32>
    %cst_17 = arith.constant 0.000000e+00 : f32
    %50 = vector.broadcast %cst_17 : f32 to vector<24x256xf32>
    %51 = arith.select %21, %49, %50 : vector<24x256xi1>, vector<24x256xf32>
    %52 = arith.truncf %51 : vector<24x256xf32> to vector<24x256xbf16>
    %c23_i32_18 = arith.constant 23 : i32
    %53 = tpu.dynamic_rotate %51 by %c23_i32_18 dim 0 : vector<24x256xf32>, i32 -> vector<24x256xf32>
    %54 = arith.truncf %53 : vector<24x256xf32> to vector<24x256xbf16>
    %c22_i32_19 = arith.constant 22 : i32
    %55 = tpu.dynamic_rotate %51 by %c22_i32_19 dim 0 : vector<24x256xf32>, i32 -> vector<24x256xf32>
    %56 = arith.truncf %55 : vector<24x256xf32> to vector<24x256xbf16>
    %c21_i32 = arith.constant 21 : i32
    %57 = tpu.dynamic_rotate %51 by %c21_i32 dim 0 : vector<24x256xf32>, i32 -> vector<24x256xf32>
    %58 = arith.truncf %57 : vector<24x256xf32> to vector<24x256xbf16>
    %c20_i32 = arith.constant 20 : i32
    %59 = tpu.dynamic_rotate %51 by %c20_i32 dim 0 : vector<24x256xf32>, i32 -> vector<24x256xf32>
    %60 = arith.truncf %59 : vector<24x256xf32> to vector<24x256xbf16>
    %61 = tpu.concatenate %52, %54, %56, %58, %60 in 1 : vector<24x256xbf16>, vector<24x256xbf16>, vector<24x256xbf16>, vector<24x256xbf16>, vector<24x256xbf16> -> vector<24x1280xbf16>
    %c0_20 = arith.constant 0 : index
    %c0_21 = arith.constant 0 : index
    %62 = vector.load %arg4[%c0_20, %c0_21] : memref<1280x256xbf16, #tpu.memory_space<vmem>>, vector<1280x256xbf16>
    %cst_22 = arith.constant dense<0.000000e+00> : vector<24x256xf32>
    %63 = tpu.matmul %61, %62, %cst_22 {dimension_numbers = #tpu.dot_dimension_numbers<[1], [0], [0], [1], [0, 0, 1, 1], [], []>} : vector<24x1280xbf16>, vector<1280x256xbf16>, vector<24x256xf32> -> vector<24x256xf32>
    %64 = vector.shape_cast %63 : vector<24x256xf32> to vector<1x24x256xf32>
    %65 = vector.extract_strided_slice %64 {offsets = [0, 0, 0], sizes = [1, 16, 256], strides = [1, 1, 1]} : vector<1x24x256xf32> to vector<1x16x256xf32>
    %c0_23 = arith.constant 0 : index
    %c0_24 = arith.constant 0 : index
    %c0_25 = arith.constant 0 : index
    %66 = vector.load %arg5[%c0_23, %c0_24, %c0_25] : memref<1x16x256xf32, #tpu.memory_space<vmem>>, vector<1x16x256xf32>
    tpu.vector_store %arg5[%c0_23, %c0_24, %c0_25], %65 {strides = array<i32>} : memref<1x16x256xf32, #tpu.memory_space<vmem>>, vector<1x16x256xf32>,
    return
  }
  func.func @transform_0(%arg0: i32) -> (i32, i32, i32) {
    %c0_i32 = arith.constant 0 : i32
    %c0_i32_0 = arith.constant 0 : i32
    %c0_i32_1 = arith.constant 0 : i32
    return %arg0, %c0_i32, %c0_i32_0 : i32, i32, i32
  }
  func.func @transform_1(%arg0: i32) -> (i32, i32) {
    %c0_i32 = arith.constant 0 : i32
    %c0_i32_0 = arith.constant 0 : i32
    %c0_i32_1 = arith.constant 0 : i32
    return %c0_i32, %c0_i32_0 : i32, i32
  }
  func.func @transform_2(%arg0: i32) -> (i32, i32) {
    %c0_i32 = arith.constant 0 : i32
    %c0_i32_0 = arith.constant 0 : i32
    %c0_i32_1 = arith.constant 0 : i32
    return %c0_i32, %c0_i32_0 : i32, i32
  }
  func.func @transform_3(%arg0: i32) -> (i32, i32) {
    %c0_i32 = arith.constant 0 : i32
    %c0_i32_0 = arith.constant 0 : i32
    %c0_i32_1 = arith.constant 0 : i32
    return %c0_i32, %c0_i32_0 : i32, i32
  }
  func.func @transform_4(%arg0: i32) -> (i32, i32, i32) {
    %c0_i32 = arith.constant 0 : i32
    %c0_i32_0 = arith.constant 0 : i32
    %c0_i32_1 = arith.constant 0 : i32
    return %arg0, %c0_i32, %c0_i32_0 : i32, i32, i32
  }
}

</mosaic_0001>

<llo_original>
// kernel: forward.1
$region0: #{forward.1}
  #allocation0 [shape = 'u32[]', space=smem, size = 0x4, offset = 0x4, fixed_abs, tag = 'smem constant byte address 0x4 - core index']
  #allocation1 [shape = 'u32[144,128]{1,0:T(1,128)}', space=vmem, size = 0x12000, scoped, tag = 'internal scratch']
  %s0 = inlined_call_operand.vmem [shape: f32[2,24,256], index: 0, kind: input, shape index: {}]
  %s1 = inlined_call_operand.vmem [shape: bf16[1280,256], index: 1, kind: input, shape index: {}]
  %s2 = inlined_call_operand.vmem [shape: bf16[1280,256], index: 2, kind: input, shape index: {}]
  %s3 = inlined_call_operand.vmem [shape: bf16[1280,256], index: 3, kind: input, shape index: {}]
  %s4 = inlined_call_operand.vmem [shape: f32[2,16,256], index: 4, kind: output, shape index: {}]
  %s5 = sld [smem:[#allocation0]]
  $region49: #{forward.1} parent=0
    _
  %s7 = ssub.s32 1, %s5
  %s8 = scalar_select 0, %s7, %s5
  loop: start=0, step=1, limit=4
  $region2: #{forward.1} parent=0 // loop_pre_header
    _
  $region3: #{forward.1} parent=0 // loop_header
    %s10 = sphi 0, %s14
    %p11 = scmp.ge.s32.totalorder %s10, 4
    %s20 = sphi 0, %s22
    %s23 = sphi 0, %s20
    %s24 = sphi 0, %s23
    %s40 = sphi 0, %s24
    %s44 = sphi 0, %s44
    %s46 = sphi 0, %s44
    %s47 = sphi 0, %s46
    %s61 = sphi 0, %s47
    %s65 = sphi 0, %s65
    %s67 = sphi 0, %s65
    %s68 = sphi 0, %s67
    %s82 = sphi 0, %s68
    %s86 = sphi 0, %s86
    %s88 = sphi 0, %s86
    %s89 = sphi 0, %s88
    %s103 = sphi 0, %s89
    %s109 = sphi 0, %s111
    %s112 = sphi 0, %s109
    %s113 = sphi 0, %s112
    %s129 = sphi 0, %s113
  $region4: #{forward.1} parent=0 // loop_header_branch
    %13 = sbr.rel (%p11) target = $region8
  $region5: #{forward.1} parent=0 // loop_body
    %s15 = ssub.s32 %s10, 1
    %s16 = ssub.s32 %s10, 2
    %s17 = sadd.s32 %s10, 1
    %s18 = ssub.s32 %s10, %s17
    %p19 = scmp.eq.s32.totalorder %s18, 0
    %s21 = sadd.s32 %s20, 1
    %s22 = scalar_select %p19, %s20, %s21
    %p25 = pneg %p19
    %p26 = scmp.eq.s32.totalorder %s10, 1
    %p27 = por %p25, %p26
    %p28 = scmp.ne.s32.totalorder %s20, %s23
    %p29 = scmp.eq.s32.totalorder %s10, 0
    %p30 = por %p28, %p29
    %p31 = scmp.ne.s32.totalorder %s20, %s23
    %p32 = scmp.eq.s32.totalorder %s15, 1
    %p33 = por %p31, %p32
    %p34 = scmp.ne.s32.totalorder %s23, %s24
    %p35 = scmp.eq.s32.totalorder %s15, 0
    %p36 = por %p34, %p35
    %p37 = scmp.ne.s32.totalorder %s23, %s24
    %p38 = scmp.eq.s32.totalorder %s16, 1
    %p39 = por %p37, %p38
    %p41 = scmp.ne.s32.totalorder %s24, %s40
    %p42 = scmp.eq.s32.totalorder %s16, 0
    %p43 = por %p41, %p42
    %s45 = sadd.s32 %s44, 1
    %p48 = scmp.eq.s32.totalorder %s10, 1
    %p49 = scmp.ne.s32.totalorder %s44, %s46
    %p50 = scmp.eq.s32.totalorder %s10, 0
    %p51 = por %p49, %p50
    %p52 = scmp.ne.s32.totalorder %s44, %s46
    %p53 = scmp.eq.s32.totalorder %s15, 1
    %p54 = por %p52, %p53
    %p55 = scmp.ne.s32.totalorder %s46, %s47
    %p56 = scmp.eq.s32.totalorder %s15, 0
    %p57 = por %p55, %p56
    %p58 = scmp.ne.s32.totalorder %s46, %s47
    %p59 = scmp.eq.s32.totalorder %s16, 1
    %p60 = por %p58, %p59
    %p62 = scmp.ne.s32.totalorder %s47, %s61
    %p63 = scmp.eq.s32.totalorder %s16, 0
    %p64 = por %p62, %p63
    %s66 = sadd.s32 %s65, 1
    %p69 = scmp.eq.s32.totalorder %s10, 1
    %p70 = scmp.ne.s32.totalorder %s65, %s67
    %p71 = scmp.eq.s32.totalorder %s10, 0
    %p72 = por %p70, %p71
    %p73 = scmp.ne.s32.totalorder %s65, %s67
    %p74 = scmp.eq.s32.totalorder %s15, 1
    %p75 = por %p73, %p74
    %p76 = scmp.ne.s32.totalorder %s67, %s68
    %p77 = scmp.eq.s32.totalorder %s15, 0
    %p78 = por %p76, %p77
    %p79 = scmp.ne.s32.totalorder %s67, %s68
    %p80 = scmp.eq.s32.totalorder %s16, 1
    %p81 = por %p79, %p80
    %p83 = scmp.ne.s32.totalorder %s68, %s82
    %p84 = scmp.eq.s32.totalorder %s16, 0
    %p85 = por %p83, %p84
    %s87 = sadd.s32 %s86, 1
    %p90 = scmp.eq.s32.totalorder %s10, 1
    %p91 = scmp.ne.s32.totalorder %s86, %s88
    %p92 = scmp.eq.s32.totalorder %s10, 0
    %p93 = por %p91, %p92
    %p94 = scmp.ne.s32.totalorder %s86, %s88
    %p95 = scmp.eq.s32.totalorder %s15, 1
    %p96 = por %p94, %p95
    %p97 = scmp.ne.s32.totalorder %s88, %s89
    %p98 = scmp.eq.s32.totalorder %s15, 0
    %p99 = por %p97, %p98
    %p100 = scmp.ne.s32.totalorder %s88, %s89
    %p101 = scmp.eq.s32.totalorder %s16, 1
    %p102 = por %p100, %p101
    %p104 = scmp.ne.s32.totalorder %s89, %s103
    %p105 = scmp.eq.s32.totalorder %s16, 0
    %p106 = por %p104, %p105
    %s107 = ssub.s32 %s10, %s17
    %p108 = scmp.eq.s32.totalorder %s107, 0
    %s110 = sadd.s32 %s109, 1
    %s111 = scalar_select %p108, %s109, %s110
    %p114 = pneg %p108
    %p115 = scmp.eq.s32.totalorder %s10, 1
    %p116 = por %p114, %p115
    %p117 = scmp.ne.s32.totalorder %s109, %s112
    %p118 = scmp.eq.s32.totalorder %s10, 0
    %p119 = por %p117, %p118
    %p120 = scmp.ne.s32.totalorder %s109, %s112
    %p121 = scmp.eq.s32.totalorder %s15, 1
    %p122 = por %p120, %p121
    %p123 = scmp.ne.s32.totalorder %s112, %s113
    %p124 = scmp.eq.s32.totalorder %s15, 0
    %p125 = por %p123, %p124
    %p126 = scmp.ne.s32.totalorder %s112, %s113
    %p127 = scmp.eq.s32.totalorder %s16, 1
    %p128 = por %p126, %p127
    %p130 = scmp.ne.s32.totalorder %s113, %s129
    %p131 = scmp.eq.s32.totalorder %s16, 0
    %p132 = por %p130, %p131
    %p133 = scmp.le.s32.totalorder 1, %s10
    %p134 = scmp.lt.s32.totalorder %s10, 3
    %p135 = pnand %p133, %p134
    %p136 = pneg %p135
    // Predicated region
    $region9: #{forward.1} parent=5 // pred_check
      _
    $region10: #{forward.1} parent=5 // pred_check_branch
      %138 = sbr.rel (%p135) target = $region12
    $region11: #{forward.1} parent=5 // pred_region
      %s139 = ssub.s32 %s10, 1
      // Predicated region
      $region13: #{forward.1} parent=11 // pred_check
        %p140 = pneg %p57
      $region14: #{forward.1} parent=11 // pred_check_branch
        %142 = sbr.rel (%p140) target = $region16
      $region15: #{forward.1} parent=11 // pred_region
        _
      $region16: #{forward.1} parent=11 // pred_fallthru
        _
      // Predicated region
      $region17: #{forward.1} parent=11 // pred_check
        %p143 = pneg %p78
      $region18: #{forward.1} parent=11 // pred_check_branch
        %145 = sbr.rel (%p143) target = $region20
      $region19: #{forward.1} parent=11 // pred_region
        _
      $region20: #{forward.1} parent=11 // pred_fallthru
        _
      // Predicated region
      $region21: #{forward.1} parent=11 // pred_check
        %p146 = pneg %p99
      $region22: #{forward.1} parent=11 // pred_check_branch
        %148 = sbr.rel (%p146) target = $region24
      $region23: #{forward.1} parent=11 // pred_region
        _
      $region24: #{forward.1} parent=11 // pred_fallthru
        _
    $region12: #{forward.1} parent=5 // pred_fallthru
      _
    %p149 = scmp.lt.s32.totalorder %s10, 2
    // Predicated region
    $region25: #{forward.1} parent=5 // pred_check
      %p150 = pneg %p149
    $region26: #{forward.1} parent=5 // pred_check_branch
      %152 = sbr.rel (%p150) target = $region28
    $region27: #{forward.1} parent=5 // pred_region
      // Predicated region
      $region29: #{forward.1} parent=27 // pred_check
        %p153 = pneg %p30
      $region30: #{forward.1} parent=27 // pred_check_branch
        %155 = sbr.rel (%p153) target = $region32
      $region31: #{forward.1} parent=27 // pred_region
        %p156 = scmp.lt.s32.totalorder %s10, 1
        %s157 = scalar_select %p156, %s10, 1
        %s158 = smul.addr %s157, 6
        %s159 = smul.addr %s158, 8
        %s160 = scalar_lea.vmem %s0, %s159
      $region32: #{forward.1} parent=27 // pred_fallthru
        _
    $region28: #{forward.1} parent=5 // pred_fallthru
      _
    %p161 = scmp.le.s32.totalorder 1, %s10
    %p162 = scmp.lt.s32.totalorder %s10, 3
    %p163 = pnand %p161, %p162
    %p164 = pneg %p163
    // Predicated region
    $region33: #{forward.1} parent=5 // pred_check
      _
    $region34: #{forward.1} parent=5 // pred_check_branch
      %166 = sbr.rel (%p163) target = $region36
    $region35: #{forward.1} parent=5 // pred_region
      %s167 = ssub.s32 %s10, 1
      %p168 = scmp.lt.s32.totalorder %s15, 1
      %s169 = scalar_select %p168, %s15, 1
      %s170 = smul.addr %s169, 6
      %s171 = smul.addr %s170, 8
      %s172 = scalar_lea.vmem %s0, %s171
      %p173 = pneg %p36
      %p174 = pneg %p33
      %p175 = pneg %p57
      %p176 = pneg %p54
      %p177 = pneg %p78
      %p178 = pneg %p75
      %p179 = pneg %p99
      %p180 = pneg %p96
      %p181 = pneg %p125
      %p182 = pneg %p122
      %p183 = scmp.lt.s32.totalorder %s15, 1
      %s184 = scalar_select %p183, %s15, 1
      %s185 = smul.addr %s184, 4
      %s186 = smul.addr %s185, 8
      %s187 = scalar_lea.vmem %s4, %s186
      %p188 = scmp.lt.s32.totalorder %s15, 1
      %s189 = scalar_select %p188, %s15, 1
      %s190 = smul.addr %s189, 6
      %s191 = smul.addr %s190, 8
      %s192 = scalar_lea.vmem %s0, %s191
      %p193 = scmp.lt.s32.totalorder %s15, 1
      %s194 = scalar_select %p193, %s15, 1
      %s195 = smul.addr %s194, 4
      %s196 = smul.addr %s195, 8
      %s197 = scalar_lea.vmem %s4, %s196
      %v198 = vlaneseq
      %v199 = vshrl.u32 %v198, 7
      %v200 = vadd.s32 %v199, 8
      %v201 = vadd.s32 %v199, 16
      %vm202 = vcmp.lt.s32.totalorder %v199, 0
      %v203 = vsub.s32 0, %v199
      %v204 = vsel %vm202, %v203, %v199
      %v205 = vmul.u32.u64.compose %v204, 2863311531
      %v206 = vextract.low.u32 %v205
      %v207 = vextract.high.u32 %v205
      %v208 = vshrl.u32 %v207, 4
      %v209 = vmul.u32 %v208, 24
      %v210 = vsub.s32 %v204, %v209
      %v211 = vsub.s32 0, %v210
      %v212 = vsel %vm202, %v211, %v210
      %vm213 = vcmp.lt.s32.totalorder %v200, 0
      %v214 = vsub.s32 0, %v200
      %v215 = vsel %vm213, %v214, %v200
      %v216 = vmul.u32.u64.compose %v215, 2863311531
      %v217 = vextract.low.u32 %v216
      %v218 = vextract.high.u32 %v216
      %v219 = vshrl.u32 %v218, 4
      %v220 = vmul.u32 %v219, 24
      %v221 = vsub.s32 %v215, %v220
      %v222 = vsub.s32 0, %v221
      %v223 = vsel %vm213, %v222, %v221
      %vm224 = vcmp.lt.s32.totalorder %v201, 0
      %v225 = vsub.s32 0, %v201
      %v226 = vsel %vm224, %v225, %v201
      %v227 = vmul.u32.u64.compose %v226, 2863311531
      %v228 = vextract.low.u32 %v227
      %v229 = vextract.high.u32 %v227
      %v230 = vshrl.u32 %v229, 4
      %v231 = vmul.u32 %v230, 24
      %v232 = vsub.s32 %v226, %v231
      %v233 = vsub.s32 0, %v232
      %v234 = vsel %vm224, %v233, %v232
      %vm235 = vcmp.ne.s32.totalorder %v212, 0
      %vm236 = vcmp.ne.s32.totalorder %v223, 0
      %vm237 = vcmp.ne.s32.totalorder %v234, 0
      %vm238 = vcmp.lt.s32.totalorder %v212, 0
      %vm239 = vcmp.lt.s32.totalorder %v223, 0
      %vm240 = vcmp.lt.s32.totalorder %v234, 0
      %vm241 = vmand %vm238, %vm235
      %vm242 = vmand %vm239, %vm236
      %vm243 = vmand %vm240, %vm237
      %v244 = vadd.s32 %v212, 24
      %v245 = vadd.s32 %v223, 24
      %v246 = vadd.s32 %v234, 24
      %v247 = vsel %vm241, %v244, %v212
      %v248 = vsel %vm242, %v245, %v223
      %v249 = vsel %vm243, %v246, %v234
      %vm250 = vcmp.ge.s32.totalorder %v247, 2
      %vm251 = vcmp.ge.s32.totalorder %v248, 2
      %vm252 = vcmp.ge.s32.totalorder %v249, 2
      %vm253 = vcmp.lt.s32.totalorder %v247, 18
      %vm254 = vcmp.lt.s32.totalorder %v248, 18
      %vm255 = vcmp.lt.s32.totalorder %v249, 18
      %vm256 = vmand %vm250, %vm253
      %vm257 = vmand %vm251, %vm254
      %vm258 = vmand %vm252, %vm255
      %v259 = vld [vmem:[%s192] sm:$0xff]
      %v260 = vld [vmem:[%s192 + $0x8] sm:$0xff]
      %v261 = vld [vmem:[%s192 + $0x10] sm:$0xff]
      %v262 = vld [vmem:[%s192 + $0x18] sm:$0xff]
      %v263 = vld [vmem:[%s192 + $0x20] sm:$0xff]
      %v264 = vld [vmem:[%s192 + $0x28] sm:$0xff]
      %v265 = vrot.slane %v259, 6
      %v266 = vrot.slane %v260, 6
      %v267 = vrot.slane %v261, 6
      %v268 = vrot.slane %v262, 6
      %v269 = vrot.slane %v263, 6
      %v270 = vrot.slane %v264, 6
      %vm271 = vcmp.lt.s32.totalorder %v199, 2
      %v272 = vsel %vm271, %v267, %v269
      %v273 = vsel %vm271, %v268, %v270
      %v274 = vsel %vm271, %v265, %v267
      %v275 = vsel %vm271, %v266, %v268
      %v276 = vsel %vm271, %v269, %v265
      %v277 = vsel %vm271, %v270, %v266
      %v278 = vpack.c.bf16 %v274, %v276
      %v279 = vpack.c.bf16 %v275, %v277
      %v280 = vpack.c.bf16 %v272, %v272
      %v281 = vpack.c.bf16 %v273, %v273
      %v282 = vrot.slane %v259, 7
      %v283 = vrot.slane %v260, 7
      %v284 = vrot.slane %v261, 7
      %v285 = vrot.slane %v262, 7
      %v286 = vrot.slane %v263, 7
      %v287 = vrot.slane %v264, 7
      %vm288 = vcmp.lt.s32.totalorder %v199, 1
      %v289 = vsel %vm288, %v284, %v286
      %v290 = vsel %vm288, %v285, %v287
      %v291 = vsel %vm288, %v282, %v284
      %v292 = vsel %vm288, %v283, %v285
      %v293 = vsel %vm288, %v286, %v282
      %v294 = vsel %vm288, %v287, %v283
      %v295 = vpack.c.bf16 %v291, %v293
      %v296 = vpack.c.bf16 %v292, %v294
      %v297 = vpack.c.bf16 %v289, %v289
      %v298 = vpack.c.bf16 %v290, %v290
      %v299 = vpack.c.bf16 %v261, %v259
      %v300 = vpack.c.bf16 %v262, %v260
      %v301 = vpack.c.bf16 %v263, %v263
      %v302 = vpack.c.bf16 %v264, %v264
      %v303 = vrot.slane %v259, 1
      %v304 = vrot.slane %v260, 1
      %v305 = vrot.slane %v261, 1
      %v306 = vrot.slane %v262, 1
      %v307 = vrot.slane %v263, 1
      %v308 = vrot.slane %v264, 1
      %vm309 = vcmp.lt.s32.totalorder %v199, 7
      %v310 = vsel %vm309, %v305, %v307
      %v311 = vsel %vm309, %v306, %v308
      %v312 = vsel %vm309, %v303, %v305
      %v313 = vsel %vm309, %v304, %v306
      %v314 = vsel %vm309, %v307, %v303
      %v315 = vsel %vm309, %v308, %v304
      %v316 = vpack.c.bf16 %v310, %v312
      %v317 = vpack.c.bf16 %v311, %v313
      %v318 = vpack.c.bf16 %v314, %v314
      %v319 = vpack.c.bf16 %v315, %v315
      %v320 = vrot.slane %v259, 2
      %v321 = vrot.slane %v260, 2
      %v322 = vrot.slane %v261, 2
      %v323 = vrot.slane %v262, 2
      %v324 = vrot.slane %v263, 2
      %v325 = vrot.slane %v264, 2
      %vm326 = vcmp.lt.s32.totalorder %v199, 6
      %v327 = vsel %vm326, %v322, %v324
      %v328 = vsel %vm326, %v323, %v325
      %v329 = vsel %vm326, %v320, %v322
      %v330 = vsel %vm326, %v321, %v323
      %v331 = vsel %vm326, %v324, %v320
      %v332 = vsel %vm326, %v325, %v321
      %v333 = vpack.c.bf16 %v327, %v329
      %v334 = vpack.c.bf16 %v328, %v330
      %v335 = vpack.c.bf16 %v331, %v331
      %v336 = vpack.c.bf16 %v332, %v332
      %v337 = vld [vmem:[%s1] sm:$0xff]
      %v338 = vld [vmem:[%s1 + $0x8] sm:$0xff]
      %v339 = vld [vmem:[%s1 + $0x10] sm:$0xff]
      %v340 = vld [vmem:[%s1 + $0x18] sm:$0xff]
      %v341 = vld [vmem:[%s1 + $0x20] sm:$0xff]
      %v342 = vld [vmem:[%s1 + $0x28] sm:$0xff]
      %v343 = vld [vmem:[%s1 + $0x30] sm:$0xff]
      %v344 = vld [vmem:[%s1 + $0x38] sm:$0xff]
      %v345 = vld [vmem:[%s1 + $0x40] sm:$0xff]
      %v346 = vld [vmem:[%s1 + $0x48] sm:$0xff]
      %v347 = vld [vmem:[%s1 + $0x50] sm:$0xff]
      %v348 = vld [vmem:[%s1 + $0x58] sm:$0xff]
      %v349 = vld [vmem:[%s1 + $0x60] sm:$0xff]
      %v350 = vld [vmem:[%s1 + $0x68] sm:$0xff]
      %v351 = vld [vmem:[%s1 + $0x70] sm:$0xff]
      %v352 = vld [vmem:[%s1 + $0x78] sm:$0xff]
      %v353 = vld [vmem:[%s1 + $0x80] sm:$0xff]
      %v354 = vld [vmem:[%s1 + $0x88] sm:$0xff]
      %v355 = vld [vmem:[%s1 + $0x90] sm:$0xff]
      %v356 = vld [vmem:[%s1 + $0x98] sm:$0xff]
      %v357 = vld [vmem:[%s1 + $0xa0] sm:$0xff]
      %v358 = vld [vmem:[%s1 + $0xa8] sm:$0xff]
      %v359 = vld [vmem:[%s1 + $0xb0] sm:$0xff]
      %v360 = vld [vmem:[%s1 + $0xb8] sm:$0xff]
      %v361 = vld [vmem:[%s1 + $0xc0] sm:$0xff]
      %v362 = vld [vmem:[%s1 + $0xc8] sm:$0xff]
      %v363 = vld [vmem:[%s1 + $0xd0] sm:$0xff]
      %v364 = vld [vmem:[%s1 + $0xd8] sm:$0xff]
      %v365 = vld [vmem:[%s1 + $0xe0] sm:$0xff]
      %v366 = vld [vmem:[%s1 + $0xe8] sm:$0xff]
      %v367 = vld [vmem:[%s1 + $0xf0] sm:$0xff]
      %v368 = vld [vmem:[%s1 + $0xf8] sm:$0xff]
      %v369 = vld [vmem:[%s1 + $0x100] sm:$0xff]
      %v370 = vld [vmem:[%s1 + $0x108] sm:$0xff]
      %v371 = vld [vmem:[%s1 + $0x110] sm:$0xff]
      %v372 = vld [vmem:[%s1 + $0x118] sm:$0xff]
      %v373 = vld [vmem:[%s1 + $0x120] sm:$0xff]
      %v374 = vld [vmem:[%s1 + $0x128] sm:$0xff]
      %v375 = vld [vmem:[%s1 + $0x130] sm:$0xff]
      %v376 = vld [vmem:[%s1 + $0x138] sm:$0xff]
      %v377 = vld [vmem:[%s1 + $0x140] sm:$0xff]
      %v378 = vld [vmem:[%s1 + $0x148] sm:$0xff]
      %v379 = vld [vmem:[%s1 + $0x150] sm:$0xff]
      %v380 = vld [vmem:[%s1 + $0x158] sm:$0xff]
      %v381 = vld [vmem:[%s1 + $0x160] sm:$0xff]
      %v382 = vld [vmem:[%s1 + $0x168] sm:$0xff]
      %v383 = vld [vmem:[%s1 + $0x170] sm:$0xff]
      %v384 = vld [vmem:[%s1 + $0x178] sm:$0xff]
      %v385 = vld [vmem:[%s1 + $0x180] sm:$0xff]
      %v386 = vld [vmem:[%s1 + $0x188] sm:$0xff]
      %v387 = vld [vmem:[%s1 + $0x190] sm:$0xff]
      %v388 = vld [vmem:[%s1 + $0x198] sm:$0xff]
      %v389 = vld [vmem:[%s1 + $0x1a0] sm:$0xff]
      %v390 = vld [vmem:[%s1 + $0x1a8] sm:$0xff]
      %v391 = vld [vmem:[%s1 + $0x1b0] sm:$0xff]
      %v392 = vld [vmem:[%s1 + $0x1b8] sm:$0xff]
      %v393 = vld [vmem:[%s1 + $0x1c0] sm:$0xff]
      %v394 = vld [vmem:[%s1 + $0x1c8] sm:$0xff]
      %v395 = vld [vmem:[%s1 + $0x1d0] sm:$0xff]
      %v396 = vld [vmem:[%s1 + $0x1d8] sm:$0xff]
      %v397 = vld [vmem:[%s1 + $0x1e0] sm:$0xff]
      %v398 = vld [vmem:[%s1 + $0x1e8] sm:$0xff]
      %v399 = vld [vmem:[%s1 + $0x1f0] sm:$0xff]
      %v400 = vld [vmem:[%s1 + $0x1f8] sm:$0xff]
      %v401 = vld [vmem:[%s1 + $0x200] sm:$0xff]
      %v402 = vld [vmem:[%s1 + $0x208] sm:$0xff]
      %v403 = vld [vmem:[%s1 + $0x210] sm:$0xff]
      %v404 = vld [vmem:[%s1 + $0x218] sm:$0xff]
      %v405 = vld [vmem:[%s1 + $0x220] sm:$0xff]
      %v406 = vld [vmem:[%s1 + $0x228] sm:$0xff]
      %v407 = vld [vmem:[%s1 + $0x230] sm:$0xff]
      %v408 = vld [vmem:[%s1 + $0x238] sm:$0xff]
      %v409 = vld [vmem:[%s1 + $0x240] sm:$0xff]
      %v410 = vld [vmem:[%s1 + $0x248] sm:$0xff]
      %v411 = vld [vmem:[%s1 + $0x250] sm:$0xff]
      %v412 = vld [vmem:[%s1 + $0x258] sm:$0xff]
      %v413 = vld [vmem:[%s1 + $0x260] sm:$0xff]
      %v414 = vld [vmem:[%s1 + $0x268] sm:$0xff]
      %v415 = vld [vmem:[%s1 + $0x270] sm:$0xff]
      %v416 = vld [vmem:[%s1 + $0x278] sm:$0xff]
      %v417 = vld [vmem:[%s1 + $0x280] sm:$0xff]
      %v418 = vld [vmem:[%s1 + $0x288] sm:$0xff]
      %v419 = vld [vmem:[%s1 + $0x290] sm:$0xff]
      %v420 = vld [vmem:[%s1 + $0x298] sm:$0xff]
      %v421 = vld [vmem:[%s1 + $0x2a0] sm:$0xff]
      %v422 = vld [vmem:[%s1 + $0x2a8] sm:$0xff]
      %v423 = vld [vmem:[%s1 + $0x2b0] sm:$0xff]
      %v424 = vld [vmem:[%s1 + $0x2b8] sm:$0xff]
      %v425 = vld [vmem:[%s1 + $0x2c0] sm:$0xff]
      %v426 = vld [vmem:[%s1 + $0x2c8] sm:$0xff]
      %v427 = vld [vmem:[%s1 + $0x2d0] sm:$0xff]
      %v428 = vld [vmem:[%s1 + $0x2d8] sm:$0xff]
      %v429 = vld [vmem:[%s1 + $0x2e0] sm:$0xff]
      %v430 = vld [vmem:[%s1 + $0x2e8] sm:$0xff]
      %v431 = vld [vmem:[%s1 + $0x2f0] sm:$0xff]
      %v432 = vld [vmem:[%s1 + $0x2f8] sm:$0xff]
      %v433 = vld [vmem:[%s1 + $0x300] sm:$0xff]
      %v434 = vld [vmem:[%s1 + $0x308] sm:$0xff]
      %v435 = vld [vmem:[%s1 + $0x310] sm:$0xff]
      %v436 = vld [vmem:[%s1 + $0x318] sm:$0xff]
      %v437 = vld [vmem:[%s1 + $0x320] sm:$0xff]
      %v438 = vld [vmem:[%s1 + $0x328] sm:$0xff]
      %v439 = vld [vmem:[%s1 + $0x330] sm:$0xff]
      %v440 = vld [vmem:[%s1 + $0x338] sm:$0xff]
      %v441 = vld [vmem:[%s1 + $0x340] sm:$0xff]
      %v442 = vld [vmem:[%s1 + $0x348] sm:$0xff]
      %v443 = vld [vmem:[%s1 + $0x350] sm:$0xff]
      %v444 = vld [vmem:[%s1 + $0x358] sm:$0xff]
      %v445 = vld [vmem:[%s1 + $0x360] sm:$0xff]
      %v446 = vld [vmem:[%s1 + $0x368] sm:$0xff]
      %v447 = vld [vmem:[%s1 + $0x370] sm:$0xff]
      %v448 = vld [vmem:[%s1 + $0x378] sm:$0xff]
      %v449 = vld [vmem:[%s1 + $0x380] sm:$0xff]
      %v450 = vld [vmem:[%s1 + $0x388] sm:$0xff]
      %v451 = vld [vmem:[%s1 + $0x390] sm:$0xff]
      %v452 = vld [vmem:[%s1 + $0x398] sm:$0xff]
      %v453 = vld [vmem:[%s1 + $0x3a0] sm:$0xff]
      %v454 = vld [vmem:[%s1 + $0x3a8] sm:$0xff]
      %v455 = vld [vmem:[%s1 + $0x3b0] sm:$0xff]
      %v456 = vld [vmem:[%s1 + $0x3b8] sm:$0xff]
      %v457 = vld [vmem:[%s1 + $0x3c0] sm:$0xff]
      %v458 = vld [vmem:[%s1 + $0x3c8] sm:$0xff]
      %v459 = vld [vmem:[%s1 + $0x3d0] sm:$0xff]
      %v460 = vld [vmem:[%s1 + $0x3d8] sm:$0xff]
      %v461 = vld [vmem:[%s1 + $0x3e0] sm:$0xff]
      %v462 = vld [vmem:[%s1 + $0x3e8] sm:$0xff]
      %v463 = vld [vmem:[%s1 + $0x3f0] sm:$0xff]
      %v464 = vld [vmem:[%s1 + $0x3f8] sm:$0xff]
      %v465 = vld [vmem:[%s1 + $0x400] sm:$0xff]
      %v466 = vld [vmem:[%s1 + $0x408] sm:$0xff]
      %v467 = vld [vmem:[%s1 + $0x410] sm:$0xff]
      %v468 = vld [vmem:[%s1 + $0x418] sm:$0xff]
      %v469 = vld [vmem:[%s1 + $0x420] sm:$0xff]
      %v470 = vld [vmem:[%s1 + $0x428] sm:$0xff]
      %v471 = vld [vmem:[%s1 + $0x430] sm:$0xff]
      %v472 = vld [vmem:[%s1 + $0x438] sm:$0xff]
      %v473 = vld [vmem:[%s1 + $0x440] sm:$0xff]
      %v474 = vld [vmem:[%s1 + $0x448] sm:$0xff]
      %v475 = vld [vmem:[%s1 + $0x450] sm:$0xff]
      %v476 = vld [vmem:[%s1 + $0x458] sm:$0xff]
      %v477 = vld [vmem:[%s1 + $0x460] sm:$0xff]
      %v478 = vld [vmem:[%s1 + $0x468] sm:$0xff]
      %v479 = vld [vmem:[%s1 + $0x470] sm:$0xff]
      %v480 = vld [vmem:[%s1 + $0x478] sm:$0xff]
      %v481 = vld [vmem:[%s1 + $0x480] sm:$0xff]
      %v482 = vld [vmem:[%s1 + $0x488] sm:$0xff]
      %v483 = vld [vmem:[%s1 + $0x490] sm:$0xff]
      %v484 = vld [vmem:[%s1 + $0x498] sm:$0xff]
      %v485 = vld [vmem:[%s1 + $0x4a0] sm:$0xff]
      %v486 = vld [vmem:[%s1 + $0x4a8] sm:$0xff]
      %v487 = vld [vmem:[%s1 + $0x4b0] sm:$0xff]
      %v488 = vld [vmem:[%s1 + $0x4b8] sm:$0xff]
      %v489 = vld [vmem:[%s1 + $0x4c0] sm:$0xff]
      %v490 = vld [vmem:[%s1 + $0x4c8] sm:$0xff]
      %v491 = vld [vmem:[%s1 + $0x4d0] sm:$0xff]
      %v492 = vld [vmem:[%s1 + $0x4d8] sm:$0xff]
      %v493 = vld [vmem:[%s1 + $0x4e0] sm:$0xff]
      %v494 = vld [vmem:[%s1 + $0x4e8] sm:$0xff]
      %v495 = vld [vmem:[%s1 + $0x4f0] sm:$0xff]
      %v496 = vld [vmem:[%s1 + $0x4f8] sm:$0xff]
      %v657 = vunpack.c.l.b16 %v337
      %v658 = vunpack.c.h.b16 %v337
      %v659 = vunpack.c.l.b16 %v338
      %v660 = vunpack.c.h.b16 %v338
      %v661 = vunpack.c.l.b16 %v339
      %v662 = vunpack.c.h.b16 %v339
      %v663 = vunpack.c.l.b16 %v340
      %v664 = vunpack.c.h.b16 %v340
      %v665 = vunpack.c.l.b16 %v341
      %v666 = vunpack.c.h.b16 %v341
      %v667 = vunpack.c.l.b16 %v342
      %v668 = vunpack.c.h.b16 %v342
      %v669 = vunpack.c.l.b16 %v343
      %v670 = vunpack.c.h.b16 %v343
      %v671 = vunpack.c.l.b16 %v344
      %v672 = vunpack.c.h.b16 %v344
      %v673 = vunpack.c.l.b16 %v345
      %v674 = vunpack.c.h.b16 %v345
      %v675 = vunpack.c.l.b16 %v346
      %v676 = vunpack.c.h.b16 %v346
      %v677 = vunpack.c.l.b16 %v347
      %v678 = vunpack.c.h.b16 %v347
      %v679 = vunpack.c.l.b16 %v348
      %v680 = vunpack.c.h.b16 %v348
      %v681 = vunpack.c.l.b16 %v349
      %v682 = vunpack.c.h.b16 %v349
      %v683 = vunpack.c.l.b16 %v350
      %v684 = vunpack.c.h.b16 %v350
      %v685 = vunpack.c.l.b16 %v351
      %v686 = vunpack.c.h.b16 %v351
      %v687 = vunpack.c.l.b16 %v352
      %v688 = vunpack.c.h.b16 %v352
      %v689 = vunpack.c.l.b16 %v353
      %v690 = vunpack.c.h.b16 %v353
      %v691 = vunpack.c.l.b16 %v354
      %v692 = vunpack.c.h.b16 %v354
      %v693 = vunpack.c.l.b16 %v355
      %v694 = vunpack.c.h.b16 %v355
      %v695 = vunpack.c.l.b16 %v356
      %v696 = vunpack.c.h.b16 %v356
      %v697 = vunpack.c.l.b16 %v357
      %v698 = vunpack.c.h.b16 %v357
      %v699 = vunpack.c.l.b16 %v358
      %v700 = vunpack.c.h.b16 %v358
      %v701 = vunpack.c.l.b16 %v359
      %v702 = vunpack.c.h.b16 %v359
      %v703 = vunpack.c.l.b16 %v360
      %v704 = vunpack.c.h.b16 %v360
      %v705 = vunpack.c.l.b16 %v361
      %v706 = vunpack.c.h.b16 %v361
      %v707 = vunpack.c.l.b16 %v362
      %v708 = vunpack.c.h.b16 %v362
      %v709 = vunpack.c.l.b16 %v363
      %v710 = vunpack.c.h.b16 %v363
      %v711 = vunpack.c.l.b16 %v364
      %v712 = vunpack.c.h.b16 %v364
      %v713 = vunpack.c.l.b16 %v365
      %v714 = vunpack.c.h.b16 %v365
      %v715 = vunpack.c.l.b16 %v366
      %v716 = vunpack.c.h.b16 %v366
      %v717 = vunpack.c.l.b16 %v367
      %v718 = vunpack.c.h.b16 %v367
      %v719 = vunpack.c.l.b16 %v368
      %v720 = vunpack.c.h.b16 %v368
      %v721 = vunpack.c.l.b16 %v369
      %v722 = vunpack.c.h.b16 %v369
      %v723 = vunpack.c.l.b16 %v370
      %v724 = vunpack.c.h.b16 %v370
      %v725 = vunpack.c.l.b16 %v371
      %v726 = vunpack.c.h.b16 %v371
      %v727 = vunpack.c.l.b16 %v372
      %v728 = vunpack.c.h.b16 %v372
      %v729 = vunpack.c.l.b16 %v373
      %v730 = vunpack.c.h.b16 %v373
      %v731 = vunpack.c.l.b16 %v374
      %v732 = vunpack.c.h.b16 %v374
      %v733 = vunpack.c.l.b16 %v375
      %v734 = vunpack.c.h.b16 %v375
      %v735 = vunpack.c.l.b16 %v376
      %v736 = vunpack.c.h.b16 %v376
      %v737 = vunpack.c.l.b16 %v377
      %v738 = vunpack.c.h.b16 %v377
      %v739 = vunpack.c.l.b16 %v378
      %v740 = vunpack.c.h.b16 %v378
      %v741 = vunpack.c.l.b16 %v379
      %v742 = vunpack.c.h.b16 %v379
      %v743 = vunpack.c.l.b16 %v380
      %v744 = vunpack.c.h.b16 %v380
      %v745 = vunpack.c.l.b16 %v381
      %v746 = vunpack.c.h.b16 %v381
      %v747 = vunpack.c.l.b16 %v382
      %v748 = vunpack.c.h.b16 %v382
      %v749 = vunpack.c.l.b16 %v383
      %v750 = vunpack.c.h.b16 %v383
      %v751 = vunpack.c.l.b16 %v384
      %v752 = vunpack.c.h.b16 %v384
      %v753 = vunpack.c.l.b16 %v385
      %v754 = vunpack.c.h.b16 %v385
      %v755 = vunpack.c.l.b16 %v386
      %v756 = vunpack.c.h.b16 %v386
      %v757 = vunpack.c.l.b16 %v387
      %v758 = vunpack.c.h.b16 %v387
      %v759 = vunpack.c.l.b16 %v388
      %v760 = vunpack.c.h.b16 %v388
      %v761 = vunpack.c.l.b16 %v389
      %v762 = vunpack.c.h.b16 %v389
      %v763 = vunpack.c.l.b16 %v390
      %v764 = vunpack.c.h.b16 %v390
      %v765 = vunpack.c.l.b16 %v391
      %v766 = vunpack.c.h.b16 %v391
      %v767 = vunpack.c.l.b16 %v392
      %v768 = vunpack.c.h.b16 %v392
      %v769 = vunpack.c.l.b16 %v393
      %v770 = vunpack.c.h.b16 %v393
      %v771 = vunpack.c.l.b16 %v394
      %v772 = vunpack.c.h.b16 %v394
      %v773 = vunpack.c.l.b16 %v395
      %v774 = vunpack.c.h.b16 %v395
      %v775 = vunpack.c.l.b16 %v396
      %v776 = vunpack.c.h.b16 %v396
      %v777 = vunpack.c.l.b16 %v397
      %v778 = vunpack.c.h.b16 %v397
      %v779 = vunpack.c.l.b16 %v398
      %v780 = vunpack.c.h.b16 %v398
      %v781 = vunpack.c.l.b16 %v399
      %v782 = vunpack.c.h.b16 %v399
      %v783 = vunpack.c.l.b16 %v400
      %v784 = vunpack.c.h.b16 %v400
      %v785 = vunpack.c.l.b16 %v401
      %v786 = vunpack.c.h.b16 %v401
      %v787 = vunpack.c.l.b16 %v402
      %v788 = vunpack.c.h.b16 %v402
      %v789 = vunpack.c.l.b16 %v403
      %v790 = vunpack.c.h.b16 %v403
      %v791 = vunpack.c.l.b16 %v404
      %v792 = vunpack.c.h.b16 %v404
      %v793 = vunpack.c.l.b16 %v405
      %v794 = vunpack.c.h.b16 %v405
      %v795 = vunpack.c.l.b16 %v406
      %v796 = vunpack.c.h.b16 %v406
      %v797 = vunpack.c.l.b16 %v407
      %v798 = vunpack.c.h.b16 %v407
      %v799 = vunpack.c.l.b16 %v408
      %v800 = vunpack.c.h.b16 %v408
      %v801 = vunpack.c.l.b16 %v409
      %v802 = vunpack.c.h.b16 %v409
      %v803 = vunpack.c.l.b16 %v410
      %v804 = vunpack.c.h.b16 %v410
      %v805 = vunpack.c.l.b16 %v411
      %v806 = vunpack.c.h.b16 %v411
      %v807 = vunpack.c.l.b16 %v412
      %v808 = vunpack.c.h.b16 %v412
      %v809 = vunpack.c.l.b16 %v413
      %v810 = vunpack.c.h.b16 %v413
      %v811 = vunpack.c.l.b16 %v414
      %v812 = vunpack.c.h.b16 %v414
      %v813 = vunpack.c.l.b16 %v415
      %v814 = vunpack.c.h.b16 %v415
      %v815 = vunpack.c.l.b16 %v416
      %v816 = vunpack.c.h.b16 %v416
      %v817 = vunpack.c.l.b16 %v417
      %v818 = vunpack.c.h.b16 %v417
      %v819 = vunpack.c.l.b16 %v418
      %v820 = vunpack.c.h.b16 %v418
      %v821 = vunpack.c.l.b16 %v419
      %v822 = vunpack.c.h.b16 %v419
      %v823 = vunpack.c.l.b16 %v420
      %v824 = vunpack.c.h.b16 %v420
      %v825 = vunpack.c.l.b16 %v421
      %v826 = vunpack.c.h.b16 %v421
      %v827 = vunpack.c.l.b16 %v422
      %v828 = vunpack.c.h.b16 %v422
      %v829 = vunpack.c.l.b16 %v423
      %v830 = vunpack.c.h.b16 %v423
      %v831 = vunpack.c.l.b16 %v424
      %v832 = vunpack.c.h.b16 %v424
      %v833 = vunpack.c.l.b16 %v425
      %v834 = vunpack.c.h.b16 %v425
      %v835 = vunpack.c.l.b16 %v426
      %v836 = vunpack.c.h.b16 %v426
      %v837 = vunpack.c.l.b16 %v427
      %v838 = vunpack.c.h.b16 %v427
      %v839 = vunpack.c.l.b16 %v428
      %v840 = vunpack.c.h.b16 %v428
      %v841 = vunpack.c.l.b16 %v429
      %v842 = vunpack.c.h.b16 %v429
      %v843 = vunpack.c.l.b16 %v430
      %v844 = vunpack.c.h.b16 %v430
      %v845 = vunpack.c.l.b16 %v431
      %v846 = vunpack.c.h.b16 %v431
      %v847 = vunpack.c.l.b16 %v432
      %v848 = vunpack.c.h.b16 %v432
      %v849 = vunpack.c.l.b16 %v433
      %v850 = vunpack.c.h.b16 %v433
      %v851 = vunpack.c.l.b16 %v434
      %v852 = vunpack.c.h.b16 %v434
      %v853 = vunpack.c.l.b16 %v435
      %v854 = vunpack.c.h.b16 %v435
      %v855 = vunpack.c.l.b16 %v436
      %v856 = vunpack.c.h.b16 %v436
      %v857 = vunpack.c.l.b16 %v437
      %v858 = vunpack.c.h.b16 %v437
      %v859 = vunpack.c.l.b16 %v438
      %v860 = vunpack.c.h.b16 %v438
      %v861 = vunpack.c.l.b16 %v439
      %v862 = vunpack.c.h.b16 %v439
      %v863 = vunpack.c.l.b16 %v440
      %v864 = vunpack.c.h.b16 %v440
      %v865 = vunpack.c.l.b16 %v441
      %v866 = vunpack.c.h.b16 %v441
      %v867 = vunpack.c.l.b16 %v442
      %v868 = vunpack.c.h.b16 %v442
      %v869 = vunpack.c.l.b16 %v443
      %v870 = vunpack.c.h.b16 %v443
      %v871 = vunpack.c.l.b16 %v444
      %v872 = vunpack.c.h.b16 %v444
      %v873 = vunpack.c.l.b16 %v445
      %v874 = vunpack.c.h.b16 %v445
      %v875 = vunpack.c.l.b16 %v446
      %v876 = vunpack.c.h.b16 %v446
      %v877 = vunpack.c.l.b16 %v447
      %v878 = vunpack.c.h.b16 %v447
      %v879 = vunpack.c.l.b16 %v448
      %v880 = vunpack.c.h.b16 %v448
      %v881 = vunpack.c.l.b16 %v449
      %v882 = vunpack.c.h.b16 %v449
      %v883 = vunpack.c.l.b16 %v450
      %v884 = vunpack.c.h.b16 %v450
      %v885 = vunpack.c.l.b16 %v451
      %v886 = vunpack.c.h.b16 %v451
      %v887 = vunpack.c.l.b16 %v452
      %v888 = vunpack.c.h.b16 %v452
      %v889 = vunpack.c.l.b16 %v453
      %v890 = vunpack.c.h.b16 %v453
      %v891 = vunpack.c.l.b16 %v454
      %v892 = vunpack.c.h.b16 %v454
      %v893 = vunpack.c.l.b16 %v455
      %v894 = vunpack.c.h.b16 %v455
      %v895 = vunpack.c.l.b16 %v456
      %v896 = vunpack.c.h.b16 %v456
      %v897 = vunpack.c.l.b16 %v457
      %v898 = vunpack.c.h.b16 %v457
      %v899 = vunpack.c.l.b16 %v458
      %v900 = vunpack.c.h.b16 %v458
      %v901 = vunpack.c.l.b16 %v459
      %v902 = vunpack.c.h.b16 %v459
      %v903 = vunpack.c.l.b16 %v460
      %v904 = vunpack.c.h.b16 %v460
      %v905 = vunpack.c.l.b16 %v461
      %v906 = vunpack.c.h.b16 %v461
      %v907 = vunpack.c.l.b16 %v462
      %v908 = vunpack.c.h.b16 %v462
      %v909 = vunpack.c.l.b16 %v463
      %v910 = vunpack.c.h.b16 %v463
      %v911 = vunpack.c.l.b16 %v464
      %v912 = vunpack.c.h.b16 %v464
      %v913 = vunpack.c.l.b16 %v465
      %v914 = vunpack.c.h.b16 %v465
      %v915 = vunpack.c.l.b16 %v466
      %v916 = vunpack.c.h.b16 %v466
      %v917 = vunpack.c.l.b16 %v467
      %v918 = vunpack.c.h.b16 %v467
      %v919 = vunpack.c.l.b16 %v468
      %v920 = vunpack.c.h.b16 %v468
      %v921 = vunpack.c.l.b16 %v469
      %v922 = vunpack.c.h.b16 %v469
      %v923 = vunpack.c.l.b16 %v470
      %v924 = vunpack.c.h.b16 %v470
      %v925 = vunpack.c.l.b16 %v471
      %v926 = vunpack.c.h.b16 %v471
      %v927 = vunpack.c.l.b16 %v472
      %v928 = vunpack.c.h.b16 %v472
      %v929 = vunpack.c.l.b16 %v473
      %v930 = vunpack.c.h.b16 %v473
      %v931 = vunpack.c.l.b16 %v474
      %v932 = vunpack.c.h.b16 %v474
      %v933 = vunpack.c.l.b16 %v475
      %v934 = vunpack.c.h.b16 %v475
      %v935 = vunpack.c.l.b16 %v476
      %v936 = vunpack.c.h.b16 %v476
      %v937 = vunpack.c.l.b16 %v477
      %v938 = vunpack.c.h.b16 %v477
      %v939 = vunpack.c.l.b16 %v478
      %v940 = vunpack.c.h.b16 %v478
      %v941 = vunpack.c.l.b16 %v479
      %v942 = vunpack.c.h.b16 %v479
      %v943 = vunpack.c.l.b16 %v480
      %v944 = vunpack.c.h.b16 %v480
      %v945 = vunpack.c.l.b16 %v481
      %v946 = vunpack.c.h.b16 %v481
      %v947 = vunpack.c.l.b16 %v482
      %v948 = vunpack.c.h.b16 %v482
      %v949 = vunpack.c.l.b16 %v483
      %v950 = vunpack.c.h.b16 %v483
      %v951 = vunpack.c.l.b16 %v484
      %v952 = vunpack.c.h.b16 %v484
      %v953 = vunpack.c.l.b16 %v485
      %v954 = vunpack.c.h.b16 %v485
      %v955 = vunpack.c.l.b16 %v486
      %v956 = vunpack.c.h.b16 %v486
      %v957 = vunpack.c.l.b16 %v487
      %v958 = vunpack.c.h.b16 %v487
      %v959 = vunpack.c.l.b16 %v488
      %v960 = vunpack.c.h.b16 %v488
      %v961 = vunpack.c.l.b16 %v489
      %v962 = vunpack.c.h.b16 %v489
      %v963 = vunpack.c.l.b16 %v490
      %v964 = vunpack.c.h.b16 %v490
      %v965 = vunpack.c.l.b16 %v491
      %v966 = vunpack.c.h.b16 %v491
      %v967 = vunpack.c.l.b16 %v492
      %v968 = vunpack.c.h.b16 %v492
      %v969 = vunpack.c.l.b16 %v493
      %v970 = vunpack.c.h.b16 %v493
      %v971 = vunpack.c.l.b16 %v494
      %v972 = vunpack.c.h.b16 %v494
      %v973 = vunpack.c.l.b16 %v495
      %v974 = vunpack.c.h.b16 %v495
      %v975 = vunpack.c.l.b16 %v496
      %v976 = vunpack.c.h.b16 %v496
      %v977 = vpack.c.b16 %v659, %v657
      %v978 = vpack.c.b16 %v660, %v658
      %v979 = vpack.c.b16 %v663, %v661
      %v980 = vpack.c.b16 %v664, %v662
      %v981 = vpack.c.b16 %v667, %v665
      %v982 = vpack.c.b16 %v668, %v666
      %v983 = vpack.c.b16 %v671, %v669
      %v984 = vpack.c.b16 %v672, %v670
      %v985 = vpack.c.b16 %v675, %v673
      %v986 = vpack.c.b16 %v676, %v674
      %v987 = vpack.c.b16 %v679, %v677
      %v988 = vpack.c.b16 %v680, %v678
      %v989 = vpack.c.b16 %v683, %v681
      %v990 = vpack.c.b16 %v684, %v682
      %v991 = vpack.c.b16 %v687, %v685
      %v992 = vpack.c.b16 %v688, %v686
      %v993 = vpack.c.b16 %v691, %v689
      %v994 = vpack.c.b16 %v692, %v690
      %v995 = vpack.c.b16 %v695, %v693
      %v996 = vpack.c.b16 %v696, %v694
      %v997 = vpack.c.b16 %v699, %v697
      %v998 = vpack.c.b16 %v700, %v698
      %v999 = vpack.c.b16 %v703, %v701
      %v1000 = vpack.c.b16 %v704, %v702
      %v1001 = vpack.c.b16 %v707, %v705
      %v1002 = vpack.c.b16 %v708, %v706
      %v1003 = vpack.c.b16 %v711, %v709
      %v1004 = vpack.c.b16 %v712, %v710
      %v1005 = vpack.c.b16 %v715, %v713
      %v1006 = vpack.c.b16 %v716, %v714
      %v1007 = vpack.c.b16 %v719, %v717
      %v1008 = vpack.c.b16 %v720, %v718
      %v1009 = vpack.c.b16 %v723, %v721
      %v1010 = vpack.c.b16 %v724, %v722
      %v1011 = vpack.c.b16 %v727, %v725
      %v1012 = vpack.c.b16 %v728, %v726
      %v1013 = vpack.c.b16 %v731, %v729
      %v1014 = vpack.c.b16 %v732, %v730
      %v1015 = vpack.c.b16 %v735, %v733
      %v1016 = vpack.c.b16 %v736, %v734
      %v1017 = vpack.c.b16 %v739, %v737
      %v1018 = vpack.c.b16 %v740, %v738
      %v1019 = vpack.c.b16 %v743, %v741
      %v1020 = vpack.c.b16 %v744, %v742
      %v1021 = vpack.c.b16 %v747, %v745
      %v1022 = vpack.c.b16 %v748, %v746
      %v1023 = vpack.c.b16 %v751, %v749
      %v1024 = vpack.c.b16 %v752, %v750
      %v1025 = vpack.c.b16 %v755, %v753
      %v1026 = vpack.c.b16 %v756, %v754
      %v1027 = vpack.c.b16 %v759, %v757
      %v1028 = vpack.c.b16 %v760, %v758
      %v1029 = vpack.c.b16 %v763, %v761
      %v1030 = vpack.c.b16 %v764, %v762
      %v1031 = vpack.c.b16 %v767, %v765
      %v1032 = vpack.c.b16 %v768, %v766
      %v1033 = vpack.c.b16 %v771, %v769
      %v1034 = vpack.c.b16 %v772, %v770
      %v1035 = vpack.c.b16 %v775, %v773
      %v1036 = vpack.c.b16 %v776, %v774
      %v1037 = vpack.c.b16 %v779, %v777
      %v1038 = vpack.c.b16 %v780, %v778
      %v1039 = vpack.c.b16 %v783, %v781
      %v1040 = vpack.c.b16 %v784, %v782
      %v1041 = vpack.c.b16 %v787, %v785
      %v1042 = vpack.c.b16 %v788, %v786
      %v1043 = vpack.c.b16 %v791, %v789
      %v1044 = vpack.c.b16 %v792, %v790
      %v1045 = vpack.c.b16 %v795, %v793
      %v1046 = vpack.c.b16 %v796, %v794
      %v1047 = vpack.c.b16 %v799, %v797
      %v1048 = vpack.c.b16 %v800, %v798
      %v1049 = vpack.c.b16 %v803, %v801
      %v1050 = vpack.c.b16 %v804, %v802
      %v1051 = vpack.c.b16 %v807, %v805
      %v1052 = vpack.c.b16 %v808, %v806
      %v1053 = vpack.c.b16 %v811, %v809
      %v1054 = vpack.c.b16 %v812, %v810
      %v1055 = vpack.c.b16 %v815, %v813
      %v1056 = vpack.c.b16 %v816, %v814
      %v1057 = vpack.c.b16 %v819, %v817
      %v1058 = vpack.c.b16 %v820, %v818
      %v1059 = vpack.c.b16 %v823, %v821
      %v1060 = vpack.c.b16 %v824, %v822
      %v1061 = vpack.c.b16 %v827, %v825
      %v1062 = vpack.c.b16 %v828, %v826
      %v1063 = vpack.c.b16 %v831, %v829
      %v1064 = vpack.c.b16 %v832, %v830
      %v1065 = vpack.c.b16 %v835, %v833
      %v1066 = vpack.c.b16 %v836, %v834
      %v1067 = vpack.c.b16 %v839, %v837
      %v1068 = vpack.c.b16 %v840, %v838
      %v1069 = vpack.c.b16 %v843, %v841
      %v1070 = vpack.c.b16 %v844, %v842
      %v1071 = vpack.c.b16 %v847, %v845
      %v1072 = vpack.c.b16 %v848, %v846
      %v1073 = vpack.c.b16 %v851, %v849
      %v1074 = vpack.c.b16 %v852, %v850
      %v1075 = vpack.c.b16 %v855, %v853
      %v1076 = vpack.c.b16 %v856, %v854
      %v1077 = vpack.c.b16 %v859, %v857
      %v1078 = vpack.c.b16 %v860, %v858
      %v1079 = vpack.c.b16 %v863, %v861
      %v1080 = vpack.c.b16 %v864, %v862
      %v1081 = vpack.c.b16 %v867, %v865
      %v1082 = vpack.c.b16 %v868, %v866
      %v1083 = vpack.c.b16 %v871, %v869
      %v1084 = vpack.c.b16 %v872, %v870
      %v1085 = vpack.c.b16 %v875, %v873
      %v1086 = vpack.c.b16 %v876, %v874
      %v1087 = vpack.c.b16 %v879, %v877
      %v1088 = vpack.c.b16 %v880, %v878
      %v1089 = vpack.c.b16 %v883, %v881
      %v1090 = vpack.c.b16 %v884, %v882
      %v1091 = vpack.c.b16 %v887, %v885
      %v1092 = vpack.c.b16 %v888, %v886
      %v1093 = vpack.c.b16 %v891, %v889
      %v1094 = vpack.c.b16 %v892, %v890
      %v1095 = vpack.c.b16 %v895, %v893
      %v1096 = vpack.c.b16 %v896, %v894
      %v1097 = vpack.c.b16 %v899, %v897
      %v1098 = vpack.c.b16 %v900, %v898
      %v1099 = vpack.c.b16 %v903, %v901
      %v1100 = vpack.c.b16 %v904, %v902
      %v1101 = vpack.c.b16 %v907, %v905
      %v1102 = vpack.c.b16 %v908, %v906
      %v1103 = vpack.c.b16 %v911, %v909
      %v1104 = vpack.c.b16 %v912, %v910
      %v1105 = vpack.c.b16 %v915, %v913
      %v1106 = vpack.c.b16 %v916, %v914
      %v1107 = vpack.c.b16 %v919, %v917
      %v1108 = vpack.c.b16 %v920, %v918
      %v1109 = vpack.c.b16 %v923, %v921
      %v1110 = vpack.c.b16 %v924, %v922
      %v1111 = vpack.c.b16 %v927, %v925
      %v1112 = vpack.c.b16 %v928, %v926
      %v1113 = vpack.c.b16 %v931, %v929
      %v1114 = vpack.c.b16 %v932, %v930
      %v1115 = vpack.c.b16 %v935, %v933
      %v1116 = vpack.c.b16 %v936, %v934
      %v1117 = vpack.c.b16 %v939, %v937
      %v1118 = vpack.c.b16 %v940, %v938
      %v1119 = vpack.c.b16 %v943, %v941
      %v1120 = vpack.c.b16 %v944, %v942
      %v1121 = vpack.c.b16 %v947, %v945
      %v1122 = vpack.c.b16 %v948, %v946
      %v1123 = vpack.c.b16 %v951, %v949
      %v1124 = vpack.c.b16 %v952, %v950
      %v1125 = vpack.c.b16 %v955, %v953
      %v1126 = vpack.c.b16 %v956, %v954
      %v1127 = vpack.c.b16 %v959, %v957
      %v1128 = vpack.c.b16 %v960, %v958
      %v1129 = vpack.c.b16 %v963, %v961
      %v1130 = vpack.c.b16 %v964, %v962
      %v1131 = vpack.c.b16 %v967, %v965
      %v1132 = vpack.c.b16 %v968, %v966
      %v1133 = vpack.c.b16 %v971, %v969
      %v1134 = vpack.c.b16 %v972, %v970
      %v1135 = vpack.c.b16 %v975, %v973
      %v1136 = vpack.c.b16 %v976, %v974
      %1297 = vmatprep.subr.bf16.mxu0 %v978
      %1298 = vmatpush1.bf16.msra.mxu0 %v977
      %1299 = vmatprep.subr.bf16.mxu0 %v980
      %1300 = vmatpush1.bf16.msra.mxu0 %v979
      %1301 = vmatprep.subr.bf16.mxu0 %v982
      %1302 = vmatpush1.bf16.msra.mxu0 %v981
      %1303 = vmatprep.subr.bf16.mxu0 %v984
      %1304 = vmatpush1.bf16.msra.mxu0 %v983
      %1305 = vmatprep.subr.bf16.mxu0 %v986
      %1306 = vmatpush1.bf16.msra.mxu0 %v985
      %1307 = vmatprep.subr.bf16.mxu0 %v988
      %1308 = vmatpush1.bf16.msra.mxu0 %v987
      %1309 = vmatprep.subr.bf16.mxu0 %v990
      %1310 = vmatpush1.bf16.msra.mxu0 %v989
      %1311 = vmatprep.subr.bf16.mxu0 %v992
      %1312 = vmatpush1.bf16.msra.mxu0 %v991
      %1313 = vmatprep.subr.bf16.mxu0 %v994
      %1314 = vmatpush1.bf16.msra.mxu0 %v993
      %1315 = vmatprep.subr.bf16.mxu0 %v996
      %1316 = vmatpush1.bf16.msra.mxu0 %v995
      %1317 = vmatprep.subr.bf16.mxu0 %v998
      %1318 = vmatpush1.bf16.msra.mxu0 %v997
      %1319 = vmatprep.subr.bf16.mxu0 %v1000
      %1320 = vmatpush1.bf16.msra.mxu0 %v999
      %1321 = vmatprep.subr.bf16.mxu0 %v1002
      %1322 = vmatpush1.bf16.msra.mxu0 %v1001
      %1323 = vmatprep.subr.bf16.mxu0 %v1004
      %1324 = vmatpush1.bf16.msra.mxu0 %v1003
      %1325 = vmatprep.subr.bf16.mxu0 %v1006
      %1326 = vmatpush1.bf16.msra.mxu0 %v1005
      %1327 = vmatprep.subr.bf16.mxu0 %v1008
      %1328 = vmatpush1.bf16.msra.mxu0 %v1007
      %1329 = vmatprep.mubr.bf16.mxu0 %v279
      %1330 = vmatmul.mubr.bf16.gmra.mrb[0].mxu0 %v278
      %v1331 = vpop.f32.mrb[0].mxu0
      %v1332 = vadd.f32 0.0, %v1331
      %v1333 = vpop.f32.mrb[0].mxu0
      %v1334 = vadd.f32 0.0, %v1333
      %v1335 = vpop.f32.mrb[0].mxu0
      %v1336 = vadd.f32 0.0, %v1335
      %v1337 = vpop.f32.mrb[0].mxu0
      %v1338 = vadd.f32 0.0, %v1337
      %1339 = vmatprep.mubr.bf16.mxu0 %v281
      %1340 = vmatmul.mubr.bf16.gmra.mrb[0].mxu0 %v280
      %v1341 = vpop.f32.mrb[0].mxu0
      %v1342 = vadd.f32 0.0, %v1341
      %v1343 = vpop.f32.mrb[0].mxu0
      %v1344 = vadd.f32 0.0, %v1343
      %v1345 = vpop.f32.mrb[0].mxu0
      %v1346 = vpop.f32.mrb[0].mxu0
      %1347 = vdwg.mxu0
      %1348 = vmatprep.subr.bf16.mxu0 %v1010
      %1349 = vmatpush1.bf16.msra.mxu0 %v1009
      %1350 = vmatprep.subr.bf16.mxu0 %v1012
      %1351 = vmatpush1.bf16.msra.mxu0 %v1011
      %1352 = vmatprep.subr.bf16.mxu0 %v1014
      %1353 = vmatpush1.bf16.msra.mxu0 %v1013
      %1354 = vmatprep.subr.bf16.mxu0 %v1016
      %1355 = vmatpush1.bf16.msra.mxu0 %v1015
      %1356 = vmatprep.subr.bf16.mxu0 %v1018
      %1357 = vmatpush1.bf16.msra.mxu0 %v1017
      %1358 = vmatprep.subr.bf16.mxu0 %v1020
      %1359 = vmatpush1.bf16.msra.mxu0 %v1019
      %1360 = vmatprep.subr.bf16.mxu0 %v1022
      %1361 = vmatpush1.bf16.msra.mxu0 %v1021
      %1362 = vmatprep.subr.bf16.mxu0 %v1024
      %1363 = vmatpush1.bf16.msra.mxu0 %v1023
      %1364 = vmatprep.subr.bf16.mxu0 %v1026
      %1365 = vmatpush1.bf16.msra.mxu0 %v1025
      %1366 = vmatprep.subr.bf16.mxu0 %v1028
      %1367 = vmatpush1.bf16.msra.mxu0 %v1027
      %1368 = vmatprep.subr.bf16.mxu0 %v1030
      %1369 = vmatpush1.bf16.msra.mxu0 %v1029
      %1370 = vmatprep.subr.bf16.mxu0 %v1032
      %1371 = vmatpush1.bf16.msra.mxu0 %v1031
      %1372 = vmatprep.subr.bf16.mxu0 %v1034
      %1373 = vmatpush1.bf16.msra.mxu0 %v1033
      %1374 = vmatprep.subr.bf16.mxu0 %v1036
      %1375 = vmatpush1.bf16.msra.mxu0 %v1035
      %1376 = vmatprep.subr.bf16.mxu0 %v1038
      %1377 = vmatpush1.bf16.msra.mxu0 %v1037
      %1378 = vmatprep.subr.bf16.mxu0 %v1040
      %1379 = vmatpush1.bf16.msra.mxu0 %v1039
      %1380 = vmatprep.mubr.bf16.mxu0 %v296
      %1381 = vmatmul.mubr.bf16.gmra.mrb[0].mxu0 %v295
      %v1382 = vpop.f32.mrb[0].mxu0
      %v1383 = vadd.f32 %v1332, %v1382
      %v1384 = vpop.f32.mrb[0].mxu0
      %v1385 = vadd.f32 %v1334, %v1384
      %v1386 = vpop.f32.mrb[0].mxu0
      %v1387 = vadd.f32 %v1336, %v1386
      %v1388 = vpop.f32.mrb[0].mxu0
      %v1389 = vadd.f32 %v1338, %v1388
      %1390 = vmatprep.mubr.bf16.mxu0 %v298
      %1391 = vmatmul.mubr.bf16.gmra.mrb[0].mxu0 %v297
      %v1392 = vpop.f32.mrb[0].mxu0
      %v1393 = vadd.f32 %v1342, %v1392
      %v1394 = vpop.f32.mrb[0].mxu0
      %v1395 = vadd.f32 %v1344, %v1394
      %v1396 = vpop.f32.mrb[0].mxu0
      %v1397 = vpop.f32.mrb[0].mxu0
      %1398 = vdwg.mxu0
      %1399 = vmatprep.subr.bf16.mxu0 %v1042
      %1400 = vmatpush1.bf16.msra.mxu0 %v1041
      %1401 = vmatprep.subr.bf16.mxu0 %v1044
      %1402 = vmatpush1.bf16.msra.mxu0 %v1043
      %1403 = vmatprep.subr.bf16.mxu0 %v1046
      %1404 = vmatpush1.bf16.msra.mxu0 %v1045
      %1405 = vmatprep.subr.bf16.mxu0 %v1048
      %1406 = vmatpush1.bf16.msra.mxu0 %v1047
      %1407 = vmatprep.subr.bf16.mxu0 %v1050
      %1408 = vmatpush1.bf16.msra.mxu0 %v1049
      %1409 = vmatprep.subr.bf16.mxu0 %v1052
      %1410 = vmatpush1.bf16.msra.mxu0 %v1051
      %1411 = vmatprep.subr.bf16.mxu0 %v1054
      %1412 = vmatpush1.bf16.msra.mxu0 %v1053
      %1413 = vmatprep.subr.bf16.mxu0 %v1056
      %1414 = vmatpush1.bf16.msra.mxu0 %v1055
      %1415 = vmatprep.subr.bf16.mxu0 %v1058
      %1416 = vmatpush1.bf16.msra.mxu0 %v1057
      %1417 = vmatprep.subr.bf16.mxu0 %v1060
      %1418 = vmatpush1.bf16.msra.mxu0 %v1059
      %1419 = vmatprep.subr.bf16.mxu0 %v1062
      %1420 = vmatpush1.bf16.msra.mxu0 %v1061
      %1421 = vmatprep.subr.bf16.mxu0 %v1064
      %1422 = vmatpush1.bf16.msra.mxu0 %v1063
      %1423 = vmatprep.subr.bf16.mxu0 %v1066
      %1424 = vmatpush1.bf16.msra.mxu0 %v1065
      %1425 = vmatprep.subr.bf16.mxu0 %v1068
      %1426 = vmatpush1.bf16.msra.mxu0 %v1067
      %1427 = vmatprep.subr.bf16.mxu0 %v1070
      %1428 = vmatpush1.bf16.msra.mxu0 %v1069
      %1429 = vmatprep.subr.bf16.mxu0 %v1072
      %1430 = vmatpush1.bf16.msra.mxu0 %v1071
      %1431 = vmatprep.mubr.bf16.mxu0 %v300
      %1432 = vmatmul.mubr.bf16.gmra.mrb[0].mxu0 %v299
      %v1433 = vpop.f32.mrb[0].mxu0
      %v1434 = vadd.f32 %v1383, %v1433
      %v1435 = vpop.f32.mrb[0].mxu0
      %v1436 = vadd.f32 %v1385, %v1435
      %v1437 = vpop.f32.mrb[0].mxu0
      %v1438 = vadd.f32 %v1387, %v1437
      %v1439 = vpop.f32.mrb[0].mxu0
      %v1440 = vadd.f32 %v1389, %v1439
      %1441 = vmatprep.mubr.bf16.mxu0 %v302
      %1442 = vmatmul.mubr.bf16.gmra.mrb[0].mxu0 %v301
      %v1443 = vpop.f32.mrb[0].mxu0
      %v1444 = vadd.f32 %v1393, %v1443
      %v1445 = vpop.f32.mrb[0].mxu0
      %v1446 = vadd.f32 %v1395, %v1445
      %v1447 = vpop.f32.mrb[0].mxu0
      %v1448 = vpop.f32.mrb[0].mxu0
      %1449 = vdwg.mxu0
      %1450 = vmatprep.subr.bf16.mxu0 %v1074
      %1451 = vmatpush1.bf16.msra.mxu0 %v1073
      %1452 = vmatprep.subr.bf16.mxu0 %v1076
      %1453 = vmatpush1.bf16.msra.mxu0 %v1075
      %1454 = vmatprep.subr.bf16.mxu0 %v1078
      %1455 = vmatpush1.bf16.msra.mxu0 %v1077
      %1456 = vmatprep.subr.bf16.mxu0 %v1080
      %1457 = vmatpush1.bf16.msra.mxu0 %v1079
      %1458 = vmatprep.subr.bf16.mxu0 %v1082
      %1459 = vmatpush1.bf16.msra.mxu0 %v1081
      %1460 = vmatprep.subr.bf16.mxu0 %v1084
      %1461 = vmatpush1.bf16.msra.mxu0 %v1083
      %1462 = vmatprep.subr.bf16.mxu0 %v1086
      %1463 = vmatpush1.bf16.msra.mxu0 %v1085
      %1464 = vmatprep.subr.bf16.mxu0 %v1088
      %1465 = vmatpush1.bf16.msra.mxu0 %v1087
      %1466 = vmatprep.subr.bf16.mxu0 %v1090
      %1467 = vmatpush1.bf16.msra.mxu0 %v1089
      %1468 = vmatprep.subr.bf16.mxu0 %v1092
      %1469 = vmatpush1.bf16.msra.mxu0 %v1091
      %1470 = vmatprep.subr.bf16.mxu0 %v1094
      %1471 = vmatpush1.bf16.msra.mxu0 %v1093
      %1472 = vmatprep.subr.bf16.mxu0 %v1096
      %1473 = vmatpush1.bf16.msra.mxu0 %v1095
      %1474 = vmatprep.subr.bf16.mxu0 %v1098
      %1475 = vmatpush1.bf16.msra.mxu0 %v1097
      %1476 = vmatprep.subr.bf16.mxu0 %v1100
      %1477 = vmatpush1.bf16.msra.mxu0 %v1099
      %1478 = vmatprep.subr.bf16.mxu0 %v1102
      %1479 = vmatpush1.bf16.msra.mxu0 %v1101
      %1480 = vmatprep.subr.bf16.mxu0 %v1104
      %1481 = vmatpush1.bf16.msra.mxu0 %v1103
      %1482 = vmatprep.mubr.bf16.mxu0 %v317
      %1483 = vmatmul.mubr.bf16.gmra.mrb[0].mxu0 %v316
      %v1484 = vpop.f32.mrb[0].mxu0
      %v1485 = vadd.f32 %v1434, %v1484
      %v1486 = vpop.f32.mrb[0].mxu0
      %v1487 = vadd.f32 %v1436, %v1486
      %v1488 = vpop.f32.mrb[0].mxu0
      %v1489 = vadd.f32 %v1438, %v1488
      %v1490 = vpop.f32.mrb[0].mxu0
      %v1491 = vadd.f32 %v1440, %v1490
      %1492 = vmatprep.mubr.bf16.mxu0 %v319
      %1493 = vmatmul.mubr.bf16.gmra.mrb[0].mxu0 %v318
      %v1494 = vpop.f32.mrb[0].mxu0
      %v1495 = vadd.f32 %v1444, %v1494
      %v1496 = vpop.f32.mrb[0].mxu0
      %v1497 = vadd.f32 %v1446, %v1496
      %v1498 = vpop.f32.mrb[0].mxu0
      %v1499 = vpop.f32.mrb[0].mxu0
      %1500 = vdwg.mxu0
      %1501 = vmatprep.subr.bf16.mxu0 %v1106
      %1502 = vmatpush1.bf16.msra.mxu0 %v1105
      %1503 = vmatprep.subr.bf16.mxu0 %v1108
      %1504 = vmatpush1.bf16.msra.mxu0 %v1107
      %1505 = vmatprep.subr.bf16.mxu0 %v1110
      %1506 = vmatpush1.bf16.msra.mxu0 %v1109
      %1507 = vmatprep.subr.bf16.mxu0 %v1112
      %1508 = vmatpush1.bf16.msra.mxu0 %v1111
      %1509 = vmatprep.subr.bf16.mxu0 %v1114
      %1510 = vmatpush1.bf16.msra.mxu0 %v1113
      %1511 = vmatprep.subr.bf16.mxu0 %v1116
      %1512 = vmatpush1.bf16.msra.mxu0 %v1115
      %1513 = vmatprep.subr.bf16.mxu0 %v1118
      %1514 = vmatpush1.bf16.msra.mxu0 %v1117
      %1515 = vmatprep.subr.bf16.mxu0 %v1120
      %1516 = vmatpush1.bf16.msra.mxu0 %v1119
      %1517 = vmatprep.subr.bf16.mxu0 %v1122
      %1518 = vmatpush1.bf16.msra.mxu0 %v1121
      %1519 = vmatprep.subr.bf16.mxu0 %v1124
      %1520 = vmatpush1.bf16.msra.mxu0 %v1123
      %1521 = vmatprep.subr.bf16.mxu0 %v1126
      %1522 = vmatpush1.bf16.msra.mxu0 %v1125
      %1523 = vmatprep.subr.bf16.mxu0 %v1128
      %1524 = vmatpush1.bf16.msra.mxu0 %v1127
      %1525 = vmatprep.subr.bf16.mxu0 %v1130
      %1526 = vmatpush1.bf16.msra.mxu0 %v1129
      %1527 = vmatprep.subr.bf16.mxu0 %v1132
      %1528 = vmatpush1.bf16.msra.mxu0 %v1131
      %1529 = vmatprep.subr.bf16.mxu0 %v1134
      %1530 = vmatpush1.bf16.msra.mxu0 %v1133
      %1531 = vmatprep.subr.bf16.mxu0 %v1136
      %1532 = vmatpush1.bf16.msra.mxu0 %v1135
      %1533 = vmatprep.mubr.bf16.mxu0 %v334
      %1534 = vmatmul.mubr.bf16.gmra.mrb[0].mxu0 %v333
      %v1535 = vpop.f32.mrb[0].mxu0
      %v1536 = vadd.f32 %v1485, %v1535
      %v1537 = vpop.f32.mrb[0].mxu0
      %v1538 = vadd.f32 %v1487, %v1537
      %v1539 = vpop.f32.mrb[0].mxu0
      %v1540 = vadd.f32 %v1489, %v1539
      %v1541 = vpop.f32.mrb[0].mxu0
      %v1542 = vadd.f32 %v1491, %v1541
      %1543 = vmatprep.mubr.bf16.mxu0 %v336
      %1544 = vmatmul.mubr.bf16.gmra.mrb[0].mxu0 %v335
      %v1545 = vpop.f32.mrb[0].mxu0
      %v1546 = vadd.f32 %v1495, %v1545
      %v1547 = vpop.f32.mrb[0].mxu0
      %v1548 = vadd.f32 %v1497, %v1547
      %v1549 = vpop.f32.mrb[0].mxu0
      %v1550 = vpop.f32.mrb[0].mxu0
      %1551 = vdwg.mxu0
      %v1552 = vsel %vm256, %v1536, 0.0
      %v1553 = vsel %vm256, %v1538, 0.0
      %v1554 = vsel %vm257, %v1540, 0.0
      %v1555 = vsel %vm257, %v1542, 0.0
      %v1556 = vsel %vm258, %v1546, 0.0
      %v1557 = vsel %vm258, %v1548, 0.0
      %v1558 = vrot.slane %v1552, 6
      %v1559 = vrot.slane %v1553, 6
      %v1560 = vrot.slane %v1554, 6
      %v1561 = vrot.slane %v1555, 6
      %v1562 = vrot.slane %v1556, 6
      %v1563 = vrot.slane %v1557, 6
      %v1564 = vsel %vm271, %v1560, %v1562
      %v1565 = vsel %vm271, %v1561, %v1563
      %v1566 = vsel %vm271, %v1558, %v1560
      %v1567 = vsel %vm271, %v1559, %v1561
      %v1568 = vsel %vm271, %v1562, %v1558
      %v1569 = vsel %vm271, %v1563, %v1559
      %v1570 = vpack.c.bf16 %v1566, %v1568
      %v1571 = vpack.c.bf16 %v1567, %v1569
      %v1572 = vpack.c.bf16 %v1564, %v1564
      %v1573 = vpack.c.bf16 %v1565, %v1565
      %v1574 = vrot.slane %v1552, 7
      %v1575 = vrot.slane %v1553, 7
      %v1576 = vrot.slane %v1554, 7
      %v1577 = vrot.slane %v1555, 7
      %v1578 = vrot.slane %v1556, 7
      %v1579 = vrot.slane %v1557, 7
      %v1580 = vsel %vm288, %v1576, %v1578
      %v1581 = vsel %vm288, %v1577, %v1579
      %v1582 = vsel %vm288, %v1574, %v1576
      %v1583 = vsel %vm288, %v1575, %v1577
      %v1584 = vsel %vm288, %v1578, %v1574
      %v1585 = vsel %vm288, %v1579, %v1575
      %v1586 = vpack.c.bf16 %v1582, %v1584
      %v1587 = vpack.c.bf16 %v1583, %v1585
      %v1588 = vpack.c.bf16 %v1580, %v1580
      %v1589 = vpack.c.bf16 %v1581, %v1581
      %v1590 = vpack.c.bf16 %v1554, %v1552
      %v1591 = vpack.c.bf16 %v1555, %v1553
      %v1592 = vpack.c.bf16 %v1556, %v1556
      %v1593 = vpack.c.bf16 %v1557, %v1557
      %v1594 = vrot.slane %v1552, 1
      %v1595 = vrot.slane %v1553, 1
      %v1596 = vrot.slane %v1554, 1
      %v1597 = vrot.slane %v1555, 1
      %v1598 = vrot.slane %v1556, 1
      %v1599 = vrot.slane %v1557, 1
      %v1600 = vsel %vm309, %v1596, %v1598
      %v1601 = vsel %vm309, %v1597, %v1599
      %v1602 = vsel %vm309, %v1594, %v1596
      %v1603 = vsel %vm309, %v1595, %v1597
      %v1604 = vsel %vm309, %v1598, %v1594
      %v1605 = vsel %vm309, %v1599, %v1595
      %v1606 = vpack.c.bf16 %v1600, %v1602
      %v1607 = vpack.c.bf16 %v1601, %v1603
      %v1608 = vpack.c.bf16 %v1604, %v1604
      %v1609 = vpack.c.bf16 %v1605, %v1605
      %v1610 = vrot.slane %v1552, 2
      %v1611 = vrot.slane %v1553, 2
      %v1612 = vrot.slane %v1554, 2
      %v1613 = vrot.slane %v1555, 2
      %v1614 = vrot.slane %v1556, 2
      %v1615 = vrot.slane %v1557, 2
      %v1616 = vsel %vm326, %v1612, %v1614
      %v1617 = vsel %vm326, %v1613, %v1615
      %v1618 = vsel %vm326, %v1610, %v1612
      %v1619 = vsel %vm326, %v1611, %v1613
      %v1620 = vsel %vm326, %v1614, %v1610
      %v1621 = vsel %vm326, %v1615, %v1611
      %v1622 = vpack.c.bf16 %v1616, %v1618
      %v1623 = vpack.c.bf16 %v1617, %v1619
      %v1624 = vpack.c.bf16 %v1620, %v1620
      %v1625 = vpack.c.bf16 %v1621, %v1621
      %v1626 = vld [vmem:[%s2] sm:$0xff]
      %v1627 = vld [vmem:[%s2 + $0x8] sm:$0xff]
      %v1628 = vld [vmem:[%s2 + $0x10] sm:$0xff]
      %v1629 = vld [vmem:[%s2 + $0x18] sm:$0xff]
      %v1630 = vld [vmem:[%s2 + $0x20] sm:$0xff]
      %v1631 = vld [vmem:[%s2 + $0x28] sm:$0xff]
      %v1632 = vld [vmem:[%s2 + $0x30] sm:$0xff]
      %v1633 = vld [vmem:[%s2 + $0x38] sm:$0xff]
      %v1634 = vld [vmem:[%s2 + $0x40] sm:$0xff]
      %v1635 = vld [vmem:[%s2 + $0x48] sm:$0xff]
      %v1636 = vld [vmem:[%s2 + $0x50] sm:$0xff]
      %v1637 = vld [vmem:[%s2 + $0x58] sm:$0xff]
      %v1638 = vld [vmem:[%s2 + $0x60] sm:$0xff]
      %v1639 = vld [vmem:[%s2 + $0x68] sm:$0xff]
      %v1640 = vld [vmem:[%s2 + $0x70] sm:$0xff]
      %v1641 = vld [vmem:[%s2 + $0x78] sm:$0xff]
      %v1642 = vld [vmem:[%s2 + $0x80] sm:$0xff]
      %v1643 = vld [vmem:[%s2 + $0x88] sm:$0xff]
      %v1644 = vld [vmem:[%s2 + $0x90] sm:$0xff]
      %v1645 = vld [vmem:[%s2 + $0x98] sm:$0xff]
      %v1646 = vld [vmem:[%s2 + $0xa0] sm:$0xff]
      %v1647 = vld [vmem:[%s2 + $0xa8] sm:$0xff]
      %v1648 = vld [vmem:[%s2 + $0xb0] sm:$0xff]
      %v1649 = vld [vmem:[%s2 + $0xb8] sm:$0xff]
      %v1650 = vld [vmem:[%s2 + $0xc0] sm:$0xff]
      %v1651 = vld [vmem:[%s2 + $0xc8] sm:$0xff]
      %v1652 = vld [vmem:[%s2 + $0xd0] sm:$0xff]
      %v1653 = vld [vmem:[%s2 + $0xd8] sm:$0xff]
      %v1654 = vld [vmem:[%s2 + $0xe0] sm:$0xff]
      %v1655 = vld [vmem:[%s2 + $0xe8] sm:$0xff]
      %v1656 = vld [vmem:[%s2 + $0xf0] sm:$0xff]
      %v1657 = vld [vmem:[%s2 + $0xf8] sm:$0xff]
      %v1658 = vld [vmem:[%s2 + $0x100] sm:$0xff]
      %v1659 = vld [vmem:[%s2 + $0x108] sm:$0xff]
      %v1660 = vld [vmem:[%s2 + $0x110] sm:$0xff]
      %v1661 = vld [vmem:[%s2 + $0x118] sm:$0xff]
      %v1662 = vld [vmem:[%s2 + $0x120] sm:$0xff]
      %v1663 = vld [vmem:[%s2 + $0x128] sm:$0xff]
      %v1664 = vld [vmem:[%s2 + $0x130] sm:$0xff]
      %v1665 = vld [vmem:[%s2 + $0x138] sm:$0xff]
      %v1666 = vld [vmem:[%s2 + $0x140] sm:$0xff]
      %v1667 = vld [vmem:[%s2 + $0x148] sm:$0xff]
      %v1668 = vld [vmem:[%s2 + $0x150] sm:$0xff]
      %v1669 = vld [vmem:[%s2 + $0x158] sm:$0xff]
      %v1670 = vld [vmem:[%s2 + $0x160] sm:$0xff]
      %v1671 = vld [vmem:[%s2 + $0x168] sm:$0xff]
      %v1672 = vld [vmem:[%s2 + $0x170] sm:$0xff]
      %v1673 = vld [vmem:[%s2 + $0x178] sm:$0xff]
      %v1674 = vld [vmem:[%s2 + $0x180] sm:$0xff]
      %v1675 = vld [vmem:[%s2 + $0x188] sm:$0xff]
      %v1676 = vld [vmem:[%s2 + $0x190] sm:$0xff]
      %v1677 = vld [vmem:[%s2 + $0x198] sm:$0xff]
      %v1678 = vld [vmem:[%s2 + $0x1a0] sm:$0xff]
      %v1679 = vld [vmem:[%s2 + $0x1a8] sm:$0xff]
      %v1680 = vld [vmem:[%s2 + $0x1b0] sm:$0xff]
      %v1681 = vld [vmem:[%s2 + $0x1b8] sm:$0xff]
      %v1682 = vld [vmem:[%s2 + $0x1c0] sm:$0xff]
      %v1683 = vld [vmem:[%s2 + $0x1c8] sm:$0xff]
      %v1684 = vld [vmem:[%s2 + $0x1d0] sm:$0xff]
      %v1685 = vld [vmem:[%s2 + $0x1d8] sm:$0xff]
      %v1686 = vld [vmem:[%s2 + $0x1e0] sm:$0xff]
      %v1687 = vld [vmem:[%s2 + $0x1e8] sm:$0xff]
      %v1688 = vld [vmem:[%s2 + $0x1f0] sm:$0xff]
      %v1689 = vld [vmem:[%s2 + $0x1f8] sm:$0xff]
      %v1690 = vld [vmem:[%s2 + $0x200] sm:$0xff]
      %v1691 = vld [vmem:[%s2 + $0x208] sm:$0xff]
      %v1692 = vld [vmem:[%s2 + $0x210] sm:$0xff]
      %v1693 = vld [vmem:[%s2 + $0x218] sm:$0xff]
      %v1694 = vld [vmem:[%s2 + $0x220] sm:$0xff]
      %v1695 = vld [vmem:[%s2 + $0x228] sm:$0xff]
      %v1696 = vld [vmem:[%s2 + $0x230] sm:$0xff]
      %v1697 = vld [vmem:[%s2 + $0x238] sm:$0xff]
      %v1698 = vld [vmem:[%s2 + $0x240] sm:$0xff]
      %v1699 = vld [vmem:[%s2 + $0x248] sm:$0xff]
      %v1700 = vld [vmem:[%s2 + $0x250] sm:$0xff]
      %v1701 = vld [vmem:[%s2 + $0x258] sm:$0xff]
      %v1702 = vld [vmem:[%s2 + $0x260] sm:$0xff]
      %v1703 = vld [vmem:[%s2 + $0x268] sm:$0xff]
      %v1704 = vld [vmem:[%s2 + $0x270] sm:$0xff]
      %v1705 = vld [vmem:[%s2 + $0x278] sm:$0xff]
      %v1706 = vld [vmem:[%s2 + $0x280] sm:$0xff]
      %v1707 = vld [vmem:[%s2 + $0x288] sm:$0xff]
      %v1708 = vld [vmem:[%s2 + $0x290] sm:$0xff]
      %v1709 = vld [vmem:[%s2 + $0x298] sm:$0xff]
      %v1710 = vld [vmem:[%s2 + $0x2a0] sm:$0xff]
      %v1711 = vld [vmem:[%s2 + $0x2a8] sm:$0xff]
      %v1712 = vld [vmem:[%s2 + $0x2b0] sm:$0xff]
      %v1713 = vld [vmem:[%s2 + $0x2b8] sm:$0xff]
      %v1714 = vld [vmem:[%s2 + $0x2c0] sm:$0xff]
      %v1715 = vld [vmem:[%s2 + $0x2c8] sm:$0xff]
      %v1716 = vld [vmem:[%s2 + $0x2d0] sm:$0xff]
      %v1717 = vld [vmem:[%s2 + $0x2d8] sm:$0xff]
      %v1718 = vld [vmem:[%s2 + $0x2e0] sm:$0xff]
      %v1719 = vld [vmem:[%s2 + $0x2e8] sm:$0xff]
      %v1720 = vld [vmem:[%s2 + $0x2f0] sm:$0xff]
      %v1721 = vld [vmem:[%s2 + $0x2f8] sm:$0xff]
      %v1722 = vld [vmem:[%s2 + $0x300] sm:$0xff]
      %v1723 = vld [vmem:[%s2 + $0x308] sm:$0xff]
      %v1724 = vld [vmem:[%s2 + $0x310] sm:$0xff]
      %v1725 = vld [vmem:[%s2 + $0x318] sm:$0xff]
      %v1726 = vld [vmem:[%s2 + $0x320] sm:$0xff]
      %v1727 = vld [vmem:[%s2 + $0x328] sm:$0xff]
      %v1728 = vld [vmem:[%s2 + $0x330] sm:$0xff]
      %v1729 = vld [vmem:[%s2 + $0x338] sm:$0xff]
      %v1730 = vld [vmem:[%s2 + $0x340] sm:$0xff]
      %v1731 = vld [vmem:[%s2 + $0x348] sm:$0xff]
      %v1732 = vld [vmem:[%s2 + $0x350] sm:$0xff]
      %v1733 = vld [vmem:[%s2 + $0x358] sm:$0xff]
      %v1734 = vld [vmem:[%s2 + $0x360] sm:$0xff]
      %v1735 = vld [vmem:[%s2 + $0x368] sm:$0xff]
      %v1736 = vld [vmem:[%s2 + $0x370] sm:$0xff]
      %v1737 = vld [vmem:[%s2 + $0x378] sm:$0xff]
      %v1738 = vld [vmem:[%s2 + $0x380] sm:$0xff]
      %v1739 = vld [vmem:[%s2 + $0x388] sm:$0xff]
      %v1740 = vld [vmem:[%s2 + $0x390] sm:$0xff]
      %v1741 = vld [vmem:[%s2 + $0x398] sm:$0xff]
      %v1742 = vld [vmem:[%s2 + $0x3a0] sm:$0xff]
      %v1743 = vld [vmem:[%s2 + $0x3a8] sm:$0xff]
      %v1744 = vld [vmem:[%s2 + $0x3b0] sm:$0xff]
      %v1745 = vld [vmem:[%s2 + $0x3b8] sm:$0xff]
      %v1746 = vld [vmem:[%s2 + $0x3c0] sm:$0xff]
      %v1747 = vld [vmem:[%s2 + $0x3c8] sm:$0xff]
      %v1748 = vld [vmem:[%s2 + $0x3d0] sm:$0xff]
      %v1749 = vld [vmem:[%s2 + $0x3d8] sm:$0xff]
      %v1750 = vld [vmem:[%s2 + $0x3e0] sm:$0xff]
      %v1751 = vld [vmem:[%s2 + $0x3e8] sm:$0xff]
      %v1752 = vld [vmem:[%s2 + $0x3f0] sm:$0xff]
      %v1753 = vld [vmem:[%s2 + $0x3f8] sm:$0xff]
      %v1754 = vld [vmem:[%s2 + $0x400] sm:$0xff]
      %v1755 = vld [vmem:[%s2 + $0x408] sm:$0xff]
      %v1756 = vld [vmem:[%s2 + $0x410] sm:$0xff]
      %v1757 = vld [vmem:[%s2 + $0x418] sm:$0xff]
      %v1758 = vld [vmem:[%s2 + $0x420] sm:$0xff]
      %v1759 = vld [vmem:[%s2 + $0x428] sm:$0xff]
      %v1760 = vld [vmem:[%s2 + $0x430] sm:$0xff]
      %v1761 = vld [vmem:[%s2 + $0x438] sm:$0xff]
      %v1762 = vld [vmem:[%s2 + $0x440] sm:$0xff]
      %v1763 = vld [vmem:[%s2 + $0x448] sm:$0xff]
      %v1764 = vld [vmem:[%s2 + $0x450] sm:$0xff]
      %v1765 = vld [vmem:[%s2 + $0x458] sm:$0xff]
      %v1766 = vld [vmem:[%s2 + $0x460] sm:$0xff]
      %v1767 = vld [vmem:[%s2 + $0x468] sm:$0xff]
      %v1768 = vld [vmem:[%s2 + $0x470] sm:$0xff]
      %v1769 = vld [vmem:[%s2 + $0x478] sm:$0xff]
      %v1770 = vld [vmem:[%s2 + $0x480] sm:$0xff]
      %v1771 = vld [vmem:[%s2 + $0x488] sm:$0xff]
      %v1772 = vld [vmem:[%s2 + $0x490] sm:$0xff]
      %v1773 = vld [vmem:[%s2 + $0x498] sm:$0xff]
      %v1774 = vld [vmem:[%s2 + $0x4a0] sm:$0xff]
      %v1775 = vld [vmem:[%s2 + $0x4a8] sm:$0xff]
      %v1776 = vld [vmem:[%s2 + $0x4b0] sm:$0xff]
      %v1777 = vld [vmem:[%s2 + $0x4b8] sm:$0xff]
      %v1778 = vld [vmem:[%s2 + $0x4c0] sm:$0xff]
      %v1779 = vld [vmem:[%s2 + $0x4c8] sm:$0xff]
      %v1780 = vld [vmem:[%s2 + $0x4d0] sm:$0xff]
      %v1781 = vld [vmem:[%s2 + $0x4d8] sm:$0xff]
      %v1782 = vld [vmem:[%s2 + $0x4e0] sm:$0xff]
      %v1783 = vld [vmem:[%s2 + $0x4e8] sm:$0xff]
      %v1784 = vld [vmem:[%s2 + $0x4f0] sm:$0xff]
      %v1785 = vld [vmem:[%s2 + $0x4f8] sm:$0xff]
      %v1946 = vunpack.c.l.b16 %v1626
      %v1947 = vunpack.c.h.b16 %v1626
      %v1948 = vunpack.c.l.b16 %v1627
      %v1949 = vunpack.c.h.b16 %v1627
      %v1950 = vunpack.c.l.b16 %v1628
      %v1951 = vunpack.c.h.b16 %v1628
      %v1952 = vunpack.c.l.b16 %v1629
      %v1953 = vunpack.c.h.b16 %v1629
      %v1954 = vunpack.c.l.b16 %v1630
      %v1955 = vunpack.c.h.b16 %v1630
      %v1956 = vunpack.c.l.b16 %v1631
      %v1957 = vunpack.c.h.b16 %v1631
      %v1958 = vunpack.c.l.b16 %v1632
      %v1959 = vunpack.c.h.b16 %v1632
      %v1960 = vunpack.c.l.b16 %v1633
      %v1961 = vunpack.c.h.b16 %v1633
      %v1962 = vunpack.c.l.b16 %v1634
      %v1963 = vunpack.c.h.b16 %v1634
      %v1964 = vunpack.c.l.b16 %v1635
      %v1965 = vunpack.c.h.b16 %v1635
      %v1966 = vunpack.c.l.b16 %v1636
      %v1967 = vunpack.c.h.b16 %v1636
      %v1968 = vunpack.c.l.b16 %v1637
      %v1969 = vunpack.c.h.b16 %v1637
      %v1970 = vunpack.c.l.b16 %v1638
      %v1971 = vunpack.c.h.b16 %v1638
      %v1972 = vunpack.c.l.b16 %v1639
      %v1973 = vunpack.c.h.b16 %v1639
      %v1974 = vunpack.c.l.b16 %v1640
      %v1975 = vunpack.c.h.b16 %v1640
      %v1976 = vunpack.c.l.b16 %v1641
      %v1977 = vunpack.c.h.b16 %v1641
      %v1978 = vunpack.c.l.b16 %v1642
      %v1979 = vunpack.c.h.b16 %v1642
      %v1980 = vunpack.c.l.b16 %v1643
      %v1981 = vunpack.c.h.b16 %v1643
      %v1982 = vunpack.c.l.b16 %v1644
      %v1983 = vunpack.c.h.b16 %v1644
      %v1984 = vunpack.c.l.b16 %v1645
      %v1985 = vunpack.c.h.b16 %v1645
      %v1986 = vunpack.c.l.b16 %v1646
      %v1987 = vunpack.c.h.b16 %v1646
      %v1988 = vunpack.c.l.b16 %v1647
      %v1989 = vunpack.c.h.b16 %v1647
      %v1990 = vunpack.c.l.b16 %v1648
      %v1991 = vunpack.c.h.b16 %v1648
      %v1992 = vunpack.c.l.b16 %v1649
      %v1993 = vunpack.c.h.b16 %v1649
      %v1994 = vunpack.c.l.b16 %v1650
      %v1995 = vunpack.c.h.b16 %v1650
      %v1996 = vunpack.c.l.b16 %v1651
      %v1997 = vunpack.c.h.b16 %v1651
      %v1998 = vunpack.c.l.b16 %v1652
      %v1999 = vunpack.c.h.b16 %v1652
      %v2000 = vunpack.c.l.b16 %v1653
      %v2001 = vunpack.c.h.b16 %v1653
      %v2002 = vunpack.c.l.b16 %v1654
      %v2003 = vunpack.c.h.b16 %v1654
      %v2004 = vunpack.c.l.b16 %v1655
      %v2005 = vunpack.c.h.b16 %v1655
      %v2006 = vunpack.c.l.b16 %v1656
      %v2007 = vunpack.c.h.b16 %v1656
      %v2008 = vunpack.c.l.b16 %v1657
      %v2009 = vunpack.c.h.b16 %v1657
      %v2010 = vunpack.c.l.b16 %v1658
      %v2011 = vunpack.c.h.b16 %v1658
      %v2012 = vunpack.c.l.b16 %v1659
      %v2013 = vunpack.c.h.b16 %v1659
      %v2014 = vunpack.c.l.b16 %v1660
      %v2015 = vunpack.c.h.b16 %v1660
      %v2016 = vunpack.c.l.b16 %v1661
      %v2017 = vunpack.c.h.b16 %v1661
      %v2018 = vunpack.c.l.b16 %v1662
      %v2019 = vunpack.c.h.b16 %v1662
      %v2020 = vunpack.c.l.b16 %v1663
      %v2021 = vunpack.c.h.b16 %v1663
      %v2022 = vunpack.c.l.b16 %v1664
      %v2023 = vunpack.c.h.b16 %v1664
      %v2024 = vunpack.c.l.b16 %v1665
      %v2025 = vunpack.c.h.b16 %v1665
      %v2026 = vunpack.c.l.b16 %v1666
      %v2027 = vunpack.c.h.b16 %v1666
      %v2028 = vunpack.c.l.b16 %v1667
      %v2029 = vunpack.c.h.b16 %v1667
      %v2030 = vunpack.c.l.b16 %v1668
      %v2031 = vunpack.c.h.b16 %v1668
      %v2032 = vunpack.c.l.b16 %v1669
      %v2033 = vunpack.c.h.b16 %v1669
      %v2034 = vunpack.c.l.b16 %v1670
      %v2035 = vunpack.c.h.b16 %v1670
      %v2036 = vunpack.c.l.b16 %v1671
      %v2037 = vunpack.c.h.b16 %v1671
      %v2038 = vunpack.c.l.b16 %v1672
      %v2039 = vunpack.c.h.b16 %v1672
      %v2040 = vunpack.c.l.b16 %v1673
      %v2041 = vunpack.c.h.b16 %v1673
      %v2042 = vunpack.c.l.b16 %v1674
      %v2043 = vunpack.c.h.b16 %v1674
      %v2044 = vunpack.c.l.b16 %v1675
      %v2045 = vunpack.c.h.b16 %v1675
      %v2046 = vunpack.c.l.b16 %v1676
      %v2047 = vunpack.c.h.b16 %v1676
      %v2048 = vunpack.c.l.b16 %v1677
      %v2049 = vunpack.c.h.b16 %v1677
      %v2050 = vunpack.c.l.b16 %v1678
      %v2051 = vunpack.c.h.b16 %v1678
      %v2052 = vunpack.c.l.b16 %v1679
      %v2053 = vunpack.c.h.b16 %v1679
      %v2054 = vunpack.c.l.b16 %v1680
      %v2055 = vunpack.c.h.b16 %v1680
      %v2056 = vunpack.c.l.b16 %v1681
      %v2057 = vunpack.c.h.b16 %v1681
      %v2058 = vunpack.c.l.b16 %v1682
      %v2059 = vunpack.c.h.b16 %v1682
      %v2060 = vunpack.c.l.b16 %v1683
      %v2061 = vunpack.c.h.b16 %v1683
      %v2062 = vunpack.c.l.b16 %v1684
      %v2063 = vunpack.c.h.b16 %v1684
      %v2064 = vunpack.c.l.b16 %v1685
      %v2065 = vunpack.c.h.b16 %v1685
      %v2066 = vunpack.c.l.b16 %v1686
      %v2067 = vunpack.c.h.b16 %v1686
      %v2068 = vunpack.c.l.b16 %v1687
      %v2069 = vunpack.c.h.b16 %v1687
      %v2070 = vunpack.c.l.b16 %v1688
      %v2071 = vunpack.c.h.b16 %v1688
      %v2072 = vunpack.c.l.b16 %v1689
      %v2073 = vunpack.c.h.b16 %v1689
      %v2074 = vunpack.c.l.b16 %v1690
      %v2075 = vunpack.c.h.b16 %v1690
      %v2076 = vunpack.c.l.b16 %v1691
      %v2077 = vunpack.c.h.b16 %v1691
      %v2078 = vunpack.c.l.b16 %v1692
      %v2079 = vunpack.c.h.b16 %v1692
      %v2080 = vunpack.c.l.b16 %v1693
      %v2081 = vunpack.c.h.b16 %v1693
      %v2082 = vunpack.c.l.b16 %v1694
      %v2083 = vunpack.c.h.b16 %v1694
      %v2084 = vunpack.c.l.b16 %v1695
      %v2085 = vunpack.c.h.b16 %v1695
      %v2086 = vunpack.c.l.b16 %v1696
      %v2087 = vunpack.c.h.b16 %v1696
      %v2088 = vunpack.c.l.b16 %v1697
      %v2089 = vunpack.c.h.b16 %v1697
      %v2090 = vunpack.c.l.b16 %v1698
      %v2091 = vunpack.c.h.b16 %v1698
      %v2092 = vunpack.c.l.b16 %v1699
      %v2093 = vunpack.c.h.b16 %v1699
      %v2094 = vunpack.c.l.b16 %v1700
      %v2095 = vunpack.c.h.b16 %v1700
      %v2096 = vunpack.c.l.b16 %v1701
      %v2097 = vunpack.c.h.b16 %v1701
      %v2098 = vunpack.c.l.b16 %v1702
      %v2099 = vunpack.c.h.b16 %v1702
      %v2100 = vunpack.c.l.b16 %v1703
      %v2101 = vunpack.c.h.b16 %v1703
      %v2102 = vunpack.c.l.b16 %v1704
      %v2103 = vunpack.c.h.b16 %v1704
      %v2104 = vunpack.c.l.b16 %v1705
      %v2105 = vunpack.c.h.b16 %v1705
      %v2106 = vunpack.c.l.b16 %v1706
      %v2107 = vunpack.c.h.b16 %v1706
      %v2108 = vunpack.c.l.b16 %v1707
      %v2109 = vunpack.c.h.b16 %v1707
      %v2110 = vunpack.c.l.b16 %v1708
      %v2111 = vunpack.c.h.b16 %v1708
      %v2112 = vunpack.c.l.b16 %v1709
      %v2113 = vunpack.c.h.b16 %v1709
      %v2114 = vunpack.c.l.b16 %v1710
      %v2115 = vunpack.c.h.b16 %v1710
      %v2116 = vunpack.c.l.b16 %v1711
      %v2117 = vunpack.c.h.b16 %v1711
      %v2118 = vunpack.c.l.b16 %v1712
      %v2119 = vunpack.c.h.b16 %v1712
      %v2120 = vunpack.c.l.b16 %v1713
      %v2121 = vunpack.c.h.b16 %v1713
      %v2122 = vunpack.c.l.b16 %v1714
      %v2123 = vunpack.c.h.b16 %v1714
      %v2124 = vunpack.c.l.b16 %v1715
      %v2125 = vunpack.c.h.b16 %v1715
      %v2126 = vunpack.c.l.b16 %v1716
      %v2127 = vunpack.c.h.b16 %v1716
      %v2128 = vunpack.c.l.b16 %v1717
      %v2129 = vunpack.c.h.b16 %v1717
      %v2130 = vunpack.c.l.b16 %v1718
      %v2131 = vunpack.c.h.b16 %v1718
      %v2132 = vunpack.c.l.b16 %v1719
      %v2133 = vunpack.c.h.b16 %v1719
      %v2134 = vunpack.c.l.b16 %v1720
      %v2135 = vunpack.c.h.b16 %v1720
      %v2136 = vunpack.c.l.b16 %v1721
      %v2137 = vunpack.c.h.b16 %v1721
      %v2138 = vunpack.c.l.b16 %v1722
      %v2139 = vunpack.c.h.b16 %v1722
      %v2140 = vunpack.c.l.b16 %v1723
      %v2141 = vunpack.c.h.b16 %v1723
      %v2142 = vunpack.c.l.b16 %v1724
      %v2143 = vunpack.c.h.b16 %v1724
      %v2144 = vunpack.c.l.b16 %v1725
      %v2145 = vunpack.c.h.b16 %v1725
      %v2146 = vunpack.c.l.b16 %v1726
      %v2147 = vunpack.c.h.b16 %v1726
      %v2148 = vunpack.c.l.b16 %v1727
      %v2149 = vunpack.c.h.b16 %v1727
      %v2150 = vunpack.c.l.b16 %v1728
      %v2151 = vunpack.c.h.b16 %v1728
      %v2152 = vunpack.c.l.b16 %v1729
      %v2153 = vunpack.c.h.b16 %v1729
      %v2154 = vunpack.c.l.b16 %v1730
      %v2155 = vunpack.c.h.b16 %v1730
      %v2156 = vunpack.c.l.b16 %v1731
      %v2157 = vunpack.c.h.b16 %v1731
      %v2158 = vunpack.c.l.b16 %v1732
      %v2159 = vunpack.c.h.b16 %v1732
      %v2160 = vunpack.c.l.b16 %v1733
      %v2161 = vunpack.c.h.b16 %v1733
      %v2162 = vunpack.c.l.b16 %v1734
      %v2163 = vunpack.c.h.b16 %v1734
      %v2164 = vunpack.c.l.b16 %v1735
      %v2165 = vunpack.c.h.b16 %v1735
      %v2166 = vunpack.c.l.b16 %v1736
      %v2167 = vunpack.c.h.b16 %v1736
      %v2168 = vunpack.c.l.b16 %v1737
      %v2169 = vunpack.c.h.b16 %v1737
      %v2170 = vunpack.c.l.b16 %v1738
      %v2171 = vunpack.c.h.b16 %v1738
      %v2172 = vunpack.c.l.b16 %v1739
      %v2173 = vunpack.c.h.b16 %v1739
      %v2174 = vunpack.c.l.b16 %v1740
      %v2175 = vunpack.c.h.b16 %v1740
      %v2176 = vunpack.c.l.b16 %v1741
      %v2177 = vunpack.c.h.b16 %v1741
      %v2178 = vunpack.c.l.b16 %v1742
      %v2179 = vunpack.c.h.b16 %v1742
      %v2180 = vunpack.c.l.b16 %v1743
      %v2181 = vunpack.c.h.b16 %v1743
      %v2182 = vunpack.c.l.b16 %v1744
      %v2183 = vunpack.c.h.b16 %v1744
      %v2184 = vunpack.c.l.b16 %v1745
      %v2185 = vunpack.c.h.b16 %v1745
      %v2186 = vunpack.c.l.b16 %v1746
      %v2187 = vunpack.c.h.b16 %v1746
      %v2188 = vunpack.c.l.b16 %v1747
      %v2189 = vunpack.c.h.b16 %v1747
      %v2190 = vunpack.c.l.b16 %v1748
      %v2191 = vunpack.c.h.b16 %v1748
      %v2192 = vunpack.c.l.b16 %v1749
      %v2193 = vunpack.c.h.b16 %v1749
      %v2194 = vunpack.c.l.b16 %v1750
      %v2195 = vunpack.c.h.b16 %v1750
      %v2196 = vunpack.c.l.b16 %v1751
      %v2197 = vunpack.c.h.b16 %v1751
      %v2198 = vunpack.c.l.b16 %v1752
      %v2199 = vunpack.c.h.b16 %v1752
      %v2200 = vunpack.c.l.b16 %v1753
      %v2201 = vunpack.c.h.b16 %v1753
      %v2202 = vunpack.c.l.b16 %v1754
      %v2203 = vunpack.c.h.b16 %v1754
      %v2204 = vunpack.c.l.b16 %v1755
      %v2205 = vunpack.c.h.b16 %v1755
      %v2206 = vunpack.c.l.b16 %v1756
      %v2207 = vunpack.c.h.b16 %v1756
      %v2208 = vunpack.c.l.b16 %v1757
      %v2209 = vunpack.c.h.b16 %v1757
      %v2210 = vunpack.c.l.b16 %v1758
      %v2211 = vunpack.c.h.b16 %v1758
      %v2212 = vunpack.c.l.b16 %v1759
      %v2213 = vunpack.c.h.b16 %v1759
      %v2214 = vunpack.c.l.b16 %v1760
      %v2215 = vunpack.c.h.b16 %v1760
      %v2216 = vunpack.c.l.b16 %v1761
      %v2217 = vunpack.c.h.b16 %v1761
      %v2218 = vunpack.c.l.b16 %v1762
      %v2219 = vunpack.c.h.b16 %v1762
      %v2220 = vunpack.c.l.b16 %v1763
      %v2221 = vunpack.c.h.b16 %v1763
      %v2222 = vunpack.c.l.b16 %v1764
      %v2223 = vunpack.c.h.b16 %v1764
      %v2224 = vunpack.c.l.b16 %v1765
      %v2225 = vunpack.c.h.b16 %v1765
      %v2226 = vunpack.c.l.b16 %v1766
      %v2227 = vunpack.c.h.b16 %v1766
      %v2228 = vunpack.c.l.b16 %v1767
      %v2229 = vunpack.c.h.b16 %v1767
      %v2230 = vunpack.c.l.b16 %v1768
      %v2231 = vunpack.c.h.b16 %v1768
      %v2232 = vunpack.c.l.b16 %v1769
      %v2233 = vunpack.c.h.b16 %v1769
      %v2234 = vunpack.c.l.b16 %v1770
      %v2235 = vunpack.c.h.b16 %v1770
      %v2236 = vunpack.c.l.b16 %v1771
      %v2237 = vunpack.c.h.b16 %v1771
      %v2238 = vunpack.c.l.b16 %v1772
      %v2239 = vunpack.c.h.b16 %v1772
      %v2240 = vunpack.c.l.b16 %v1773
      %v2241 = vunpack.c.h.b16 %v1773
      %v2242 = vunpack.c.l.b16 %v1774
      %v2243 = vunpack.c.h.b16 %v1774
      %v2244 = vunpack.c.l.b16 %v1775
      %v2245 = vunpack.c.h.b16 %v1775
      %v2246 = vunpack.c.l.b16 %v1776
      %v2247 = vunpack.c.h.b16 %v1776
      %v2248 = vunpack.c.l.b16 %v1777
      %v2249 = vunpack.c.h.b16 %v1777
      %v2250 = vunpack.c.l.b16 %v1778
      %v2251 = vunpack.c.h.b16 %v1778
      %v2252 = vunpack.c.l.b16 %v1779
      %v2253 = vunpack.c.h.b16 %v1779
      %v2254 = vunpack.c.l.b16 %v1780
      %v2255 = vunpack.c.h.b16 %v1780
      %v2256 = vunpack.c.l.b16 %v1781
      %v2257 = vunpack.c.h.b16 %v1781
      %v2258 = vunpack.c.l.b16 %v1782
      %v2259 = vunpack.c.h.b16 %v1782
      %v2260 = vunpack.c.l.b16 %v1783
      %v2261 = vunpack.c.h.b16 %v1783
      %v2262 = vunpack.c.l.b16 %v1784
      %v2263 = vunpack.c.h.b16 %v1784
      %v2264 = vunpack.c.l.b16 %v1785
      %v2265 = vunpack.c.h.b16 %v1785
      %v2266 = vpack.c.b16 %v1948, %v1946
      %v2267 = vpack.c.b16 %v1949, %v1947
      %v2268 = vpack.c.b16 %v1952, %v1950
      %v2269 = vpack.c.b16 %v1953, %v1951
      %v2270 = vpack.c.b16 %v1956, %v1954
      %v2271 = vpack.c.b16 %v1957, %v1955
      %v2272 = vpack.c.b16 %v1960, %v1958
      %v2273 = vpack.c.b16 %v1961, %v1959
      %v2274 = vpack.c.b16 %v1964, %v1962
      %v2275 = vpack.c.b16 %v1965, %v1963
      %v2276 = vpack.c.b16 %v1968, %v1966
      %v2277 = vpack.c.b16 %v1969, %v1967
      %v2278 = vpack.c.b16 %v1972, %v1970
      %v2279 = vpack.c.b16 %v1973, %v1971
      %v2280 = vpack.c.b16 %v1976, %v1974
      %v2281 = vpack.c.b16 %v1977, %v1975
      %v2282 = vpack.c.b16 %v1980, %v1978
      %v2283 = vpack.c.b16 %v1981, %v1979
      %v2284 = vpack.c.b16 %v1984, %v1982
      %v2285 = vpack.c.b16 %v1985, %v1983
      %v2286 = vpack.c.b16 %v1988, %v1986
      %v2287 = vpack.c.b16 %v1989, %v1987
      %v2288 = vpack.c.b16 %v1992, %v1990
      %v2289 = vpack.c.b16 %v1993, %v1991
      %v2290 = vpack.c.b16 %v1996, %v1994
      %v2291 = vpack.c.b16 %v1997, %v1995
      %v2292 = vpack.c.b16 %v2000, %v1998
      %v2293 = vpack.c.b16 %v2001, %v1999
      %v2294 = vpack.c.b16 %v2004, %v2002
      %v2295 = vpack.c.b16 %v2005, %v2003
      %v2296 = vpack.c.b16 %v2008, %v2006
      %v2297 = vpack.c.b16 %v2009, %v2007
      %v2298 = vpack.c.b16 %v2012, %v2010
      %v2299 = vpack.c.b16 %v2013, %v2011
      %v2300 = vpack.c.b16 %v2016, %v2014
      %v2301 = vpack.c.b16 %v2017, %v2015
      %v2302 = vpack.c.b16 %v2020, %v2018
      %v2303 = vpack.c.b16 %v2021, %v2019
      %v2304 = vpack.c.b16 %v2024, %v2022
      %v2305 = vpack.c.b16 %v2025, %v2023
      %v2306 = vpack.c.b16 %v2028, %v2026
      %v2307 = vpack.c.b16 %v2029, %v2027
      %v2308 = vpack.c.b16 %v2032, %v2030
      %v2309 = vpack.c.b16 %v2033, %v2031
      %v2310 = vpack.c.b16 %v2036, %v2034
      %v2311 = vpack.c.b16 %v2037, %v2035
      %v2312 = vpack.c.b16 %v2040, %v2038
      %v2313 = vpack.c.b16 %v2041, %v2039
      %v2314 = vpack.c.b16 %v2044, %v2042
      %v2315 = vpack.c.b16 %v2045, %v2043
      %v2316 = vpack.c.b16 %v2048, %v2046
      %v2317 = vpack.c.b16 %v2049, %v2047
      %v2318 = vpack.c.b16 %v2052, %v2050
      %v2319 = vpack.c.b16 %v2053, %v2051
      %v2320 = vpack.c.b16 %v2056, %v2054
      %v2321 = vpack.c.b16 %v2057, %v2055
      %v2322 = vpack.c.b16 %v2060, %v2058
      %v2323 = vpack.c.b16 %v2061, %v2059
      %v2324 = vpack.c.b16 %v2064, %v2062
      %v2325 = vpack.c.b16 %v2065, %v2063
      %v2326 = vpack.c.b16 %v2068, %v2066
      %v2327 = vpack.c.b16 %v2069, %v2067
      %v2328 = vpack.c.b16 %v2072, %v2070
      %v2329 = vpack.c.b16 %v2073, %v2071
      %v2330 = vpack.c.b16 %v2076, %v2074
      %v2331 = vpack.c.b16 %v2077, %v2075
      %v2332 = vpack.c.b16 %v2080, %v2078
      %v2333 = vpack.c.b16 %v2081, %v2079
      %v2334 = vpack.c.b16 %v2084, %v2082
      %v2335 = vpack.c.b16 %v2085, %v2083
      %v2336 = vpack.c.b16 %v2088, %v2086
      %v2337 = vpack.c.b16 %v2089, %v2087
      %v2338 = vpack.c.b16 %v2092, %v2090
      %v2339 = vpack.c.b16 %v2093, %v2091
      %v2340 = vpack.c.b16 %v2096, %v2094
      %v2341 = vpack.c.b16 %v2097, %v2095
      %v2342 = vpack.c.b16 %v2100, %v2098
      %v2343 = vpack.c.b16 %v2101, %v2099
      %v2344 = vpack.c.b16 %v2104, %v2102
      %v2345 = vpack.c.b16 %v2105, %v2103
      %v2346 = vpack.c.b16 %v2108, %v2106
      %v2347 = vpack.c.b16 %v2109, %v2107
      %v2348 = vpack.c.b16 %v2112, %v2110
      %v2349 = vpack.c.b16 %v2113, %v2111
      %v2350 = vpack.c.b16 %v2116, %v2114
      %v2351 = vpack.c.b16 %v2117, %v2115
      %v2352 = vpack.c.b16 %v2120, %v2118
      %v2353 = vpack.c.b16 %v2121, %v2119
      %v2354 = vpack.c.b16 %v2124, %v2122
      %v2355 = vpack.c.b16 %v2125, %v2123
      %v2356 = vpack.c.b16 %v2128, %v2126
      %v2357 = vpack.c.b16 %v2129, %v2127
      %v2358 = vpack.c.b16 %v2132, %v2130
      %v2359 = vpack.c.b16 %v2133, %v2131
      %v2360 = vpack.c.b16 %v2136, %v2134
      %v2361 = vpack.c.b16 %v2137, %v2135
      %v2362 = vpack.c.b16 %v2140, %v2138
      %v2363 = vpack.c.b16 %v2141, %v2139
      %v2364 = vpack.c.b16 %v2144, %v2142
      %v2365 = vpack.c.b16 %v2145, %v2143
      %v2366 = vpack.c.b16 %v2148, %v2146
      %v2367 = vpack.c.b16 %v2149, %v2147
      %v2368 = vpack.c.b16 %v2152, %v2150
      %v2369 = vpack.c.b16 %v2153, %v2151
      %v2370 = vpack.c.b16 %v2156, %v2154
      %v2371 = vpack.c.b16 %v2157, %v2155
      %v2372 = vpack.c.b16 %v2160, %v2158
      %v2373 = vpack.c.b16 %v2161, %v2159
      %v2374 = vpack.c.b16 %v2164, %v2162
      %v2375 = vpack.c.b16 %v2165, %v2163
      %v2376 = vpack.c.b16 %v2168, %v2166
      %v2377 = vpack.c.b16 %v2169, %v2167
      %v2378 = vpack.c.b16 %v2172, %v2170
      %v2379 = vpack.c.b16 %v2173, %v2171
      %v2380 = vpack.c.b16 %v2176, %v2174
      %v2381 = vpack.c.b16 %v2177, %v2175
      %v2382 = vpack.c.b16 %v2180, %v2178
      %v2383 = vpack.c.b16 %v2181, %v2179
      %v2384 = vpack.c.b16 %v2184, %v2182
      %v2385 = vpack.c.b16 %v2185, %v2183
      %v2386 = vpack.c.b16 %v2188, %v2186
      %v2387 = vpack.c.b16 %v2189, %v2187
      %v2388 = vpack.c.b16 %v2192, %v2190
      %v2389 = vpack.c.b16 %v2193, %v2191
      %v2390 = vpack.c.b16 %v2196, %v2194
      %v2391 = vpack.c.b16 %v2197, %v2195
      %v2392 = vpack.c.b16 %v2200, %v2198
      %v2393 = vpack.c.b16 %v2201, %v2199
      %v2394 = vpack.c.b16 %v2204, %v2202
      %v2395 = vpack.c.b16 %v2205, %v2203
      %v2396 = vpack.c.b16 %v2208, %v2206
      %v2397 = vpack.c.b16 %v2209, %v2207
      %v2398 = vpack.c.b16 %v2212, %v2210
      %v2399 = vpack.c.b16 %v2213, %v2211
      %v2400 = vpack.c.b16 %v2216, %v2214
      %v2401 = vpack.c.b16 %v2217, %v2215
      %v2402 = vpack.c.b16 %v2220, %v2218
      %v2403 = vpack.c.b16 %v2221, %v2219
      %v2404 = vpack.c.b16 %v2224, %v2222
      %v2405 = vpack.c.b16 %v2225, %v2223
      %v2406 = vpack.c.b16 %v2228, %v2226
      %v2407 = vpack.c.b16 %v2229, %v2227
      %v2408 = vpack.c.b16 %v2232, %v2230
      %v2409 = vpack.c.b16 %v2233, %v2231
      %v2410 = vpack.c.b16 %v2236, %v2234
      %v2411 = vpack.c.b16 %v2237, %v2235
      %v2412 = vpack.c.b16 %v2240, %v2238
      %v2413 = vpack.c.b16 %v2241, %v2239
      %v2414 = vpack.c.b16 %v2244, %v2242
      %v2415 = vpack.c.b16 %v2245, %v2243
      %v2416 = vpack.c.b16 %v2248, %v2246
      %v2417 = vpack.c.b16 %v2249, %v2247
      %v2418 = vpack.c.b16 %v2252, %v2250
      %v2419 = vpack.c.b16 %v2253, %v2251
      %v2420 = vpack.c.b16 %v2256, %v2254
      %v2421 = vpack.c.b16 %v2257, %v2255
      %v2422 = vpack.c.b16 %v2260, %v2258
      %v2423 = vpack.c.b16 %v2261, %v2259
      %v2424 = vpack.c.b16 %v2264, %v2262
      %v2425 = vpack.c.b16 %v2265, %v2263
      %2586 = vmatprep.subr.bf16.mxu0 %v2267
      %2587 = vmatpush1.bf16.msra.mxu0 %v2266
      %2588 = vmatprep.subr.bf16.mxu0 %v2269
      %2589 = vmatpush1.bf16.msra.mxu0 %v2268
      %2590 = vmatprep.subr.bf16.mxu0 %v2271
      %2591 = vmatpush1.bf16.msra.mxu0 %v2270
      %2592 = vmatprep.subr.bf16.mxu0 %v2273
      %2593 = vmatpush1.bf16.msra.mxu0 %v2272
      %2594 = vmatprep.subr.bf16.mxu0 %v2275
      %2595 = vmatpush1.bf16.msra.mxu0 %v2274
      %2596 = vmatprep.subr.bf16.mxu0 %v2277
      %2597 = vmatpush1.bf16.msra.mxu0 %v2276
      %2598 = vmatprep.subr.bf16.mxu0 %v2279
      %2599 = vmatpush1.bf16.msra.mxu0 %v2278
      %2600 = vmatprep.subr.bf16.mxu0 %v2281
      %2601 = vmatpush1.bf16.msra.mxu0 %v2280
      %2602 = vmatprep.subr.bf16.mxu0 %v2283
      %2603 = vmatpush1.bf16.msra.mxu0 %v2282
      %2604 = vmatprep.subr.bf16.mxu0 %v2285
      %2605 = vmatpush1.bf16.msra.mxu0 %v2284
      %2606 = vmatprep.subr.bf16.mxu0 %v2287
      %2607 = vmatpush1.bf16.msra.mxu0 %v2286
      %2608 = vmatprep.subr.bf16.mxu0 %v2289
      %2609 = vmatpush1.bf16.msra.mxu0 %v2288
      %2610 = vmatprep.subr.bf16.mxu0 %v2291
      %2611 = vmatpush1.bf16.msra.mxu0 %v2290
      %2612 = vmatprep.subr.bf16.mxu0 %v2293
      %2613 = vmatpush1.bf16.msra.mxu0 %v2292
      %2614 = vmatprep.subr.bf16.mxu0 %v2295
      %2615 = vmatpush1.bf16.msra.mxu0 %v2294
      %2616 = vmatprep.subr.bf16.mxu0 %v2297
      %2617 = vmatpush1.bf16.msra.mxu0 %v2296
      %2618 = vmatprep.mubr.bf16.mxu0 %v1571
      %2619 = vmatmul.mubr.bf16.gmra.mrb[0].mxu0 %v1570
      %v2620 = vpop.f32.mrb[0].mxu0
      %v2621 = vadd.f32 0.0, %v2620
      %v2622 = vpop.f32.mrb[0].mxu0
      %v2623 = vadd.f32 0.0, %v2622
      %v2624 = vpop.f32.mrb[0].mxu0
      %v2625 = vadd.f32 0.0, %v2624
      %v2626 = vpop.f32.mrb[0].mxu0
      %v2627 = vadd.f32 0.0, %v2626
      %2628 = vmatprep.mubr.bf16.mxu0 %v1573
      %2629 = vmatmul.mubr.bf16.gmra.mrb[0].mxu0 %v1572
      %v2630 = vpop.f32.mrb[0].mxu0
      %v2631 = vadd.f32 0.0, %v2630
      %v2632 = vpop.f32.mrb[0].mxu0
      %v2633 = vadd.f32 0.0, %v2632
      %v2634 = vpop.f32.mrb[0].mxu0
      %v2635 = vpop.f32.mrb[0].mxu0
      %2636 = vdwg.mxu0
      %2637 = vmatprep.subr.bf16.mxu0 %v2299
      %2638 = vmatpush1.bf16.msra.mxu0 %v2298
      %2639 = vmatprep.subr.bf16.mxu0 %v2301
      %2640 = vmatpush1.bf16.msra.mxu0 %v2300
      %2641 = vmatprep.subr.bf16.mxu0 %v2303
      %2642 = vmatpush1.bf16.msra.mxu0 %v2302
      %2643 = vmatprep.subr.bf16.mxu0 %v2305
      %2644 = vmatpush1.bf16.msra.mxu0 %v2304
      %2645 = vmatprep.subr.bf16.mxu0 %v2307
      %2646 = vmatpush1.bf16.msra.mxu0 %v2306
      %2647 = vmatprep.subr.bf16.mxu0 %v2309
      %2648 = vmatpush1.bf16.msra.mxu0 %v2308
      %2649 = vmatprep.subr.bf16.mxu0 %v2311
      %2650 = vmatpush1.bf16.msra.mxu0 %v2310
      %2651 = vmatprep.subr.bf16.mxu0 %v2313
      %2652 = vmatpush1.bf16.msra.mxu0 %v2312
      %2653 = vmatprep.subr.bf16.mxu0 %v2315
      %2654 = vmatpush1.bf16.msra.mxu0 %v2314
      %2655 = vmatprep.subr.bf16.mxu0 %v2317
      %2656 = vmatpush1.bf16.msra.mxu0 %v2316
      %2657 = vmatprep.subr.bf16.mxu0 %v2319
      %2658 = vmatpush1.bf16.msra.mxu0 %v2318
      %2659 = vmatprep.subr.bf16.mxu0 %v2321
      %2660 = vmatpush1.bf16.msra.mxu0 %v2320
      %2661 = vmatprep.subr.bf16.mxu0 %v2323
      %2662 = vmatpush1.bf16.msra.mxu0 %v2322
      %2663 = vmatprep.subr.bf16.mxu0 %v2325
      %2664 = vmatpush1.bf16.msra.mxu0 %v2324
      %2665 = vmatprep.subr.bf16.mxu0 %v2327
      %2666 = vmatpush1.bf16.msra.mxu0 %v2326
      %2667 = vmatprep.subr.bf16.mxu0 %v2329
      %2668 = vmatpush1.bf16.msra.mxu0 %v2328
      %2669 = vmatprep.mubr.bf16.mxu0 %v1587
      %2670 = vmatmul.mubr.bf16.gmra.mrb[0].mxu0 %v1586
      %v2671 = vpop.f32.mrb[0].mxu0
      %v2672 = vadd.f32 %v2621, %v2671
      %v2673 = vpop.f32.mrb[0].mxu0
      %v2674 = vadd.f32 %v2623, %v2673
      %v2675 = vpop.f32.mrb[0].mxu0
      %v2676 = vadd.f32 %v2625, %v2675
      %v2677 = vpop.f32.mrb[0].mxu0
      %v2678 = vadd.f32 %v2627, %v2677
      %2679 = vmatprep.mubr.bf16.mxu0 %v1589
      %2680 = vmatmul.mubr.bf16.gmra.mrb[0].mxu0 %v1588
      %v2681 = vpop.f32.mrb[0].mxu0
      %v2682 = vadd.f32 %v2631, %v2681
      %v2683 = vpop.f32.mrb[0].mxu0
      %v2684 = vadd.f32 %v2633, %v2683
      %v2685 = vpop.f32.mrb[0].mxu0
      %v2686 = vpop.f32.mrb[0].mxu0
      %2687 = vdwg.mxu0
      %2688 = vmatprep.subr.bf16.mxu0 %v2331
      %2689 = vmatpush1.bf16.msra.mxu0 %v2330
      %2690 = vmatprep.subr.bf16.mxu0 %v2333
      %2691 = vmatpush1.bf16.msra.mxu0 %v2332
      %2692 = vmatprep.subr.bf16.mxu0 %v2335
      %2693 = vmatpush1.bf16.msra.mxu0 %v2334
      %2694 = vmatprep.subr.bf16.mxu0 %v2337
      %2695 = vmatpush1.bf16.msra.mxu0 %v2336
      %2696 = vmatprep.subr.bf16.mxu0 %v2339
      %2697 = vmatpush1.bf16.msra.mxu0 %v2338
      %2698 = vmatprep.subr.bf16.mxu0 %v2341
      %2699 = vmatpush1.bf16.msra.mxu0 %v2340
      %2700 = vmatprep.subr.bf16.mxu0 %v2343
      %2701 = vmatpush1.bf16.msra.mxu0 %v2342
      %2702 = vmatprep.subr.bf16.mxu0 %v2345
      %2703 = vmatpush1.bf16.msra.mxu0 %v2344
      %2704 = vmatprep.subr.bf16.mxu0 %v2347
      %2705 = vmatpush1.bf16.msra.mxu0 %v2346
      %2706 = vmatprep.subr.bf16.mxu0 %v2349
      %2707 = vmatpush1.bf16.msra.mxu0 %v2348
      %2708 = vmatprep.subr.bf16.mxu0 %v2351
      %2709 = vmatpush1.bf16.msra.mxu0 %v2350
      %2710 = vmatprep.subr.bf16.mxu0 %v2353
      %2711 = vmatpush1.bf16.msra.mxu0 %v2352
      %2712 = vmatprep.subr.bf16.mxu0 %v2355
      %2713 = vmatpush1.bf16.msra.mxu0 %v2354
      %2714 = vmatprep.subr.bf16.mxu0 %v2357
      %2715 = vmatpush1.bf16.msra.mxu0 %v2356
      %2716 = vmatprep.subr.bf16.mxu0 %v2359
      %2717 = vmatpush1.bf16.msra.mxu0 %v2358
      %2718 = vmatprep.subr.bf16.mxu0 %v2361
      %2719 = vmatpush1.bf16.msra.mxu0 %v2360
      %2720 = vmatprep.mubr.bf16.mxu0 %v1591
      %2721 = vmatmul.mubr.bf16.gmra.mrb[0].mxu0 %v1590
      %v2722 = vpop.f32.mrb[0].mxu0
      %v2723 = vadd.f32 %v2672, %v2722
      %v2724 = vpop.f32.mrb[0].mxu0
      %v2725 = vadd.f32 %v2674, %v2724
      %v2726 = vpop.f32.mrb[0].mxu0
      %v2727 = vadd.f32 %v2676, %v2726
      %v2728 = vpop.f32.mrb[0].mxu0
      %v2729 = vadd.f32 %v2678, %v2728
      %2730 = vmatprep.mubr.bf16.mxu0 %v1593
      %2731 = vmatmul.mubr.bf16.gmra.mrb[0].mxu0 %v1592
      %v2732 = vpop.f32.mrb[0].mxu0
      %v2733 = vadd.f32 %v2682, %v2732
      %v2734 = vpop.f32.mrb[0].mxu0
      %v2735 = vadd.f32 %v2684, %v2734
      %v2736 = vpop.f32.mrb[0].mxu0
      %v2737 = vpop.f32.mrb[0].mxu0
      %2738 = vdwg.mxu0
      %2739 = vmatprep.subr.bf16.mxu0 %v2363
      %2740 = vmatpush1.bf16.msra.mxu0 %v2362
      %2741 = vmatprep.subr.bf16.mxu0 %v2365
      %2742 = vmatpush1.bf16.msra.mxu0 %v2364
      %2743 = vmatprep.subr.bf16.mxu0 %v2367
      %2744 = vmatpush1.bf16.msra.mxu0 %v2366
      %2745 = vmatprep.subr.bf16.mxu0 %v2369
      %2746 = vmatpush1.bf16.msra.mxu0 %v2368
      %2747 = vmatprep.subr.bf16.mxu0 %v2371
      %2748 = vmatpush1.bf16.msra.mxu0 %v2370
      %2749 = vmatprep.subr.bf16.mxu0 %v2373
      %2750 = vmatpush1.bf16.msra.mxu0 %v2372
      %2751 = vmatprep.subr.bf16.mxu0 %v2375
      %2752 = vmatpush1.bf16.msra.mxu0 %v2374
      %2753 = vmatprep.subr.bf16.mxu0 %v2377
      %2754 = vmatpush1.bf16.msra.mxu0 %v2376
      %2755 = vmatprep.subr.bf16.mxu0 %v2379
      %2756 = vmatpush1.bf16.msra.mxu0 %v2378
      %2757 = vmatprep.subr.bf16.mxu0 %v2381
      %2758 = vmatpush1.bf16.msra.mxu0 %v2380
      %2759 = vmatprep.subr.bf16.mxu0 %v2383
      %2760 = vmatpush1.bf16.msra.mxu0 %v2382
      %2761 = vmatprep.subr.bf16.mxu0 %v2385
      %2762 = vmatpush1.bf16.msra.mxu0 %v2384
      %2763 = vmatprep.subr.bf16.mxu0 %v2387
      %2764 = vmatpush1.bf16.msra.mxu0 %v2386
      %2765 = vmatprep.subr.bf16.mxu0 %v2389
      %2766 = vmatpush1.bf16.msra.mxu0 %v2388
      %2767 = vmatprep.subr.bf16.mxu0 %v2391
      %2768 = vmatpush1.bf16.msra.mxu0 %v2390
      %2769 = vmatprep.subr.bf16.mxu0 %v2393
      %2770 = vmatpush1.bf16.msra.mxu0 %v2392
      %2771 = vmatprep.mubr.bf16.mxu0 %v1607
      %2772 = vmatmul.mubr.bf16.gmra.mrb[0].mxu0 %v1606
      %v2773 = vpop.f32.mrb[0].mxu0
      %v2774 = vadd.f32 %v2723, %v2773
      %v2775 = vpop.f32.mrb[0].mxu0
      %v2776 = vadd.f32 %v2725, %v2775
      %v2777 = vpop.f32.mrb[0].mxu0
      %v2778 = vadd.f32 %v2727, %v2777
      %v2779 = vpop.f32.mrb[0].mxu0
      %v2780 = vadd.f32 %v2729, %v2779
      %2781 = vmatprep.mubr.bf16.mxu0 %v1609
      %2782 = vmatmul.mubr.bf16.gmra.mrb[0].mxu0 %v1608
      %v2783 = vpop.f32.mrb[0].mxu0
      %v2784 = vadd.f32 %v2733, %v2783
      %v2785 = vpop.f32.mrb[0].mxu0
      %v2786 = vadd.f32 %v2735, %v2785
      %v2787 = vpop.f32.mrb[0].mxu0
      %v2788 = vpop.f32.mrb[0].mxu0
      %2789 = vdwg.mxu0
      %2790 = vmatprep.subr.bf16.mxu0 %v2395
      %2791 = vmatpush1.bf16.msra.mxu0 %v2394
      %2792 = vmatprep.subr.bf16.mxu0 %v2397
      %2793 = vmatpush1.bf16.msra.mxu0 %v2396
      %2794 = vmatprep.subr.bf16.mxu0 %v2399
      %2795 = vmatpush1.bf16.msra.mxu0 %v2398
      %2796 = vmatprep.subr.bf16.mxu0 %v2401
      %2797 = vmatpush1.bf16.msra.mxu0 %v2400
      %2798 = vmatprep.subr.bf16.mxu0 %v2403
      %2799 = vmatpush1.bf16.msra.mxu0 %v2402
      %2800 = vmatprep.subr.bf16.mxu0 %v2405
      %2801 = vmatpush1.bf16.msra.mxu0 %v2404
      %2802 = vmatprep.subr.bf16.mxu0 %v2407
      %2803 = vmatpush1.bf16.msra.mxu0 %v2406
      %2804 = vmatprep.subr.bf16.mxu0 %v2409
      %2805 = vmatpush1.bf16.msra.mxu0 %v2408
      %2806 = vmatprep.subr.bf16.mxu0 %v2411
      %2807 = vmatpush1.bf16.msra.mxu0 %v2410
      %2808 = vmatprep.subr.bf16.mxu0 %v2413
      %2809 = vmatpush1.bf16.msra.mxu0 %v2412
      %2810 = vmatprep.subr.bf16.mxu0 %v2415
      %2811 = vmatpush1.bf16.msra.mxu0 %v2414
      %2812 = vmatprep.subr.bf16.mxu0 %v2417
      %2813 = vmatpush1.bf16.msra.mxu0 %v2416
      %2814 = vmatprep.subr.bf16.mxu0 %v2419
      %2815 = vmatpush1.bf16.msra.mxu0 %v2418
      %2816 = vmatprep.subr.bf16.mxu0 %v2421
      %2817 = vmatpush1.bf16.msra.mxu0 %v2420
      %2818 = vmatprep.subr.bf16.mxu0 %v2423
      %2819 = vmatpush1.bf16.msra.mxu0 %v2422
      %2820 = vmatprep.subr.bf16.mxu0 %v2425
      %2821 = vmatpush1.bf16.msra.mxu0 %v2424
      %2822 = vmatprep.mubr.bf16.mxu0 %v1623
      %2823 = vmatmul.mubr.bf16.gmra.mrb[0].mxu0 %v1622
      %v2824 = vpop.f32.mrb[0].mxu0
      %v2825 = vadd.f32 %v2774, %v2824
      %v2826 = vpop.f32.mrb[0].mxu0
      %v2827 = vadd.f32 %v2776, %v2826
      %v2828 = vpop.f32.mrb[0].mxu0
      %v2829 = vadd.f32 %v2778, %v2828
      %v2830 = vpop.f32.mrb[0].mxu0
      %v2831 = vadd.f32 %v2780, %v2830
      %2832 = vmatprep.mubr.bf16.mxu0 %v1625
      %2833 = vmatmul.mubr.bf16.gmra.mrb[0].mxu0 %v1624
      %v2834 = vpop.f32.mrb[0].mxu0
      %v2835 = vadd.f32 %v2784, %v2834
      %v2836 = vpop.f32.mrb[0].mxu0
      %v2837 = vadd.f32 %v2786, %v2836
      %v2838 = vpop.f32.mrb[0].mxu0
      %v2839 = vpop.f32.mrb[0].mxu0
      %2840 = vdwg.mxu0
      %v2841 = vsel %vm256, %v2825, 0.0
      %v2842 = vsel %vm256, %v2827, 0.0
      %v2843 = vsel %vm257, %v2829, 0.0
      %v2844 = vsel %vm257, %v2831, 0.0
      %v2845 = vsel %vm258, %v2835, 0.0
      %v2846 = vsel %vm258, %v2837, 0.0
      %v2847 = vpack.c.bf16 %v2843, %v2841
      %v2848 = vpack.c.bf16 %v2844, %v2842
      %v2849 = vpack.c.bf16 %v2845, %v2845
      %v2850 = vpack.c.bf16 %v2846, %v2846
      %v2851 = vrot.slane %v2841, 1
      %v2852 = vrot.slane %v2842, 1
      %v2853 = vrot.slane %v2843, 1
      %v2854 = vrot.slane %v2844, 1
      %v2855 = vrot.slane %v2845, 1
      %v2856 = vrot.slane %v2846, 1
      %v2857 = vsel %vm309, %v2853, %v2855
      %v2858 = vsel %vm309, %v2854, %v2856
      %v2859 = vsel %vm309, %v2851, %v2853
      %v2860 = vsel %vm309, %v2852, %v2854
      %v2861 = vsel %vm309, %v2855, %v2851
      %v2862 = vsel %vm309, %v2856, %v2852
      %v2863 = vpack.c.bf16 %v2857, %v2859
      %v2864 = vpack.c.bf16 %v2858, %v2860
      %v2865 = vpack.c.bf16 %v2861, %v2861
      %v2866 = vpack.c.bf16 %v2862, %v2862
      %v2867 = vrot.slane %v2841, 2
      %v2868 = vrot.slane %v2842, 2
      %v2869 = vrot.slane %v2843, 2
      %v2870 = vrot.slane %v2844, 2
      %v2871 = vrot.slane %v2845, 2
      %v2872 = vrot.slane %v2846, 2
      %v2873 = vsel %vm326, %v2869, %v2871
      %v2874 = vsel %vm326, %v2870, %v2872
      %v2875 = vsel %vm326, %v2867, %v2869
      %v2876 = vsel %vm326, %v2868, %v2870
      %v2877 = vsel %vm326, %v2871, %v2867
      %v2878 = vsel %vm326, %v2872, %v2868
      %v2879 = vpack.c.bf16 %v2873, %v2875
      %v2880 = vpack.c.bf16 %v2874, %v2876
      %v2881 = vpack.c.bf16 %v2877, %v2877
      %v2882 = vpack.c.bf16 %v2878, %v2878
      %v2883 = vrot.slane %v2841, 3
      %v2884 = vrot.slane %v2842, 3
      %v2885 = vrot.slane %v2843, 3
      %v2886 = vrot.slane %v2844, 3
      %v2887 = vrot.slane %v2845, 3
      %v2888 = vrot.slane %v2846, 3
      %vm2889 = vcmp.lt.s32.totalorder %v199, 5
      %v2890 = vsel %vm2889, %v2885, %v2887
      %v2891 = vsel %vm2889, %v2886, %v2888
      %v2892 = vsel %vm2889, %v2883, %v2885
      %v2893 = vsel %vm2889, %v2884, %v2886
      %v2894 = vsel %vm2889, %v2887, %v2883
      %v2895 = vsel %vm2889, %v2888, %v2884
      %v2896 = vpack.c.bf16 %v2890, %v2892
      %v2897 = vpack.c.bf16 %v2891, %v2893
      %v2898 = vpack.c.bf16 %v2894, %v2894
      %v2899 = vpack.c.bf16 %v2895, %v2895
      %v2900 = vrot.slane %v2841, 4
      %v2901 = vrot.slane %v2842, 4
      %v2902 = vrot.slane %v2843, 4
      %v2903 = vrot.slane %v2844, 4
      %v2904 = vrot.slane %v2845, 4
      %v2905 = vrot.slane %v2846, 4
      %vm2906 = vcmp.lt.s32.totalorder %v199, 4
      %v2907 = vsel %vm2906, %v2902, %v2904
      %v2908 = vsel %vm2906, %v2903, %v2905
      %v2909 = vsel %vm2906, %v2900, %v2902
      %v2910 = vsel %vm2906, %v2901, %v2903
      %v2911 = vsel %vm2906, %v2904, %v2900
      %v2912 = vsel %vm2906, %v2905, %v2901
      %v2913 = vpack.c.bf16 %v2907, %v2909
      %v2914 = vpack.c.bf16 %v2908, %v2910
      %v2915 = vpack.c.bf16 %v2911, %v2911
      %v2916 = vpack.c.bf16 %v2912, %v2912
      %v2917 = vld [vmem:[%s3] sm:$0xff]
      %v2918 = vld [vmem:[%s3 + $0x8] sm:$0xff]
      %v2919 = vld [vmem:[%s3 + $0x10] sm:$0xff]
      %v2920 = vld [vmem:[%s3 + $0x18] sm:$0xff]
      %v2921 = vld [vmem:[%s3 + $0x20] sm:$0xff]
      %v2922 = vld [vmem:[%s3 + $0x28] sm:$0xff]
      %v2923 = vld [vmem:[%s3 + $0x30] sm:$0xff]
      %v2924 = vld [vmem:[%s3 + $0x38] sm:$0xff]
      %v2925 = vld [vmem:[%s3 + $0x40] sm:$0xff]
      %v2926 = vld [vmem:[%s3 + $0x48] sm:$0xff]
      %v2927 = vld [vmem:[%s3 + $0x50] sm:$0xff]
      %v2928 = vld [vmem:[%s3 + $0x58] sm:$0xff]
      %v2929 = vld [vmem:[%s3 + $0x60] sm:$0xff]
      %v2930 = vld [vmem:[%s3 + $0x68] sm:$0xff]
      %v2931 = vld [vmem:[%s3 + $0x70] sm:$0xff]
      %v2932 = vld [vmem:[%s3 + $0x78] sm:$0xff]
      %v2933 = vld [vmem:[%s3 + $0x80] sm:$0xff]
      %v2934 = vld [vmem:[%s3 + $0x88] sm:$0xff]
      %v2935 = vld [vmem:[%s3 + $0x90] sm:$0xff]
      %v2936 = vld [vmem:[%s3 + $0x98] sm:$0xff]
      %v2937 = vld [vmem:[%s3 + $0xa0] sm:$0xff]
      %v2938 = vld [vmem:[%s3 + $0xa8] sm:$0xff]
      %v2939 = vld [vmem:[%s3 + $0xb0] sm:$0xff]
      %v2940 = vld [vmem:[%s3 + $0xb8] sm:$0xff]
      %v2941 = vld [vmem:[%s3 + $0xc0] sm:$0xff]
      %v2942 = vld [vmem:[%s3 + $0xc8] sm:$0xff]
      %v2943 = vld [vmem:[%s3 + $0xd0] sm:$0xff]
      %v2944 = vld [vmem:[%s3 + $0xd8] sm:$0xff]
      %v2945 = vld [vmem:[%s3 + $0xe0] sm:$0xff]
      %v2946 = vld [vmem:[%s3 + $0xe8] sm:$0xff]
      %v2947 = vld [vmem:[%s3 + $0xf0] sm:$0xff]
      %v2948 = vld [vmem:[%s3 + $0xf8] sm:$0xff]
      %v2949 = vld [vmem:[%s3 + $0x100] sm:$0xff]
      %v2950 = vld [vmem:[%s3 + $0x108] sm:$0xff]
      %v2951 = vld [vmem:[%s3 + $0x110] sm:$0xff]
      %v2952 = vld [vmem:[%s3 + $0x118] sm:$0xff]
      %v2953 = vld [vmem:[%s3 + $0x120] sm:$0xff]
      %v2954 = vld [vmem:[%s3 + $0x128] sm:$0xff]
      %v2955 = vld [vmem:[%s3 + $0x130] sm:$0xff]
      %v2956 = vld [vmem:[%s3 + $0x138] sm:$0xff]
      %v2957 = vld [vmem:[%s3 + $0x140] sm:$0xff]
      %v2958 = vld [vmem:[%s3 + $0x148] sm:$0xff]
      %v2959 = vld [vmem:[%s3 + $0x150] sm:$0xff]
      %v2960 = vld [vmem:[%s3 + $0x158] sm:$0xff]
      %v2961 = vld [vmem:[%s3 + $0x160] sm:$0xff]
      %v2962 = vld [vmem:[%s3 + $0x168] sm:$0xff]
      %v2963 = vld [vmem:[%s3 + $0x170] sm:$0xff]
      %v2964 = vld [vmem:[%s3 + $0x178] sm:$0xff]
      %v2965 = vld [vmem:[%s3 + $0x180] sm:$0xff]
      %v2966 = vld [vmem:[%s3 + $0x188] sm:$0xff]
      %v2967 = vld [vmem:[%s3 + $0x190] sm:$0xff]
      %v2968 = vld [vmem:[%s3 + $0x198] sm:$0xff]
      %v2969 = vld [vmem:[%s3 + $0x1a0] sm:$0xff]
      %v2970 = vld [vmem:[%s3 + $0x1a8] sm:$0xff]
      %v2971 = vld [vmem:[%s3 + $0x1b0] sm:$0xff]
      %v2972 = vld [vmem:[%s3 + $0x1b8] sm:$0xff]
      %v2973 = vld [vmem:[%s3 + $0x1c0] sm:$0xff]
      %v2974 = vld [vmem:[%s3 + $0x1c8] sm:$0xff]
      %v2975 = vld [vmem:[%s3 + $0x1d0] sm:$0xff]
      %v2976 = vld [vmem:[%s3 + $0x1d8] sm:$0xff]
      %v2977 = vld [vmem:[%s3 + $0x1e0] sm:$0xff]
      %v2978 = vld [vmem:[%s3 + $0x1e8] sm:$0xff]
      %v2979 = vld [vmem:[%s3 + $0x1f0] sm:$0xff]
      %v2980 = vld [vmem:[%s3 + $0x1f8] sm:$0xff]
      %v2981 = vld [vmem:[%s3 + $0x200] sm:$0xff]
      %v2982 = vld [vmem:[%s3 + $0x208] sm:$0xff]
      %v2983 = vld [vmem:[%s3 + $0x210] sm:$0xff]
      %v2984 = vld [vmem:[%s3 + $0x218] sm:$0xff]
      %v2985 = vld [vmem:[%s3 + $0x220] sm:$0xff]
      %v2986 = vld [vmem:[%s3 + $0x228] sm:$0xff]
      %v2987 = vld [vmem:[%s3 + $0x230] sm:$0xff]
      %v2988 = vld [vmem:[%s3 + $0x238] sm:$0xff]
      %v2989 = vld [vmem:[%s3 + $0x240] sm:$0xff]
      %v2990 = vld [vmem:[%s3 + $0x248] sm:$0xff]
      %v2991 = vld [vmem:[%s3 + $0x250] sm:$0xff]
      %v2992 = vld [vmem:[%s3 + $0x258] sm:$0xff]
      %v2993 = vld [vmem:[%s3 + $0x260] sm:$0xff]
      %v2994 = vld [vmem:[%s3 + $0x268] sm:$0xff]
      %v2995 = vld [vmem:[%s3 + $0x270] sm:$0xff]
      %v2996 = vld [vmem:[%s3 + $0x278] sm:$0xff]
      %v2997 = vld [vmem:[%s3 + $0x280] sm:$0xff]
      %v2998 = vld [vmem:[%s3 + $0x288] sm:$0xff]
      %v2999 = vld [vmem:[%s3 + $0x290] sm:$0xff]
      %v3000 = vld [vmem:[%s3 + $0x298] sm:$0xff]
      %v3001 = vld [vmem:[%s3 + $0x2a0] sm:$0xff]
      %v3002 = vld [vmem:[%s3 + $0x2a8] sm:$0xff]
      %v3003 = vld [vmem:[%s3 + $0x2b0] sm:$0xff]
      %v3004 = vld [vmem:[%s3 + $0x2b8] sm:$0xff]
      %v3005 = vld [vmem:[%s3 + $0x2c0] sm:$0xff]
      %v3006 = vld [vmem:[%s3 + $0x2c8] sm:$0xff]
      %v3007 = vld [vmem:[%s3 + $0x2d0] sm:$0xff]
      %v3008 = vld [vmem:[%s3 + $0x2d8] sm:$0xff]
      %v3009 = vld [vmem:[%s3 + $0x2e0] sm:$0xff]
      %v3010 = vld [vmem:[%s3 + $0x2e8] sm:$0xff]
      %v3011 = vld [vmem:[%s3 + $0x2f0] sm:$0xff]
      %v3012 = vld [vmem:[%s3 + $0x2f8] sm:$0xff]
      %v3013 = vld [vmem:[%s3 + $0x300] sm:$0xff]
      %v3014 = vld [vmem:[%s3 + $0x308] sm:$0xff]
      %v3015 = vld [vmem:[%s3 + $0x310] sm:$0xff]
      %v3016 = vld [vmem:[%s3 + $0x318] sm:$0xff]
      %v3017 = vld [vmem:[%s3 + $0x320] sm:$0xff]
      %v3018 = vld [vmem:[%s3 + $0x328] sm:$0xff]
      %v3019 = vld [vmem:[%s3 + $0x330] sm:$0xff]
      %v3020 = vld [vmem:[%s3 + $0x338] sm:$0xff]
      %v3021 = vld [vmem:[%s3 + $0x340] sm:$0xff]
      %v3022 = vld [vmem:[%s3 + $0x348] sm:$0xff]
      %v3023 = vld [vmem:[%s3 + $0x350] sm:$0xff]
      %v3024 = vld [vmem:[%s3 + $0x358] sm:$0xff]
      %v3025 = vld [vmem:[%s3 + $0x360] sm:$0xff]
      %v3026 = vld [vmem:[%s3 + $0x368] sm:$0xff]
      %v3027 = vld [vmem:[%s3 + $0x370] sm:$0xff]
      %v3028 = vld [vmem:[%s3 + $0x378] sm:$0xff]
      %v3029 = vld [vmem:[%s3 + $0x380] sm:$0xff]
      %v3030 = vld [vmem:[%s3 + $0x388] sm:$0xff]
      %v3031 = vld [vmem:[%s3 + $0x390] sm:$0xff]
      %v3032 = vld [vmem:[%s3 + $0x398] sm:$0xff]
      %v3033 = vld [vmem:[%s3 + $0x3a0] sm:$0xff]
      %v3034 = vld [vmem:[%s3 + $0x3a8] sm:$0xff]
      %v3035 = vld [vmem:[%s3 + $0x3b0] sm:$0xff]
      %v3036 = vld [vmem:[%s3 + $0x3b8] sm:$0xff]
      %v3037 = vld [vmem:[%s3 + $0x3c0] sm:$0xff]
      %v3038 = vld [vmem:[%s3 + $0x3c8] sm:$0xff]
      %v3039 = vld [vmem:[%s3 + $0x3d0] sm:$0xff]
      %v3040 = vld [vmem:[%s3 + $0x3d8] sm:$0xff]
      %v3041 = vld [vmem:[%s3 + $0x3e0] sm:$0xff]
      %v3042 = vld [vmem:[%s3 + $0x3e8] sm:$0xff]
      %v3043 = vld [vmem:[%s3 + $0x3f0] sm:$0xff]
      %v3044 = vld [vmem:[%s3 + $0x3f8] sm:$0xff]
      %v3045 = vld [vmem:[%s3 + $0x400] sm:$0xff]
      %v3046 = vld [vmem:[%s3 + $0x408] sm:$0xff]
      %v3047 = vld [vmem:[%s3 + $0x410] sm:$0xff]
      %v3048 = vld [vmem:[%s3 + $0x418] sm:$0xff]
      %v3049 = vld [vmem:[%s3 + $0x420] sm:$0xff]
      %v3050 = vld [vmem:[%s3 + $0x428] sm:$0xff]
      %v3051 = vld [vmem:[%s3 + $0x430] sm:$0xff]
      %v3052 = vld [vmem:[%s3 + $0x438] sm:$0xff]
      %v3053 = vld [vmem:[%s3 + $0x440] sm:$0xff]
      %v3054 = vld [vmem:[%s3 + $0x448] sm:$0xff]
      %v3055 = vld [vmem:[%s3 + $0x450] sm:$0xff]
      %v3056 = vld [vmem:[%s3 + $0x458] sm:$0xff]
      %v3057 = vld [vmem:[%s3 + $0x460] sm:$0xff]
      %v3058 = vld [vmem:[%s3 + $0x468] sm:$0xff]
      %v3059 = vld [vmem:[%s3 + $0x470] sm:$0xff]
      %v3060 = vld [vmem:[%s3 + $0x478] sm:$0xff]
      %v3061 = vld [vmem:[%s3 + $0x480] sm:$0xff]
      %v3062 = vld [vmem:[%s3 + $0x488] sm:$0xff]
      %v3063 = vld [vmem:[%s3 + $0x490] sm:$0xff]
      %v3064 = vld [vmem:[%s3 + $0x498] sm:$0xff]
      %v3065 = vld [vmem:[%s3 + $0x4a0] sm:$0xff]
      %v3066 = vld [vmem:[%s3 + $0x4a8] sm:$0xff]
      %v3067 = vld [vmem:[%s3 + $0x4b0] sm:$0xff]
      %v3068 = vld [vmem:[%s3 + $0x4b8] sm:$0xff]
      %v3069 = vld [vmem:[%s3 + $0x4c0] sm:$0xff]
      %v3070 = vld [vmem:[%s3 + $0x4c8] sm:$0xff]
      %v3071 = vld [vmem:[%s3 + $0x4d0] sm:$0xff]
      %v3072 = vld [vmem:[%s3 + $0x4d8] sm:$0xff]
      %v3073 = vld [vmem:[%s3 + $0x4e0] sm:$0xff]
      %v3074 = vld [vmem:[%s3 + $0x4e8] sm:$0xff]
      %v3075 = vld [vmem:[%s3 + $0x4f0] sm:$0xff]
      %v3076 = vld [vmem:[%s3 + $0x4f8] sm:$0xff]
      %v3237 = vunpack.c.l.b16 %v2917
      %v3238 = vunpack.c.h.b16 %v2917
      %v3239 = vunpack.c.l.b16 %v2918
      %v3240 = vunpack.c.h.b16 %v2918
      %v3241 = vunpack.c.l.b16 %v2919
      %v3242 = vunpack.c.h.b16 %v2919
      %v3243 = vunpack.c.l.b16 %v2920
      %v3244 = vunpack.c.h.b16 %v2920
      %v3245 = vunpack.c.l.b16 %v2921
      %v3246 = vunpack.c.h.b16 %v2921
      %v3247 = vunpack.c.l.b16 %v2922
      %v3248 = vunpack.c.h.b16 %v2922
      %v3249 = vunpack.c.l.b16 %v2923
      %v3250 = vunpack.c.h.b16 %v2923
      %v3251 = vunpack.c.l.b16 %v2924
      %v3252 = vunpack.c.h.b16 %v2924
      %v3253 = vunpack.c.l.b16 %v2925
      %v3254 = vunpack.c.h.b16 %v2925
      %v3255 = vunpack.c.l.b16 %v2926
      %v3256 = vunpack.c.h.b16 %v2926
      %v3257 = vunpack.c.l.b16 %v2927
      %v3258 = vunpack.c.h.b16 %v2927
      %v3259 = vunpack.c.l.b16 %v2928
      %v3260 = vunpack.c.h.b16 %v2928
      %v3261 = vunpack.c.l.b16 %v2929
      %v3262 = vunpack.c.h.b16 %v2929
      %v3263 = vunpack.c.l.b16 %v2930
      %v3264 = vunpack.c.h.b16 %v2930
      %v3265 = vunpack.c.l.b16 %v2931
      %v3266 = vunpack.c.h.b16 %v2931
      %v3267 = vunpack.c.l.b16 %v2932
      %v3268 = vunpack.c.h.b16 %v2932
      %v3269 = vunpack.c.l.b16 %v2933
      %v3270 = vunpack.c.h.b16 %v2933
      %v3271 = vunpack.c.l.b16 %v2934
      %v3272 = vunpack.c.h.b16 %v2934
      %v3273 = vunpack.c.l.b16 %v2935
      %v3274 = vunpack.c.h.b16 %v2935
      %v3275 = vunpack.c.l.b16 %v2936
      %v3276 = vunpack.c.h.b16 %v2936
      %v3277 = vunpack.c.l.b16 %v2937
      %v3278 = vunpack.c.h.b16 %v2937
      %v3279 = vunpack.c.l.b16 %v2938
      %v3280 = vunpack.c.h.b16 %v2938
      %v3281 = vunpack.c.l.b16 %v2939
      %v3282 = vunpack.c.h.b16 %v2939
      %v3283 = vunpack.c.l.b16 %v2940
      %v3284 = vunpack.c.h.b16 %v2940
      %v3285 = vunpack.c.l.b16 %v2941
      %v3286 = vunpack.c.h.b16 %v2941
      %v3287 = vunpack.c.l.b16 %v2942
      %v3288 = vunpack.c.h.b16 %v2942
      %v3289 = vunpack.c.l.b16 %v2943
      %v3290 = vunpack.c.h.b16 %v2943
      %v3291 = vunpack.c.l.b16 %v2944
      %v3292 = vunpack.c.h.b16 %v2944
      %v3293 = vunpack.c.l.b16 %v2945
      %v3294 = vunpack.c.h.b16 %v2945
      %v3295 = vunpack.c.l.b16 %v2946
      %v3296 = vunpack.c.h.b16 %v2946
      %v3297 = vunpack.c.l.b16 %v2947
      %v3298 = vunpack.c.h.b16 %v2947
      %v3299 = vunpack.c.l.b16 %v2948
      %v3300 = vunpack.c.h.b16 %v2948
      %v3301 = vunpack.c.l.b16 %v2949
      %v3302 = vunpack.c.h.b16 %v2949
      %v3303 = vunpack.c.l.b16 %v2950
      %v3304 = vunpack.c.h.b16 %v2950
      %v3305 = vunpack.c.l.b16 %v2951
      %v3306 = vunpack.c.h.b16 %v2951
      %v3307 = vunpack.c.l.b16 %v2952
      %v3308 = vunpack.c.h.b16 %v2952
      %v3309 = vunpack.c.l.b16 %v2953
      %v3310 = vunpack.c.h.b16 %v2953
      %v3311 = vunpack.c.l.b16 %v2954
      %v3312 = vunpack.c.h.b16 %v2954
      %v3313 = vunpack.c.l.b16 %v2955
      %v3314 = vunpack.c.h.b16 %v2955
      %v3315 = vunpack.c.l.b16 %v2956
      %v3316 = vunpack.c.h.b16 %v2956
      %v3317 = vunpack.c.l.b16 %v2957
      %v3318 = vunpack.c.h.b16 %v2957
      %v3319 = vunpack.c.l.b16 %v2958
      %v3320 = vunpack.c.h.b16 %v2958
      %v3321 = vunpack.c.l.b16 %v2959
      %v3322 = vunpack.c.h.b16 %v2959
      %v3323 = vunpack.c.l.b16 %v2960
      %v3324 = vunpack.c.h.b16 %v2960
      %v3325 = vunpack.c.l.b16 %v2961
      %v3326 = vunpack.c.h.b16 %v2961
      %v3327 = vunpack.c.l.b16 %v2962
      %v3328 = vunpack.c.h.b16 %v2962
      %v3329 = vunpack.c.l.b16 %v2963
      %v3330 = vunpack.c.h.b16 %v2963
      %v3331 = vunpack.c.l.b16 %v2964
      %v3332 = vunpack.c.h.b16 %v2964
      %v3333 = vunpack.c.l.b16 %v2965
      %v3334 = vunpack.c.h.b16 %v2965
      %v3335 = vunpack.c.l.b16 %v2966
      %v3336 = vunpack.c.h.b16 %v2966
      %v3337 = vunpack.c.l.b16 %v2967
      %v3338 = vunpack.c.h.b16 %v2967
      %v3339 = vunpack.c.l.b16 %v2968
      %v3340 = vunpack.c.h.b16 %v2968
      %v3341 = vunpack.c.l.b16 %v2969
      %v3342 = vunpack.c.h.b16 %v2969
      %v3343 = vunpack.c.l.b16 %v2970
      %v3344 = vunpack.c.h.b16 %v2970
      %v3345 = vunpack.c.l.b16 %v2971
      %v3346 = vunpack.c.h.b16 %v2971
      %v3347 = vunpack.c.l.b16 %v2972
      %v3348 = vunpack.c.h.b16 %v2972
      %v3349 = vunpack.c.l.b16 %v2973
      %v3350 = vunpack.c.h.b16 %v2973
      %v3351 = vunpack.c.l.b16 %v2974
      %v3352 = vunpack.c.h.b16 %v2974
      %v3353 = vunpack.c.l.b16 %v2975
      %v3354 = vunpack.c.h.b16 %v2975
      %v3355 = vunpack.c.l.b16 %v2976
      %v3356 = vunpack.c.h.b16 %v2976
      %v3357 = vunpack.c.l.b16 %v2977
      %v3358 = vunpack.c.h.b16 %v2977
      %v3359 = vunpack.c.l.b16 %v2978
      %v3360 = vunpack.c.h.b16 %v2978
      %v3361 = vunpack.c.l.b16 %v2979
      %v3362 = vunpack.c.h.b16 %v2979
      %v3363 = vunpack.c.l.b16 %v2980
      %v3364 = vunpack.c.h.b16 %v2980
      %v3365 = vunpack.c.l.b16 %v2981
      %v3366 = vunpack.c.h.b16 %v2981
      %v3367 = vunpack.c.l.b16 %v2982
      %v3368 = vunpack.c.h.b16 %v2982
      %v3369 = vunpack.c.l.b16 %v2983
      %v3370 = vunpack.c.h.b16 %v2983
      %v3371 = vunpack.c.l.b16 %v2984
      %v3372 = vunpack.c.h.b16 %v2984
      %v3373 = vunpack.c.l.b16 %v2985
      %v3374 = vunpack.c.h.b16 %v2985
      %v3375 = vunpack.c.l.b16 %v2986
      %v3376 = vunpack.c.h.b16 %v2986
      %v3377 = vunpack.c.l.b16 %v2987
      %v3378 = vunpack.c.h.b16 %v2987
      %v3379 = vunpack.c.l.b16 %v2988
      %v3380 = vunpack.c.h.b16 %v2988
      %v3381 = vunpack.c.l.b16 %v2989
      %v3382 = vunpack.c.h.b16 %v2989
      %v3383 = vunpack.c.l.b16 %v2990
      %v3384 = vunpack.c.h.b16 %v2990
      %v3385 = vunpack.c.l.b16 %v2991
      %v3386 = vunpack.c.h.b16 %v2991
      %v3387 = vunpack.c.l.b16 %v2992
      %v3388 = vunpack.c.h.b16 %v2992
      %v3389 = vunpack.c.l.b16 %v2993
      %v3390 = vunpack.c.h.b16 %v2993
      %v3391 = vunpack.c.l.b16 %v2994
      %v3392 = vunpack.c.h.b16 %v2994
      %v3393 = vunpack.c.l.b16 %v2995
      %v3394 = vunpack.c.h.b16 %v2995
      %v3395 = vunpack.c.l.b16 %v2996
      %v3396 = vunpack.c.h.b16 %v2996
      %v3397 = vunpack.c.l.b16 %v2997
      %v3398 = vunpack.c.h.b16 %v2997
      %v3399 = vunpack.c.l.b16 %v2998
      %v3400 = vunpack.c.h.b16 %v2998
      %v3401 = vunpack.c.l.b16 %v2999
      %v3402 = vunpack.c.h.b16 %v2999
      %v3403 = vunpack.c.l.b16 %v3000
      %v3404 = vunpack.c.h.b16 %v3000
      %v3405 = vunpack.c.l.b16 %v3001
      %v3406 = vunpack.c.h.b16 %v3001
      %v3407 = vunpack.c.l.b16 %v3002
      %v3408 = vunpack.c.h.b16 %v3002
      %v3409 = vunpack.c.l.b16 %v3003
      %v3410 = vunpack.c.h.b16 %v3003
      %v3411 = vunpack.c.l.b16 %v3004
      %v3412 = vunpack.c.h.b16 %v3004
      %v3413 = vunpack.c.l.b16 %v3005
      %v3414 = vunpack.c.h.b16 %v3005
      %v3415 = vunpack.c.l.b16 %v3006
      %v3416 = vunpack.c.h.b16 %v3006
      %v3417 = vunpack.c.l.b16 %v3007
      %v3418 = vunpack.c.h.b16 %v3007
      %v3419 = vunpack.c.l.b16 %v3008
      %v3420 = vunpack.c.h.b16 %v3008
      %v3421 = vunpack.c.l.b16 %v3009
      %v3422 = vunpack.c.h.b16 %v3009
      %v3423 = vunpack.c.l.b16 %v3010
      %v3424 = vunpack.c.h.b16 %v3010
      %v3425 = vunpack.c.l.b16 %v3011
      %v3426 = vunpack.c.h.b16 %v3011
      %v3427 = vunpack.c.l.b16 %v3012
      %v3428 = vunpack.c.h.b16 %v3012
      %v3429 = vunpack.c.l.b16 %v3013
      %v3430 = vunpack.c.h.b16 %v3013
      %v3431 = vunpack.c.l.b16 %v3014
      %v3432 = vunpack.c.h.b16 %v3014
      %v3433 = vunpack.c.l.b16 %v3015
      %v3434 = vunpack.c.h.b16 %v3015
      %v3435 = vunpack.c.l.b16 %v3016
      %v3436 = vunpack.c.h.b16 %v3016
      %v3437 = vunpack.c.l.b16 %v3017
      %v3438 = vunpack.c.h.b16 %v3017
      %v3439 = vunpack.c.l.b16 %v3018
      %v3440 = vunpack.c.h.b16 %v3018
      %v3441 = vunpack.c.l.b16 %v3019
      %v3442 = vunpack.c.h.b16 %v3019
      %v3443 = vunpack.c.l.b16 %v3020
      %v3444 = vunpack.c.h.b16 %v3020
      %v3445 = vunpack.c.l.b16 %v3021
      %v3446 = vunpack.c.h.b16 %v3021
      %v3447 = vunpack.c.l.b16 %v3022
      %v3448 = vunpack.c.h.b16 %v3022
      %v3449 = vunpack.c.l.b16 %v3023
      %v3450 = vunpack.c.h.b16 %v3023
      %v3451 = vunpack.c.l.b16 %v3024
      %v3452 = vunpack.c.h.b16 %v3024
      %v3453 = vunpack.c.l.b16 %v3025
      %v3454 = vunpack.c.h.b16 %v3025
      %v3455 = vunpack.c.l.b16 %v3026
      %v3456 = vunpack.c.h.b16 %v3026
      %v3457 = vunpack.c.l.b16 %v3027
      %v3458 = vunpack.c.h.b16 %v3027
      %v3459 = vunpack.c.l.b16 %v3028
      %v3460 = vunpack.c.h.b16 %v3028
      %v3461 = vunpack.c.l.b16 %v3029
      %v3462 = vunpack.c.h.b16 %v3029
      %v3463 = vunpack.c.l.b16 %v3030
      %v3464 = vunpack.c.h.b16 %v3030
      %v3465 = vunpack.c.l.b16 %v3031
      %v3466 = vunpack.c.h.b16 %v3031
      %v3467 = vunpack.c.l.b16 %v3032
      %v3468 = vunpack.c.h.b16 %v3032
      %v3469 = vunpack.c.l.b16 %v3033
      %v3470 = vunpack.c.h.b16 %v3033
      %v3471 = vunpack.c.l.b16 %v3034
      %v3472 = vunpack.c.h.b16 %v3034
      %v3473 = vunpack.c.l.b16 %v3035
      %v3474 = vunpack.c.h.b16 %v3035
      %v3475 = vunpack.c.l.b16 %v3036
      %v3476 = vunpack.c.h.b16 %v3036
      %v3477 = vunpack.c.l.b16 %v3037
      %v3478 = vunpack.c.h.b16 %v3037
      %v3479 = vunpack.c.l.b16 %v3038
      %v3480 = vunpack.c.h.b16 %v3038
      %v3481 = vunpack.c.l.b16 %v3039
      %v3482 = vunpack.c.h.b16 %v3039
      %v3483 = vunpack.c.l.b16 %v3040
      %v3484 = vunpack.c.h.b16 %v3040
      %v3485 = vunpack.c.l.b16 %v3041
      %v3486 = vunpack.c.h.b16 %v3041
      %v3487 = vunpack.c.l.b16 %v3042
      %v3488 = vunpack.c.h.b16 %v3042
      %v3489 = vunpack.c.l.b16 %v3043
      %v3490 = vunpack.c.h.b16 %v3043
      %v3491 = vunpack.c.l.b16 %v3044
      %v3492 = vunpack.c.h.b16 %v3044
      %v3493 = vunpack.c.l.b16 %v3045
      %v3494 = vunpack.c.h.b16 %v3045
      %v3495 = vunpack.c.l.b16 %v3046
      %v3496 = vunpack.c.h.b16 %v3046
      %v3497 = vunpack.c.l.b16 %v3047
      %v3498 = vunpack.c.h.b16 %v3047
      %v3499 = vunpack.c.l.b16 %v3048
      %v3500 = vunpack.c.h.b16 %v3048
      %v3501 = vunpack.c.l.b16 %v3049
      %v3502 = vunpack.c.h.b16 %v3049
      %v3503 = vunpack.c.l.b16 %v3050
      %v3504 = vunpack.c.h.b16 %v3050
      %v3505 = vunpack.c.l.b16 %v3051
      %v3506 = vunpack.c.h.b16 %v3051
      %v3507 = vunpack.c.l.b16 %v3052
      %v3508 = vunpack.c.h.b16 %v3052
      %v3509 = vunpack.c.l.b16 %v3053
      %v3510 = vunpack.c.h.b16 %v3053
      %v3511 = vunpack.c.l.b16 %v3054
      %v3512 = vunpack.c.h.b16 %v3054
      %v3513 = vunpack.c.l.b16 %v3055
      %v3514 = vunpack.c.h.b16 %v3055
      %v3515 = vunpack.c.l.b16 %v3056
      %v3516 = vunpack.c.h.b16 %v3056
      %v3517 = vunpack.c.l.b16 %v3057
      %v3518 = vunpack.c.h.b16 %v3057
      %v3519 = vunpack.c.l.b16 %v3058
      %v3520 = vunpack.c.h.b16 %v3058
      %v3521 = vunpack.c.l.b16 %v3059
      %v3522 = vunpack.c.h.b16 %v3059
      %v3523 = vunpack.c.l.b16 %v3060
      %v3524 = vunpack.c.h.b16 %v3060
      %v3525 = vunpack.c.l.b16 %v3061
      %v3526 = vunpack.c.h.b16 %v3061
      %v3527 = vunpack.c.l.b16 %v3062
      %v3528 = vunpack.c.h.b16 %v3062
      %v3529 = vunpack.c.l.b16 %v3063
      %v3530 = vunpack.c.h.b16 %v3063
      %v3531 = vunpack.c.l.b16 %v3064
      %v3532 = vunpack.c.h.b16 %v3064
      %v3533 = vunpack.c.l.b16 %v3065
      %v3534 = vunpack.c.h.b16 %v3065
      %v3535 = vunpack.c.l.b16 %v3066
      %v3536 = vunpack.c.h.b16 %v3066
      %v3537 = vunpack.c.l.b16 %v3067
      %v3538 = vunpack.c.h.b16 %v3067
      %v3539 = vunpack.c.l.b16 %v3068
      %v3540 = vunpack.c.h.b16 %v3068
      %v3541 = vunpack.c.l.b16 %v3069
      %v3542 = vunpack.c.h.b16 %v3069
      %v3543 = vunpack.c.l.b16 %v3070
      %v3544 = vunpack.c.h.b16 %v3070
      %v3545 = vunpack.c.l.b16 %v3071
      %v3546 = vunpack.c.h.b16 %v3071
      %v3547 = vunpack.c.l.b16 %v3072
      %v3548 = vunpack.c.h.b16 %v3072
      %v3549 = vunpack.c.l.b16 %v3073
      %v3550 = vunpack.c.h.b16 %v3073
      %v3551 = vunpack.c.l.b16 %v3074
      %v3552 = vunpack.c.h.b16 %v3074
      %v3553 = vunpack.c.l.b16 %v3075
      %v3554 = vunpack.c.h.b16 %v3075
      %v3555 = vunpack.c.l.b16 %v3076
      %v3556 = vunpack.c.h.b16 %v3076
      %v3557 = vpack.c.b16 %v3239, %v3237
      %v3558 = vpack.c.b16 %v3240, %v3238
      %v3559 = vpack.c.b16 %v3243, %v3241
      %v3560 = vpack.c.b16 %v3244, %v3242
      %v3561 = vpack.c.b16 %v3247, %v3245
      %v3562 = vpack.c.b16 %v3248, %v3246
      %v3563 = vpack.c.b16 %v3251, %v3249
      %v3564 = vpack.c.b16 %v3252, %v3250
      %v3565 = vpack.c.b16 %v3255, %v3253
      %v3566 = vpack.c.b16 %v3256, %v3254
      %v3567 = vpack.c.b16 %v3259, %v3257
      %v3568 = vpack.c.b16 %v3260, %v3258
      %v3569 = vpack.c.b16 %v3263, %v3261
      %v3570 = vpack.c.b16 %v3264, %v3262
      %v3571 = vpack.c.b16 %v3267, %v3265
      %v3572 = vpack.c.b16 %v3268, %v3266
      %v3573 = vpack.c.b16 %v3271, %v3269
      %v3574 = vpack.c.b16 %v3272, %v3270
      %v3575 = vpack.c.b16 %v3275, %v3273
      %v3576 = vpack.c.b16 %v3276, %v3274
      %v3577 = vpack.c.b16 %v3279, %v3277
      %v3578 = vpack.c.b16 %v3280, %v3278
      %v3579 = vpack.c.b16 %v3283, %v3281
      %v3580 = vpack.c.b16 %v3284, %v3282
      %v3581 = vpack.c.b16 %v3287, %v3285
      %v3582 = vpack.c.b16 %v3288, %v3286
      %v3583 = vpack.c.b16 %v3291, %v3289
      %v3584 = vpack.c.b16 %v3292, %v3290
      %v3585 = vpack.c.b16 %v3295, %v3293
      %v3586 = vpack.c.b16 %v3296, %v3294
      %v3587 = vpack.c.b16 %v3299, %v3297
      %v3588 = vpack.c.b16 %v3300, %v3298
      %v3589 = vpack.c.b16 %v3303, %v3301
      %v3590 = vpack.c.b16 %v3304, %v3302
      %v3591 = vpack.c.b16 %v3307, %v3305
      %v3592 = vpack.c.b16 %v3308, %v3306
      %v3593 = vpack.c.b16 %v3311, %v3309
      %v3594 = vpack.c.b16 %v3312, %v3310
      %v3595 = vpack.c.b16 %v3315, %v3313
      %v3596 = vpack.c.b16 %v3316, %v3314
      %v3597 = vpack.c.b16 %v3319, %v3317
      %v3598 = vpack.c.b16 %v3320, %v3318
      %v3599 = vpack.c.b16 %v3323, %v3321
      %v3600 = vpack.c.b16 %v3324, %v3322
      %v3601 = vpack.c.b16 %v3327, %v3325
      %v3602 = vpack.c.b16 %v3328, %v3326
      %v3603 = vpack.c.b16 %v3331, %v3329
      %v3604 = vpack.c.b16 %v3332, %v3330
      %v3605 = vpack.c.b16 %v3335, %v3333
      %v3606 = vpack.c.b16 %v3336, %v3334
      %v3607 = vpack.c.b16 %v3339, %v3337
      %v3608 = vpack.c.b16 %v3340, %v3338
      %v3609 = vpack.c.b16 %v3343, %v3341
      %v3610 = vpack.c.b16 %v3344, %v3342
      %v3611 = vpack.c.b16 %v3347, %v3345
      %v3612 = vpack.c.b16 %v3348, %v3346
      %v3613 = vpack.c.b16 %v3351, %v3349
      %v3614 = vpack.c.b16 %v3352, %v3350
      %v3615 = vpack.c.b16 %v3355, %v3353
      %v3616 = vpack.c.b16 %v3356, %v3354
      %v3617 = vpack.c.b16 %v3359, %v3357
      %v3618 = vpack.c.b16 %v3360, %v3358
      %v3619 = vpack.c.b16 %v3363, %v3361
      %v3620 = vpack.c.b16 %v3364, %v3362
      %v3621 = vpack.c.b16 %v3367, %v3365
      %v3622 = vpack.c.b16 %v3368, %v3366
      %v3623 = vpack.c.b16 %v3371, %v3369
      %v3624 = vpack.c.b16 %v3372, %v3370
      %v3625 = vpack.c.b16 %v3375, %v3373
      %v3626 = vpack.c.b16 %v3376, %v3374
      %v3627 = vpack.c.b16 %v3379, %v3377
      %v3628 = vpack.c.b16 %v3380, %v3378
      %v3629 = vpack.c.b16 %v3383, %v3381
      %v3630 = vpack.c.b16 %v3384, %v3382
      %v3631 = vpack.c.b16 %v3387, %v3385
      %v3632 = vpack.c.b16 %v3388, %v3386
      %v3633 = vpack.c.b16 %v3391, %v3389
      %v3634 = vpack.c.b16 %v3392, %v3390
      %v3635 = vpack.c.b16 %v3395, %v3393
      %v3636 = vpack.c.b16 %v3396, %v3394
      %v3637 = vpack.c.b16 %v3399, %v3397
      %v3638 = vpack.c.b16 %v3400, %v3398
      %v3639 = vpack.c.b16 %v3403, %v3401
      %v3640 = vpack.c.b16 %v3404, %v3402
      %v3641 = vpack.c.b16 %v3407, %v3405
      %v3642 = vpack.c.b16 %v3408, %v3406
      %v3643 = vpack.c.b16 %v3411, %v3409
      %v3644 = vpack.c.b16 %v3412, %v3410
      %v3645 = vpack.c.b16 %v3415, %v3413
      %v3646 = vpack.c.b16 %v3416, %v3414
      %v3647 = vpack.c.b16 %v3419, %v3417
      %v3648 = vpack.c.b16 %v3420, %v3418
      %v3649 = vpack.c.b16 %v3423, %v3421
      %v3650 = vpack.c.b16 %v3424, %v3422
      %v3651 = vpack.c.b16 %v3427, %v3425
      %v3652 = vpack.c.b16 %v3428, %v3426
      %v3653 = vpack.c.b16 %v3431, %v3429
      %v3654 = vpack.c.b16 %v3432, %v3430
      %v3655 = vpack.c.b16 %v3435, %v3433
      %v3656 = vpack.c.b16 %v3436, %v3434
      %v3657 = vpack.c.b16 %v3439, %v3437
      %v3658 = vpack.c.b16 %v3440, %v3438
      %v3659 = vpack.c.b16 %v3443, %v3441
      %v3660 = vpack.c.b16 %v3444, %v3442
      %v3661 = vpack.c.b16 %v3447, %v3445
      %v3662 = vpack.c.b16 %v3448, %v3446
      %v3663 = vpack.c.b16 %v3451, %v3449
      %v3664 = vpack.c.b16 %v3452, %v3450
      %v3665 = vpack.c.b16 %v3455, %v3453
      %v3666 = vpack.c.b16 %v3456, %v3454
      %v3667 = vpack.c.b16 %v3459, %v3457
      %v3668 = vpack.c.b16 %v3460, %v3458
      %v3669 = vpack.c.b16 %v3463, %v3461
      %v3670 = vpack.c.b16 %v3464, %v3462
      %v3671 = vpack.c.b16 %v3467, %v3465
      %v3672 = vpack.c.b16 %v3468, %v3466
      %v3673 = vpack.c.b16 %v3471, %v3469
      %v3674 = vpack.c.b16 %v3472, %v3470
      %v3675 = vpack.c.b16 %v3475, %v3473
      %v3676 = vpack.c.b16 %v3476, %v3474
      %v3677 = vpack.c.b16 %v3479, %v3477
      %v3678 = vpack.c.b16 %v3480, %v3478
      %v3679 = vpack.c.b16 %v3483, %v3481
      %v3680 = vpack.c.b16 %v3484, %v3482
      %v3681 = vpack.c.b16 %v3487, %v3485
      %v3682 = vpack.c.b16 %v3488, %v3486
      %v3683 = vpack.c.b16 %v3491, %v3489
      %v3684 = vpack.c.b16 %v3492, %v3490
      %v3685 = vpack.c.b16 %v3495, %v3493
      %v3686 = vpack.c.b16 %v3496, %v3494
      %v3687 = vpack.c.b16 %v3499, %v3497
      %v3688 = vpack.c.b16 %v3500, %v3498
      %v3689 = vpack.c.b16 %v3503, %v3501
      %v3690 = vpack.c.b16 %v3504, %v3502
      %v3691 = vpack.c.b16 %v3507, %v3505
      %v3692 = vpack.c.b16 %v3508, %v3506
      %v3693 = vpack.c.b16 %v3511, %v3509
      %v3694 = vpack.c.b16 %v3512, %v3510
      %v3695 = vpack.c.b16 %v3515, %v3513
      %v3696 = vpack.c.b16 %v3516, %v3514
      %v3697 = vpack.c.b16 %v3519, %v3517
      %v3698 = vpack.c.b16 %v3520, %v3518
      %v3699 = vpack.c.b16 %v3523, %v3521
      %v3700 = vpack.c.b16 %v3524, %v3522
      %v3701 = vpack.c.b16 %v3527, %v3525
      %v3702 = vpack.c.b16 %v3528, %v3526
      %v3703 = vpack.c.b16 %v3531, %v3529
      %v3704 = vpack.c.b16 %v3532, %v3530
      %v3705 = vpack.c.b16 %v3535, %v3533
      %v3706 = vpack.c.b16 %v3536, %v3534
      %v3707 = vpack.c.b16 %v3539, %v3537
      %v3708 = vpack.c.b16 %v3540, %v3538
      %v3709 = vpack.c.b16 %v3543, %v3541
      %v3710 = vpack.c.b16 %v3544, %v3542
      %v3711 = vpack.c.b16 %v3547, %v3545
      %v3712 = vpack.c.b16 %v3548, %v3546
      %v3713 = vpack.c.b16 %v3551, %v3549
      %v3714 = vpack.c.b16 %v3552, %v3550
      %v3715 = vpack.c.b16 %v3555, %v3553
      %v3716 = vpack.c.b16 %v3556, %v3554
      %3877 = vmatprep.subr.bf16.mxu0 %v3558
      %3878 = vmatpush1.bf16.msra.mxu0 %v3557
      %3879 = vmatprep.subr.bf16.mxu0 %v3560
      %3880 = vmatpush1.bf16.msra.mxu0 %v3559
      %3881 = vmatprep.subr.bf16.mxu0 %v3562
      %3882 = vmatpush1.bf16.msra.mxu0 %v3561
      %3883 = vmatprep.subr.bf16.mxu0 %v3564
      %3884 = vmatpush1.bf16.msra.mxu0 %v3563
      %3885 = vmatprep.subr.bf16.mxu0 %v3566
      %3886 = vmatpush1.bf16.msra.mxu0 %v3565
      %3887 = vmatprep.subr.bf16.mxu0 %v3568
      %3888 = vmatpush1.bf16.msra.mxu0 %v3567
      %3889 = vmatprep.subr.bf16.mxu0 %v3570
      %3890 = vmatpush1.bf16.msra.mxu0 %v3569
      %3891 = vmatprep.subr.bf16.mxu0 %v3572
      %3892 = vmatpush1.bf16.msra.mxu0 %v3571
      %3893 = vmatprep.subr.bf16.mxu0 %v3574
      %3894 = vmatpush1.bf16.msra.mxu0 %v3573
      %3895 = vmatprep.subr.bf16.mxu0 %v3576
      %3896 = vmatpush1.bf16.msra.mxu0 %v3575
      %3897 = vmatprep.subr.bf16.mxu0 %v3578
      %3898 = vmatpush1.bf16.msra.mxu0 %v3577
      %3899 = vmatprep.subr.bf16.mxu0 %v3580
      %3900 = vmatpush1.bf16.msra.mxu0 %v3579
      %3901 = vmatprep.subr.bf16.mxu0 %v3582
      %3902 = vmatpush1.bf16.msra.mxu0 %v3581
      %3903 = vmatprep.subr.bf16.mxu0 %v3584
      %3904 = vmatpush1.bf16.msra.mxu0 %v3583
      %3905 = vmatprep.subr.bf16.mxu0 %v3586
      %3906 = vmatpush1.bf16.msra.mxu0 %v3585
      %3907 = vmatprep.subr.bf16.mxu0 %v3588
      %3908 = vmatpush1.bf16.msra.mxu0 %v3587
      %3909 = vmatprep.mubr.bf16.mxu0 %v2848
      %3910 = vmatmul.mubr.bf16.gmra.mrb[0].mxu0 %v2847
      %v3911 = vpop.f32.mrb[0].mxu0
      %v3912 = vadd.f32 0.0, %v3911
      %v3913 = vpop.f32.mrb[0].mxu0
      %v3914 = vadd.f32 0.0, %v3913
      %v3915 = vpop.f32.mrb[0].mxu0
      %v3916 = vadd.f32 0.0, %v3915
      %v3917 = vpop.f32.mrb[0].mxu0
      %v3918 = vadd.f32 0.0, %v3917
      %3919 = vmatprep.mubr.bf16.mxu0 %v2850
      %3920 = vmatmul.mubr.bf16.gmra.mrb[0].mxu0 %v2849
      %v3921 = vpop.f32.mrb[0].mxu0
      %v3922 = vpop.f32.mrb[0].mxu0
      %v3923 = vpop.f32.mrb[0].mxu0
      %v3924 = vpop.f32.mrb[0].mxu0
      %3925 = vdwg.mxu0
      %3926 = vmatprep.subr.bf16.mxu0 %v3590
      %3927 = vmatpush1.bf16.msra.mxu0 %v3589
      %3928 = vmatprep.subr.bf16.mxu0 %v3592
      %3929 = vmatpush1.bf16.msra.mxu0 %v3591
      %3930 = vmatprep.subr.bf16.mxu0 %v3594
      %3931 = vmatpush1.bf16.msra.mxu0 %v3593
      %3932 = vmatprep.subr.bf16.mxu0 %v3596
      %3933 = vmatpush1.bf16.msra.mxu0 %v3595
      %3934 = vmatprep.subr.bf16.mxu0 %v3598
      %3935 = vmatpush1.bf16.msra.mxu0 %v3597
      %3936 = vmatprep.subr.bf16.mxu0 %v3600
      %3937 = vmatpush1.bf16.msra.mxu0 %v3599
      %3938 = vmatprep.subr.bf16.mxu0 %v3602
      %3939 = vmatpush1.bf16.msra.mxu0 %v3601
      %3940 = vmatprep.subr.bf16.mxu0 %v3604
      %3941 = vmatpush1.bf16.msra.mxu0 %v3603
      %3942 = vmatprep.subr.bf16.mxu0 %v3606
      %3943 = vmatpush1.bf16.msra.mxu0 %v3605
      %3944 = vmatprep.subr.bf16.mxu0 %v3608
      %3945 = vmatpush1.bf16.msra.mxu0 %v3607
      %3946 = vmatprep.subr.bf16.mxu0 %v3610
      %3947 = vmatpush1.bf16.msra.mxu0 %v3609
      %3948 = vmatprep.subr.bf16.mxu0 %v3612
      %3949 = vmatpush1.bf16.msra.mxu0 %v3611
      %3950 = vmatprep.subr.bf16.mxu0 %v3614
      %3951 = vmatpush1.bf16.msra.mxu0 %v3613
      %3952 = vmatprep.subr.bf16.mxu0 %v3616
      %3953 = vmatpush1.bf16.msra.mxu0 %v3615
      %3954 = vmatprep.subr.bf16.mxu0 %v3618
      %3955 = vmatpush1.bf16.msra.mxu0 %v3617
      %3956 = vmatprep.subr.bf16.mxu0 %v3620
      %3957 = vmatpush1.bf16.msra.mxu0 %v3619
      %3958 = vmatprep.mubr.bf16.mxu0 %v2864
      %3959 = vmatmul.mubr.bf16.gmra.mrb[0].mxu0 %v2863
      %v3960 = vpop.f32.mrb[0].mxu0
      %v3961 = vadd.f32 %v3912, %v3960
      %v3962 = vpop.f32.mrb[0].mxu0
      %v3963 = vadd.f32 %v3914, %v3962
      %v3964 = vpop.f32.mrb[0].mxu0
      %v3965 = vadd.f32 %v3916, %v3964
      %v3966 = vpop.f32.mrb[0].mxu0
      %v3967 = vadd.f32 %v3918, %v3966
      %3968 = vmatprep.mubr.bf16.mxu0 %v2866
      %3969 = vmatmul.mubr.bf16.gmra.mrb[0].mxu0 %v2865
      %v3970 = vpop.f32.mrb[0].mxu0
      %v3971 = vpop.f32.mrb[0].mxu0
      %v3972 = vpop.f32.mrb[0].mxu0
      %v3973 = vpop.f32.mrb[0].mxu0
      %3974 = vdwg.mxu0
      %3975 = vmatprep.subr.bf16.mxu0 %v3622
      %3976 = vmatpush1.bf16.msra.mxu0 %v3621
      %3977 = vmatprep.subr.bf16.mxu0 %v3624
      %3978 = vmatpush1.bf16.msra.mxu0 %v3623
      %3979 = vmatprep.subr.bf16.mxu0 %v3626
      %3980 = vmatpush1.bf16.msra.mxu0 %v3625
      %3981 = vmatprep.subr.bf16.mxu0 %v3628
      %3982 = vmatpush1.bf16.msra.mxu0 %v3627
      %3983 = vmatprep.subr.bf16.mxu0 %v3630
      %3984 = vmatpush1.bf16.msra.mxu0 %v3629
      %3985 = vmatprep.subr.bf16.mxu0 %v3632
      %3986 = vmatpush1.bf16.msra.mxu0 %v3631
      %3987 = vmatprep.subr.bf16.mxu0 %v3634
      %3988 = vmatpush1.bf16.msra.mxu0 %v3633
      %3989 = vmatprep.subr.bf16.mxu0 %v3636
      %3990 = vmatpush1.bf16.msra.mxu0 %v3635
      %3991 = vmatprep.subr.bf16.mxu0 %v3638
      %3992 = vmatpush1.bf16.msra.mxu0 %v3637
      %3993 = vmatprep.subr.bf16.mxu0 %v3640
      %3994 = vmatpush1.bf16.msra.mxu0 %v3639
      %3995 = vmatprep.subr.bf16.mxu0 %v3642
      %3996 = vmatpush1.bf16.msra.mxu0 %v3641
      %3997 = vmatprep.subr.bf16.mxu0 %v3644
      %3998 = vmatpush1.bf16.msra.mxu0 %v3643
      %3999 = vmatprep.subr.bf16.mxu0 %v3646
      %4000 = vmatpush1.bf16.msra.mxu0 %v3645
      %4001 = vmatprep.subr.bf16.mxu0 %v3648
      %4002 = vmatpush1.bf16.msra.mxu0 %v3647
      %4003 = vmatprep.subr.bf16.mxu0 %v3650
      %4004 = vmatpush1.bf16.msra.mxu0 %v3649
      %4005 = vmatprep.subr.bf16.mxu0 %v3652
      %4006 = vmatpush1.bf16.msra.mxu0 %v3651
      %4007 = vmatprep.mubr.bf16.mxu0 %v2880
      %4008 = vmatmul.mubr.bf16.gmra.mrb[0].mxu0 %v2879
      %v4009 = vpop.f32.mrb[0].mxu0
      %v4010 = vadd.f32 %v3961, %v4009
      %v4011 = vpop.f32.mrb[0].mxu0
      %v4012 = vadd.f32 %v3963, %v4011
      %v4013 = vpop.f32.mrb[0].mxu0
      %v4014 = vadd.f32 %v3965, %v4013
      %v4015 = vpop.f32.mrb[0].mxu0
      %v4016 = vadd.f32 %v3967, %v4015
      %4017 = vmatprep.mubr.bf16.mxu0 %v2882
      %4018 = vmatmul.mubr.bf16.gmra.mrb[0].mxu0 %v2881
      %v4019 = vpop.f32.mrb[0].mxu0
      %v4020 = vpop.f32.mrb[0].mxu0
      %v4021 = vpop.f32.mrb[0].mxu0
      %v4022 = vpop.f32.mrb[0].mxu0
      %4023 = vdwg.mxu0
      %4024 = vmatprep.subr.bf16.mxu0 %v3654
      %4025 = vmatpush1.bf16.msra.mxu0 %v3653
      %4026 = vmatprep.subr.bf16.mxu0 %v3656
      %4027 = vmatpush1.bf16.msra.mxu0 %v3655
      %4028 = vmatprep.subr.bf16.mxu0 %v3658
      %4029 = vmatpush1.bf16.msra.mxu0 %v3657
      %4030 = vmatprep.subr.bf16.mxu0 %v3660
      %4031 = vmatpush1.bf16.msra.mxu0 %v3659
      %4032 = vmatprep.subr.bf16.mxu0 %v3662
      %4033 = vmatpush1.bf16.msra.mxu0 %v3661
      %4034 = vmatprep.subr.bf16.mxu0 %v3664
      %4035 = vmatpush1.bf16.msra.mxu0 %v3663
      %4036 = vmatprep.subr.bf16.mxu0 %v3666
      %4037 = vmatpush1.bf16.msra.mxu0 %v3665
      %4038 = vmatprep.subr.bf16.mxu0 %v3668
      %4039 = vmatpush1.bf16.msra.mxu0 %v3667
      %4040 = vmatprep.subr.bf16.mxu0 %v3670
      %4041 = vmatpush1.bf16.msra.mxu0 %v3669
      %4042 = vmatprep.subr.bf16.mxu0 %v3672
      %4043 = vmatpush1.bf16.msra.mxu0 %v3671
      %4044 = vmatprep.subr.bf16.mxu0 %v3674
      %4045 = vmatpush1.bf16.msra.mxu0 %v3673
      %4046 = vmatprep.subr.bf16.mxu0 %v3676
      %4047 = vmatpush1.bf16.msra.mxu0 %v3675
      %4048 = vmatprep.subr.bf16.mxu0 %v3678
      %4049 = vmatpush1.bf16.msra.mxu0 %v3677
      %4050 = vmatprep.subr.bf16.mxu0 %v3680
      %4051 = vmatpush1.bf16.msra.mxu0 %v3679
      %4052 = vmatprep.subr.bf16.mxu0 %v3682
      %4053 = vmatpush1.bf16.msra.mxu0 %v3681
      %4054 = vmatprep.subr.bf16.mxu0 %v3684
      %4055 = vmatpush1.bf16.msra.mxu0 %v3683
      %4056 = vmatprep.mubr.bf16.mxu0 %v2897
      %4057 = vmatmul.mubr.bf16.gmra.mrb[0].mxu0 %v2896
      %v4058 = vpop.f32.mrb[0].mxu0
      %v4059 = vadd.f32 %v4010, %v4058
      %v4060 = vpop.f32.mrb[0].mxu0
      %v4061 = vadd.f32 %v4012, %v4060
      %v4062 = vpop.f32.mrb[0].mxu0
      %v4063 = vadd.f32 %v4014, %v4062
      %v4064 = vpop.f32.mrb[0].mxu0
      %v4065 = vadd.f32 %v4016, %v4064
      %4066 = vmatprep.mubr.bf16.mxu0 %v2899
      %4067 = vmatmul.mubr.bf16.gmra.mrb[0].mxu0 %v2898
      %v4068 = vpop.f32.mrb[0].mxu0
      %v4069 = vpop.f32.mrb[0].mxu0
      %v4070 = vpop.f32.mrb[0].mxu0
      %v4071 = vpop.f32.mrb[0].mxu0
      %4072 = vdwg.mxu0
      %4073 = vmatprep.subr.bf16.mxu0 %v3686
      %4074 = vmatpush1.bf16.msra.mxu0 %v3685
      %4075 = vmatprep.subr.bf16.mxu0 %v3688
      %4076 = vmatpush1.bf16.msra.mxu0 %v3687
      %4077 = vmatprep.subr.bf16.mxu0 %v3690
      %4078 = vmatpush1.bf16.msra.mxu0 %v3689
      %4079 = vmatprep.subr.bf16.mxu0 %v3692
      %4080 = vmatpush1.bf16.msra.mxu0 %v3691
      %4081 = vmatprep.subr.bf16.mxu0 %v3694
      %4082 = vmatpush1.bf16.msra.mxu0 %v3693
      %4083 = vmatprep.subr.bf16.mxu0 %v3696
      %4084 = vmatpush1.bf16.msra.mxu0 %v3695
      %4085 = vmatprep.subr.bf16.mxu0 %v3698
      %4086 = vmatpush1.bf16.msra.mxu0 %v3697
      %4087 = vmatprep.subr.bf16.mxu0 %v3700
      %4088 = vmatpush1.bf16.msra.mxu0 %v3699
      %4089 = vmatprep.subr.bf16.mxu0 %v3702
      %4090 = vmatpush1.bf16.msra.mxu0 %v3701
      %4091 = vmatprep.subr.bf16.mxu0 %v3704
      %4092 = vmatpush1.bf16.msra.mxu0 %v3703
      %4093 = vmatprep.subr.bf16.mxu0 %v3706
      %4094 = vmatpush1.bf16.msra.mxu0 %v3705
      %4095 = vmatprep.subr.bf16.mxu0 %v3708
      %4096 = vmatpush1.bf16.msra.mxu0 %v3707
      %4097 = vmatprep.subr.bf16.mxu0 %v3710
      %4098 = vmatpush1.bf16.msra.mxu0 %v3709
      %4099 = vmatprep.subr.bf16.mxu0 %v3712
      %4100 = vmatpush1.bf16.msra.mxu0 %v3711
      %4101 = vmatprep.subr.bf16.mxu0 %v3714
      %4102 = vmatpush1.bf16.msra.mxu0 %v3713
      %4103 = vmatprep.subr.bf16.mxu0 %v3716
      %4104 = vmatpush1.bf16.msra.mxu0 %v3715
      %4105 = vmatprep.mubr.bf16.mxu0 %v2914
      %4106 = vmatmul.mubr.bf16.gmra.mrb[0].mxu0 %v2913
      %v4107 = vpop.f32.mrb[0].mxu0
      %v4108 = vadd.f32 %v4059, %v4107
      %v4109 = vpop.f32.mrb[0].mxu0
      %v4110 = vadd.f32 %v4061, %v4109
      %v4111 = vpop.f32.mrb[0].mxu0
      %v4112 = vadd.f32 %v4063, %v4111
      %v4113 = vpop.f32.mrb[0].mxu0
      %v4114 = vadd.f32 %v4065, %v4113
      %4115 = vmatprep.mubr.bf16.mxu0 %v2916
      %4116 = vmatmul.mubr.bf16.gmra.mrb[0].mxu0 %v2915
      %v4117 = vpop.f32.mrb[0].mxu0
      %v4118 = vpop.f32.mrb[0].mxu0
      %v4119 = vpop.f32.mrb[0].mxu0
      %v4120 = vpop.f32.mrb[0].mxu0
      %4121 = vdwg.mxu0
      %4122 = vst [vmem:[%s197] sm:$0xff] %v4108
      %4123 = vst [vmem:[%s197 + $0x8] sm:$0xff] %v4110
      %4124 = vst [vmem:[%s197 + $0x10] sm:$0xff] %v4112
      %4125 = vst [vmem:[%s197 + $0x18] sm:$0xff] %v4114
      %p4126 = scmp.lt.s32.totalorder %s15, 1
      %s4127 = scalar_select %p4126, %s15, 1
      %s4128 = smul.addr %s4127, 4
      %s4129 = smul.addr %s4128, 8
      %s4130 = scalar_lea.vmem %s4, %s4129
      // Predicated region
      $region37: #{forward.1} parent=35 // pred_check
        %p4131 = pneg %p122
      $region38: #{forward.1} parent=35 // pred_check_branch
        %4133 = sbr.rel (%p4131) target = $region40
      $region39: #{forward.1} parent=35 // pred_region
        _
      $region40: #{forward.1} parent=35 // pred_fallthru
        _
    $region36: #{forward.1} parent=5 // pred_fallthru
      _
    %p4134 = scmp.le.s32.totalorder 2, %s10
    // Predicated region
    $region41: #{forward.1} parent=5 // pred_check
      %p4135 = pneg %p4134
    $region42: #{forward.1} parent=5 // pred_check_branch
      %4137 = sbr.rel (%p4135) target = $region44
    $region43: #{forward.1} parent=5 // pred_region
      %s4138 = ssub.s32 %s10, 2
      // Predicated region
      $region45: #{forward.1} parent=43 // pred_check
        %p4139 = pneg %p128
      $region46: #{forward.1} parent=43 // pred_check_branch
        %4141 = sbr.rel (%p4139) target = $region48
      $region47: #{forward.1} parent=43 // pred_region
        %p4142 = scmp.lt.s32.totalorder %s16, 1
        %s4143 = scalar_select %p4142, %s16, 1
        %s4144 = smul.addr %s4143, 4
        %s4145 = smul.addr %s4144, 8
        %s4146 = scalar_lea.vmem %s4, %s4145
      $region48: #{forward.1} parent=43 // pred_fallthru
        _
    $region44: #{forward.1} parent=5 // pred_fallthru
      _
  $region6: #{forward.1} parent=0 // loop_footer
    %s14 = sadd.s32 1, %s10
  $region7: #{forward.1} parent=0 // loop_footer_branch
    %9 = sbr.rel target = $region3
  $region8: #{forward.1} parent=0 // loop_exit
    _

</llo_original>
